<compile_context>
chip_gen: v7x
topology: tpu7x:2x2x1
jax: 0.10.0
libtpu: 0.0.40
codegen_flags: <defaults>
</compile_context>

<pallas_src>
import math
from functools import partial

import jax
import jax.numpy as jnp
from jax.experimental import pallas as pl
from jax.experimental.pallas import tpu as pltpu

EPS = 1e-5


# ----------------------------------------------------------------------------
# In-kernel helpers
# ----------------------------------------------------------------------------
def _layer_norm(x, w, b):
    # Matches the custom PyTorch LayerNorm: unbiased std, divide by (std + eps).
    d = x.shape[-1]
    mean = jnp.mean(x, axis=-1, keepdims=True)
    var = jnp.sum((x - mean) ** 2, axis=-1, keepdims=True) / (d - 1)
    std = jnp.sqrt(var)
    return w * (x - mean) / (std + EPS) + b


# ----------------------------------------------------------------------------
# Fused whole-stack encoder kernel.
# grid = (batch_block, layer);  activation carried in VMEM scratch over layers.
# ----------------------------------------------------------------------------
def _encoder_stack_kernel(
        x_ref, bias_ref,
        ln1w_ref, ln1b_ref, wqkv_ref, bqkv_ref, wo_ref, bo_ref,
        ln2w_ref, ln2b_ref, w1_ref, b1_ref, w2_ref, b2_ref,
        flnw_ref, flnb_ref,
        out_ref, acc_ref, *, num_heads):
    l = pl.program_id(1)
    n_layers = pl.num_programs(1)

    # Load the input activation into the resident accumulator on the first layer.
    @pl.when(l == 0)
    def _():
        acc_ref[...] = x_ref[0].astype(jnp.float32)

    x = acc_ref[...]                                  # (S, D) f32 running activation
    S, D = x.shape
    H = num_heads
    hd = D // H
    scaling = hd ** (-0.5)

    # ---------------- self-attention sub-layer (pre-norm) --------------------
    nx = _layer_norm(x, ln1w_ref[0], ln1b_ref[0])                       # (S, D) f32

    # Fused QKV projection: one wide bf16 matmul, f32 accumulation.
    qkv = jnp.dot(nx.astype(jnp.bfloat16),
                  wqkv_ref[0].astype(jnp.bfloat16),
                  preferred_element_type=jnp.float32) + bqkv_ref[0]     # (S, 3D)
    q = qkv[:, :D]
    k = qkv[:, D:2 * D]
    v = qkv[:, 2 * D:]

    q3 = q.reshape(S, H, hd)
    k3 = k.reshape(S, H, hd)
    v3 = v.reshape(S, H, hd)

    # scores (H, S, S) in f32; mask add + softmax stay in f32.
    scores = jnp.einsum("qhd,khd->hqk",
                        q3.astype(jnp.bfloat16), k3.astype(jnp.bfloat16),
                        preferred_element_type=jnp.float32) * scaling
    scores = scores + bias_ref[0]                     # (1, S) key bias, bcast over h,q

    m = jnp.max(scores, axis=-1, keepdims=True)
    e = jnp.exp(scores - m)
    denom = jnp.sum(e, axis=-1, keepdims=True)
    attn = e * pl.reciprocal(denom, approx=True)      # divide on the EUP slot

    vals = jnp.einsum("hqk,khd->qhd",
                      attn.astype(jnp.bfloat16), v3.astype(jnp.bfloat16),
                      preferred_element_type=jnp.float32).reshape(S, D)
    attn_out = jnp.dot(vals.astype(jnp.bfloat16),
                       wo_ref[0].astype(jnp.bfloat16),
                       preferred_element_type=jnp.float32) + bo_ref[0]
    x = x + attn_out                                  # residual

    # ---------------- feed-forward sub-layer (pre-norm) ----------------------
    nx = _layer_norm(x, ln2w_ref[0], ln2b_ref[0])
    h = jnp.dot(nx.astype(jnp.bfloat16),
                w1_ref[0].astype(jnp.bfloat16),
                preferred_element_type=jnp.float32) + b1_ref[0]
    h = jnp.maximum(h, 0.0)
    ff = jnp.dot(h.astype(jnp.bfloat16),
                 w2_ref[0].astype(jnp.bfloat16),
                 preferred_element_type=jnp.float32) + b2_ref[0]
    x = x + ff                                        # residual

    acc_ref[...] = x                                  # carry to next layer

    # Final LayerNorm + single lane-dense store on the last layer only.
    @pl.when(l == n_layers - 1)
    def _():
        out_ref[0] = _layer_norm(x, flnw_ref[...], flnb_ref[...]).astype(out_ref.dtype)
    # TODO(synk): for long sequences, add flash-style online-softmax tiling over
    # the key axis instead of materializing (H, S, S) scores per batch block.


# ----------------------------------------------------------------------------
# Wrapper: builds the grid/BlockSpecs and calls the fused kernel once.
# ----------------------------------------------------------------------------
def encoder_forward(params, x, mask, *, num_heads):
    B, S, D = x.shape
    L = params["w_qkv"].shape[0]

    # masked_fill(mask == 0, -inf) as an additive (B, 1, Sk) key bias.
    if mask is None:
        key_bias = jnp.zeros((B, 1, S), jnp.float32)
    else:
        key_bias = jnp.where(mask == 0, jnp.float32(-jnp.inf), 0.0).astype(jnp.float32)

    kernel = partial(_encoder_stack_kernel, num_heads=num_heads)

    layer_w = lambda b, l: (l, 0, 0)       # per-layer stacked weights
    batch_a = lambda b, l: (b, 0, 0)       # per-batch activations / mask
    const_w = lambda b, l: (0, 0)          # final-norm params (layer-invariant)

    grid_spec = pltpu.PrefetchScalarGridSpec(
        num_scalar_prefetch=0,
        grid=(B, L),
        in_specs=[
            pl.BlockSpec((1, S, D), batch_a),              # x
            pl.BlockSpec((1, 1, S), batch_a),              # key bias
            pl.BlockSpec((1, 1, D), layer_w),              # ln1_w
            pl.BlockSpec((1, 1, D), layer_w),              # ln1_b
            pl.BlockSpec((1, D, 3 * D), layer_w),          # w_qkv (fused)
            pl.BlockSpec((1, 1, 3 * D), layer_w),          # b_qkv
            pl.BlockSpec((1, D, D), layer_w),              # w_o
            pl.BlockSpec((1, 1, D), layer_w),              # b_o
            pl.BlockSpec((1, 1, D), layer_w),              # ln2_w
            pl.BlockSpec((1, 1, D), layer_w),              # ln2_b
            pl.BlockSpec((1, D, 4 * D), layer_w),          # w1
            pl.BlockSpec((1, 1, 4 * D), layer_w),          # b1
            pl.BlockSpec((1, 4 * D, D), layer_w),          # w2
            pl.BlockSpec((1, 1, D), layer_w),              # b2
            pl.BlockSpec((1, D), const_w),                 # final norm w
            pl.BlockSpec((1, D), const_w),                 # final norm b
        ],
        out_specs=pl.BlockSpec((1, S, D), batch_a),
        scratch_shapes=[pltpu.VMEM((S, D), jnp.float32)],   # resident activation
    )

    return pl.pallas_call(
        kernel,
        out_shape=jax.ShapeDtypeStruct((B, S, D), jnp.float32),
        grid_spec=grid_spec,
        compiler_params=pltpu.CompilerParams(
            dimension_semantics=("parallel", "arbitrary"),
            vmem_limit_bytes=48 * 1024 * 1024,
        ),
    )(x, key_bias,
      params["ln1_w"], params["ln1_b"], params["w_qkv"], params["b_qkv"],
      params["w_o"], params["b_o"], params["ln2_w"], params["ln2_b"],
      params["w1"], params["b1"], params["w2"], params["b2"],
      params["norm_w"], params["norm_b"])


# ----------------------------------------------------------------------------
# Parameter init (synthetic, deterministic): weights stacked over layers.
# ----------------------------------------------------------------------------
def init_params(key, embed_dim, num_layers, scale=0.02):
    D = embed_dim
    L = num_layers
    keys = jax.random.split(key, 8 * L)

    def lin(k, din, dout):
        return scale * jax.random.normal(k, (din, dout), jnp.float32)

    def bias(k, dout):
        return scale * jax.random.normal(k, (1, dout), jnp.float32)

    w_qkv, b_qkv, w_o, b_o, w1, b1, w2, b2 = ([] for _ in range(8))
    for l in range(L):
        kq, kqb, ko, kob, k1, k1b, k2, k2b = keys[8 * l:8 * l + 8]
        w_qkv.append(lin(kq, D, 3 * D)); b_qkv.append(bias(kqb, 3 * D))
        w_o.append(lin(ko, D, D));       b_o.append(bias(kob, D))
        w1.append(lin(k1, D, 4 * D));    b1.append(bias(k1b, 4 * D))
        w2.append(lin(k2, 4 * D, D));    b2.append(bias(k2b, D))

    return dict(
        ln1_w=jnp.ones((L, 1, D), jnp.float32), ln1_b=jnp.zeros((L, 1, D), jnp.float32),
        w_qkv=jnp.stack(w_qkv), b_qkv=jnp.stack(b_qkv),
        w_o=jnp.stack(w_o), b_o=jnp.stack(b_o),
        ln2_w=jnp.ones((L, 1, D), jnp.float32), ln2_b=jnp.zeros((L, 1, D), jnp.float32),
        w1=jnp.stack(w1), b1=jnp.stack(b1),
        w2=jnp.stack(w2), b2=jnp.stack(b2),
        norm_w=jnp.ones((1, D), jnp.float32), norm_b=jnp.zeros((1, D), jnp.float32),
    )


# ----------------------------------------------------------------------------
# Pure-JAX reference (f32) mirroring the PyTorch Encoder, for a sanity check.
# ----------------------------------------------------------------------------
def encoder_reference(params, x, mask, *, num_heads):
    B, S, D = x.shape
    H = num_heads
    hd = D // H
    key_bias = jnp.where(mask == 0, jnp.float32(-jnp.inf), 0.0).astype(jnp.float32)

    def ln(v, w, b):
        mean = v.mean(-1, keepdims=True)
        var = jnp.sum((v - mean) ** 2, -1, keepdims=True) / (v.shape[-1] - 1)
        return w * (v - mean) / (jnp.sqrt(var) + EPS) + b

    L = params["w_qkv"].shape[0]
    for l in range(L):
        nx = ln(x, params["ln1_w"][l], params["ln1_b"][l])
        qkv = nx @ params["w_qkv"][l] + params["b_qkv"][l]
        q, k, v = jnp.split(qkv, 3, axis=-1)
        qh = q.reshape(B, S, H, hd).transpose(0, 2, 1, 3)
        kh = k.reshape(B, S, H, hd).transpose(0, 2, 1, 3)
        vh = v.reshape(B, S, H, hd).transpose(0, 2, 1, 3)
        s = (qh @ kh.transpose(0, 1, 3, 2)) * (hd ** -0.5) + key_bias[:, :, None, :]
        a = jax.nn.softmax(s, axis=-1)
        vals = (a @ vh).transpose(0, 2, 1, 3).reshape(B, S, D)
        x = x + vals @ params["w_o"][l] + params["b_o"][l]
        nx = ln(x, params["ln2_w"][l], params["ln2_b"][l])
        h = jax.nn.relu(nx @ params["w1"][l] + params["b1"][l])
        x = x + h @ params["w2"][l] + params["b2"][l]
    return ln(x, params["norm_w"], params["norm_b"])


# ----------------------------------------------------------------------------
if __name__ == "__main__":
    B, S, D, H, L = 2, 8, 32, 4, 2

    key = jax.random.PRNGKey(0)
    kp, kx = jax.random.split(key)
    params = init_params(kp, D, L)
    x = jax.random.normal(kx, (B, S, D), jnp.float32)
    mask = jnp.ones((B, 1, S), dtype=jnp.int32)        # all keys visible

    out = encoder_forward(params, x, mask, num_heads=H)
    out = jax.block_until_ready(out)

    assert out.shape == (B, S, D) and out.dtype == jnp.float32
    assert bool(jnp.all(jnp.isfinite(out)))

    ref = encoder_reference(params, x, mask, num_heads=H)
    max_err = float(jnp.max(jnp.abs(out - ref)))
    assert jnp.allclose(out, ref, atol=3e-2, rtol=3e-2), f"max |err| = {max_err}"

    print("KERNEL_OK")
</pallas_src>

<mosaic_0001>
module attributes {stable_mosaic.version = 11 : i64} {
  func.func @_encoder_stack_kernel(%arg0: i32, %arg1: i32, %arg2: memref<1x8x32xf32, #tpu.memory_space<vmem>>, %arg3: memref<1x1x8xf32, #tpu.memory_space<vmem>>, %arg4: memref<1x1x32xf32, #tpu.memory_space<vmem>>, %arg5: memref<1x1x32xf32, #tpu.memory_space<vmem>>, %arg6: memref<1x32x96xf32, #tpu.memory_space<vmem>>, %arg7: memref<1x1x96xf32, #tpu.memory_space<vmem>>, %arg8: memref<1x32x32xf32, #tpu.memory_space<vmem>>, %arg9: memref<1x1x32xf32, #tpu.memory_space<vmem>>, %arg10: memref<1x1x32xf32, #tpu.memory_space<vmem>>, %arg11: memref<1x1x32xf32, #tpu.memory_space<vmem>>, %arg12: memref<1x32x128xf32, #tpu.memory_space<vmem>>, %arg13: memref<1x1x128xf32, #tpu.memory_space<vmem>>, %arg14: memref<1x128x32xf32, #tpu.memory_space<vmem>>, %arg15: memref<1x1x32xf32, #tpu.memory_space<vmem>>, %arg16: memref<1x32xf32, #tpu.memory_space<vmem>>, %arg17: memref<1x32xf32, #tpu.memory_space<vmem>>, %arg18: memref<1x8x32xf32, #tpu.memory_space<vmem>>, %arg19: memref<8x32xf32, #tpu.memory_space<vmem>>) attributes {dimension_semantics = [#tpu.dimension_semantics<parallel>, #tpu.dimension_semantics<arbitrary>], iteration_bounds = array<i64: 2, 2>, scalar_prefetch = 0 : i64, scratch_operands = 1 : i64, tpu.core_type = #tpu.core_type<tc>, window_params = [{transform_indices = @transform_0, window_bounds = array<i64: 1, 8, 32>}, {transform_indices = @transform_1, window_bounds = array<i64: 1, 1, 8>}, {transform_indices = @transform_2, window_bounds = array<i64: 1, 1, 32>}, {transform_indices = @transform_3, window_bounds = array<i64: 1, 1, 32>}, {transform_indices = @transform_4, window_bounds = array<i64: 1, 32, 96>}, {transform_indices = @transform_5, window_bounds = array<i64: 1, 1, 96>}, {transform_indices = @transform_6, window_bounds = array<i64: 1, 32, 32>}, {transform_indices = @transform_7, window_bounds = array<i64: 1, 1, 32>}, {transform_indices = @transform_8, window_bounds = array<i64: 1, 1, 32>}, {transform_indices = @transform_9, window_bounds = array<i64: 1, 1, 32>}, {transform_indices = @transform_10, window_bounds = array<i64: 1, 32, 128>}, {transform_indices = @transform_11, window_bounds = array<i64: 1, 1, 128>}, {transform_indices = @transform_12, window_bounds = array<i64: 1, 128, 32>}, {transform_indices = @transform_13, window_bounds = array<i64: 1, 1, 32>}, {pipeline_mode = #tpu.pipeline_mode<synchronous>, transform_indices = @transform_14, window_bounds = array<i64: 1, 32>}, {pipeline_mode = #tpu.pipeline_mode<synchronous>, transform_indices = @transform_15, window_bounds = array<i64: 1, 32>}, {transform_indices = @transform_16, window_bounds = array<i64: 1, 8, 32>}]} {
    %c0_i32 = arith.constant 0 : i32
    %0 = arith.cmpi eq, %arg1, %c0_i32 : i32
    %1 = arith.extui %0 : i1 to i32
    %c0_i32_0 = arith.constant 0 : i32
    %2 = arith.cmpi ne, %1, %c0_i32_0 : i32
    scf.if %2 {
      %c0_63 = arith.constant 0 : index
      %c0_64 = arith.constant 0 : index
      %c0_65 = arith.constant 0 : index
      %131 = vector.load %arg2[%c0_63, %c0_64, %c0_65] : memref<1x8x32xf32, #tpu.memory_space<vmem>>, vector<1x8x32xf32>
      %132 = vector.shape_cast %131 : vector<1x8x32xf32> to vector<8x32xf32>
      %c0_66 = arith.constant 0 : index
      %c0_67 = arith.constant 0 : index
      %133 = vector.load %arg19[%c0_66, %c0_67] : memref<8x32xf32, #tpu.memory_space<vmem>>, vector<8x32xf32>
      tpu.vector_store %arg19[%c0_66, %c0_67], %132 {strides = array<i32>} : memref<8x32xf32, #tpu.memory_space<vmem>>, vector<8x32xf32>,
    } else {
    }
    %c0 = arith.constant 0 : index
    %c0_1 = arith.constant 0 : index
    %3 = vector.load %arg19[%c0, %c0_1] : memref<8x32xf32, #tpu.memory_space<vmem>>, vector<8x32xf32>
    %c0_2 = arith.constant 0 : index
    %c0_3 = arith.constant 0 : index
    %c0_4 = arith.constant 0 : index
    %4 = vector.load %arg4[%c0_2, %c0_3, %c0_4] : memref<1x1x32xf32, #tpu.memory_space<vmem>>, vector<1x1x32xf32>
    %5 = vector.shape_cast %4 : vector<1x1x32xf32> to vector<1x32xf32>
    %c0_5 = arith.constant 0 : index
    %c0_6 = arith.constant 0 : index
    %c0_7 = arith.constant 0 : index
    %6 = vector.load %arg5[%c0_5, %c0_6, %c0_7] : memref<1x1x32xf32, #tpu.memory_space<vmem>>, vector<1x1x32xf32>
    %7 = vector.shape_cast %6 : vector<1x1x32xf32> to vector<1x32xf32>
    %cst = arith.constant dense<0.000000e+00> : vector<8xf32>
    %8 = vector.multi_reduction <add>, %3, %cst [1] : vector<8x32xf32> to vector<8xf32>
    %9 = vector.shape_cast %8 : vector<8xf32> to vector<8x1xf32>
    %cst_8 = arith.constant 3.200000e+01 : f32
    %10 = vector.broadcast %cst_8 : f32 to vector<8x1xf32>
    %11 = arith.divf %9, %10 : vector<8x1xf32>
    %12 = vector.broadcast %11 : vector<8x1xf32> to vector<8x32xf32>
    %13 = arith.subf %3, %12 : vector<8x32xf32>
    %14 = arith.mulf %13, %13 : vector<8x32xf32>
    %cst_9 = arith.constant dense<0.000000e+00> : vector<8xf32>
    %15 = vector.multi_reduction <add>, %14, %cst_9 [1] : vector<8x32xf32> to vector<8xf32>
    %16 = vector.shape_cast %15 : vector<8xf32> to vector<8x1xf32>
    %cst_10 = arith.constant 3.100000e+01 : f32
    %17 = vector.broadcast %cst_10 : f32 to vector<8x1xf32>
    %18 = arith.divf %16, %17 : vector<8x1xf32>
    %19 = math.sqrt %18 : vector<8x1xf32>
    %20 = vector.broadcast %11 : vector<8x1xf32> to vector<8x32xf32>
    %21 = arith.subf %3, %20 : vector<8x32xf32>
    %22 = vector.broadcast %5 : vector<1x32xf32> to vector<8x32xf32>
    %23 = arith.mulf %22, %21 : vector<8x32xf32>
    %cst_11 = arith.constant 9.99999974E-6 : f32
    %24 = vector.broadcast %cst_11 : f32 to vector<8x1xf32>
    %25 = arith.addf %19, %24 : vector<8x1xf32>
    %26 = vector.broadcast %25 : vector<8x1xf32> to vector<8x32xf32>
    %27 = arith.divf %23, %26 : vector<8x32xf32>
    %28 = vector.broadcast %7 : vector<1x32xf32> to vector<8x32xf32>
    %29 = arith.addf %27, %28 : vector<8x32xf32>
    %30 = arith.truncf %29 : vector<8x32xf32> to vector<8x32xbf16>
    %c0_12 = arith.constant 0 : index
    %c0_13 = arith.constant 0 : index
    %c0_14 = arith.constant 0 : index
    %31 = vector.load %arg6[%c0_12, %c0_13, %c0_14] : memref<1x32x96xf32, #tpu.memory_space<vmem>>, vector<1x32x96xf32>
    %32 = vector.shape_cast %31 : vector<1x32x96xf32> to vector<32x96xf32>
    %33 = arith.truncf %32 : vector<32x96xf32> to vector<32x96xbf16>
    %cst_15 = arith.constant dense<0.000000e+00> : vector<8x96xf32>
    %34 = tpu.matmul %30, %33, %cst_15 {dimension_numbers = #tpu.dot_dimension_numbers<[1], [0], [0], [1], [0, 0, 1, 1], [], []>} : vector<8x32xbf16>, vector<32x96xbf16>, vector<8x96xf32> -> vector<8x96xf32>
    %c0_16 = arith.constant 0 : index
    %c0_17 = arith.constant 0 : index
    %c0_18 = arith.constant 0 : index
    %35 = vector.load %arg7[%c0_16, %c0_17, %c0_18] : memref<1x1x96xf32, #tpu.memory_space<vmem>>, vector<1x1x96xf32>
    %36 = vector.shape_cast %35 : vector<1x1x96xf32> to vector<1x96xf32>
    %37 = vector.broadcast %36 : vector<1x96xf32> to vector<8x96xf32>
    %38 = arith.addf %34, %37 : vector<8x96xf32>
    %39 = vector.extract_strided_slice %38 {offsets = [0, 0], sizes = [8, 32], strides = [1, 1]} : vector<8x96xf32> to vector<8x32xf32>
    %40 = vector.extract_strided_slice %38 {offsets = [0, 32], sizes = [8, 32], strides = [1, 1]} : vector<8x96xf32> to vector<8x32xf32>
    %41 = vector.extract_strided_slice %38 {offsets = [0, 64], sizes = [8, 32], strides = [1, 1]} : vector<8x96xf32> to vector<8x32xf32>
    %42 = vector.shape_cast %39 : vector<8x32xf32> to vector<8x4x8xf32>
    %43 = vector.shape_cast %40 : vector<8x32xf32> to vector<8x4x8xf32>
    %44 = vector.shape_cast %41 : vector<8x32xf32> to vector<8x4x8xf32>
    %45 = arith.truncf %42 : vector<8x4x8xf32> to vector<8x4x8xbf16>
    %46 = arith.truncf %43 : vector<8x4x8xf32> to vector<8x4x8xbf16>
    "tpu.trace_start"() <{level = 10 : i32, message = "qhd,khd->hqk"}> : () -> ()
    %cst_19 = arith.constant dense<0.000000e+00> : vector<4x8x8xf32>
    %47 = tpu.matmul %45, %46, %cst_19 {dimension_numbers = #tpu.dot_dimension_numbers<[2], [2], [0], [0], [0, 1, 0, 0, 1, 0], [1], [1]>} : vector<8x4x8xbf16>, vector<8x4x8xbf16>, vector<4x8x8xf32> -> vector<4x8x8xf32>
    "tpu.trace_stop"() : () -> ()
    %cst_20 = arith.constant 0.353553385 : f32
    %48 = vector.broadcast %cst_20 : f32 to vector<4x8x8xf32>
    %49 = arith.mulf %47, %48 : vector<4x8x8xf32>
    %c0_21 = arith.constant 0 : index
    %c0_22 = arith.constant 0 : index
    %c0_23 = arith.constant 0 : index
    %50 = vector.load %arg3[%c0_21, %c0_22, %c0_23] : memref<1x1x8xf32, #tpu.memory_space<vmem>>, vector<1x1x8xf32>
    %51 = vector.shape_cast %50 : vector<1x1x8xf32> to vector<1x8xf32>
    %52 = vector.shape_cast %51 : vector<1x8xf32> to vector<1x1x8xf32>
    %53 = vector.broadcast %52 : vector<1x1x8xf32> to vector<4x8x8xf32>
    %54 = arith.addf %49, %53 : vector<4x8x8xf32>
    %cst_24 = arith.constant dense<0xFF800000> : vector<4x8xf32>
    %55 = vector.multi_reduction <maximumf>, %54, %cst_24 [2] : vector<4x8x8xf32> to vector<4x8xf32>
    %56 = vector.shape_cast %55 : vector<4x8xf32> to vector<4x8x1xf32>
    %57 = vector.broadcast %56 : vector<4x8x1xf32> to vector<4x8x8xf32>
    %58 = arith.subf %54, %57 : vector<4x8x8xf32>
    %59 = math.exp %58 : vector<4x8x8xf32>
    %cst_25 = arith.constant dense<0.000000e+00> : vector<4x8xf32>
    %60 = vector.multi_reduction <add>, %59, %cst_25 [2] : vector<4x8x8xf32> to vector<4x8xf32>
    %61 = vector.shape_cast %60 : vector<4x8xf32> to vector<4x8x1xf32>
    %62 = tpu.reciprocal %61 {approx = true} : vector<4x8x1xf32> -> vector<4x8x1xf32>
    %63 = vector.broadcast %62 : vector<4x8x1xf32> to vector<4x8x8xf32>
    %64 = arith.mulf %59, %63 : vector<4x8x8xf32>
    %65 = arith.truncf %64 : vector<4x8x8xf32> to vector<4x8x8xbf16>
    %66 = arith.truncf %44 : vector<8x4x8xf32> to vector<8x4x8xbf16>
    "tpu.trace_start"() <{level = 10 : i32, message = "hqk,khd->qhd"}> : () -> ()
    %cst_26 = arith.constant dense<0.000000e+00> : vector<4x8x8xf32>
    %67 = tpu.matmul %66, %65, %cst_26 {dimension_numbers = #tpu.dot_dimension_numbers<[0], [2], [2], [1], [0, 1, 0, 2, 1, 1], [1], [0]>} : vector<8x4x8xbf16>, vector<4x8x8xbf16>, vector<4x8x8xf32> -> vector<4x8x8xf32>
    %68 = tpu.transpose %67, [2, 0, 1] : vector<4x8x8xf32> -> vector<8x4x8xf32>
    "tpu.trace_stop"() : () -> ()
    %69 = vector.shape_cast %68 : vector<8x4x8xf32> to vector<8x32xf32>
    %70 = arith.truncf %69 : vector<8x32xf32> to vector<8x32xbf16>
    %c0_27 = arith.constant 0 : index
    %c0_28 = arith.constant 0 : index
    %c0_29 = arith.constant 0 : index
    %71 = vector.load %arg8[%c0_27, %c0_28, %c0_29] : memref<1x32x32xf32, #tpu.memory_space<vmem>>, vector<1x32x32xf32>
    %72 = vector.shape_cast %71 : vector<1x32x32xf32> to vector<32x32xf32>
    %73 = arith.truncf %72 : vector<32x32xf32> to vector<32x32xbf16>
    %cst_30 = arith.constant dense<0.000000e+00> : vector<8x32xf32>
    %74 = tpu.matmul %70, %73, %cst_30 {dimension_numbers = #tpu.dot_dimension_numbers<[1], [0], [0], [1], [0, 0, 1, 1], [], []>} : vector<8x32xbf16>, vector<32x32xbf16>, vector<8x32xf32> -> vector<8x32xf32>
    %c0_31 = arith.constant 0 : index
    %c0_32 = arith.constant 0 : index
    %c0_33 = arith.constant 0 : index
    %75 = vector.load %arg9[%c0_31, %c0_32, %c0_33] : memref<1x1x32xf32, #tpu.memory_space<vmem>>, vector<1x1x32xf32>
    %76 = vector.shape_cast %75 : vector<1x1x32xf32> to vector<1x32xf32>
    %77 = vector.broadcast %76 : vector<1x32xf32> to vector<8x32xf32>
    %78 = arith.addf %74, %77 : vector<8x32xf32>
    %79 = arith.addf %3, %78 : vector<8x32xf32>
    %c0_34 = arith.constant 0 : index
    %c0_35 = arith.constant 0 : index
    %c0_36 = arith.constant 0 : index
    %80 = vector.load %arg10[%c0_34, %c0_35, %c0_36] : memref<1x1x32xf32, #tpu.memory_space<vmem>>, vector<1x1x32xf32>
    %81 = vector.shape_cast %80 : vector<1x1x32xf32> to vector<1x32xf32>
    %c0_37 = arith.constant 0 : index
    %c0_38 = arith.constant 0 : index
    %c0_39 = arith.constant 0 : index
    %82 = vector.load %arg11[%c0_37, %c0_38, %c0_39] : memref<1x1x32xf32, #tpu.memory_space<vmem>>, vector<1x1x32xf32>
    %83 = vector.shape_cast %82 : vector<1x1x32xf32> to vector<1x32xf32>
    %cst_40 = arith.constant dense<0.000000e+00> : vector<8xf32>
    %84 = vector.multi_reduction <add>, %79, %cst_40 [1] : vector<8x32xf32> to vector<8xf32>
    %85 = vector.shape_cast %84 : vector<8xf32> to vector<8x1xf32>
    %cst_41 = arith.constant 3.200000e+01 : f32
    %86 = vector.broadcast %cst_41 : f32 to vector<8x1xf32>
    %87 = arith.divf %85, %86 : vector<8x1xf32>
    %88 = vector.broadcast %87 : vector<8x1xf32> to vector<8x32xf32>
    %89 = arith.subf %79, %88 : vector<8x32xf32>
    %90 = arith.mulf %89, %89 : vector<8x32xf32>
    %cst_42 = arith.constant dense<0.000000e+00> : vector<8xf32>
    %91 = vector.multi_reduction <add>, %90, %cst_42 [1] : vector<8x32xf32> to vector<8xf32>
    %92 = vector.shape_cast %91 : vector<8xf32> to vector<8x1xf32>
    %cst_43 = arith.constant 3.100000e+01 : f32
    %93 = vector.broadcast %cst_43 : f32 to vector<8x1xf32>
    %94 = arith.divf %92, %93 : vector<8x1xf32>
    %95 = math.sqrt %94 : vector<8x1xf32>
    %96 = vector.broadcast %87 : vector<8x1xf32> to vector<8x32xf32>
    %97 = arith.subf %79, %96 : vector<8x32xf32>
    %98 = vector.broadcast %81 : vector<1x32xf32> to vector<8x32xf32>
    %99 = arith.mulf %98, %97 : vector<8x32xf32>
    %cst_44 = arith.constant 9.99999974E-6 : f32
    %100 = vector.broadcast %cst_44 : f32 to vector<8x1xf32>
    %101 = arith.addf %95, %100 : vector<8x1xf32>
    %102 = vector.broadcast %101 : vector<8x1xf32> to vector<8x32xf32>
    %103 = arith.divf %99, %102 : vector<8x32xf32>
    %104 = vector.broadcast %83 : vector<1x32xf32> to vector<8x32xf32>
    %105 = arith.addf %103, %104 : vector<8x32xf32>
    %106 = arith.truncf %105 : vector<8x32xf32> to vector<8x32xbf16>
    %c0_45 = arith.constant 0 : index
    %c0_46 = arith.constant 0 : index
    %c0_47 = arith.constant 0 : index
    %107 = vector.load %arg12[%c0_45, %c0_46, %c0_47] : memref<1x32x128xf32, #tpu.memory_space<vmem>>, vector<1x32x128xf32>
    %108 = vector.shape_cast %107 : vector<1x32x128xf32> to vector<32x128xf32>
    %109 = arith.truncf %108 : vector<32x128xf32> to vector<32x128xbf16>
    %cst_48 = arith.constant dense<0.000000e+00> : vector<8x128xf32>
    %110 = tpu.matmul %106, %109, %cst_48 {dimension_numbers = #tpu.dot_dimension_numbers<[1], [0], [0], [1], [0, 0, 1, 1], [], []>} : vector<8x32xbf16>, vector<32x128xbf16>, vector<8x128xf32> -> vector<8x128xf32>
    %c0_49 = arith.constant 0 : index
    %c0_50 = arith.constant 0 : index
    %c0_51 = arith.constant 0 : index
    %111 = vector.load %arg13[%c0_49, %c0_50, %c0_51] : memref<1x1x128xf32, #tpu.memory_space<vmem>>, vector<1x1x128xf32>
    %112 = vector.shape_cast %111 : vector<1x1x128xf32> to vector<1x128xf32>
    %113 = vector.broadcast %112 : vector<1x128xf32> to vector<8x128xf32>
    %114 = arith.addf %110, %113 : vector<8x128xf32>
    %cst_52 = arith.constant 0.000000e+00 : f32
    %115 = vector.broadcast %cst_52 : f32 to vector<8x128xf32>
    %116 = arith.maximumf %114, %115 : vector<8x128xf32>
    %117 = arith.truncf %116 : vector<8x128xf32> to vector<8x128xbf16>
    %c0_53 = arith.constant 0 : index
    %c0_54 = arith.constant 0 : index
    %c0_55 = arith.constant 0 : index
    %118 = vector.load %arg14[%c0_53, %c0_54, %c0_55] : memref<1x128x32xf32, #tpu.memory_space<vmem>>, vector<1x128x32xf32>
    %119 = vector.shape_cast %118 : vector<1x128x32xf32> to vector<128x32xf32>
    %120 = arith.truncf %119 : vector<128x32xf32> to vector<128x32xbf16>
    %cst_56 = arith.constant dense<0.000000e+00> : vector<8x32xf32>
    %121 = tpu.matmul %117, %120, %cst_56 {dimension_numbers = #tpu.dot_dimension_numbers<[1], [0], [0], [1], [0, 0, 1, 1], [], []>} : vector<8x128xbf16>, vector<128x32xbf16>, vector<8x32xf32> -> vector<8x32xf32>
    %c0_57 = arith.constant 0 : index
    %c0_58 = arith.constant 0 : index
    %c0_59 = arith.constant 0 : index
    %122 = vector.load %arg15[%c0_57, %c0_58, %c0_59] : memref<1x1x32xf32, #tpu.memory_space<vmem>>, vector<1x1x32xf32>
    %123 = vector.shape_cast %122 : vector<1x1x32xf32> to vector<1x32xf32>
    %124 = vector.broadcast %123 : vector<1x32xf32> to vector<8x32xf32>
    %125 = arith.addf %121, %124 : vector<8x32xf32>
    %126 = arith.addf %79, %125 : vector<8x32xf32>
    %c0_60 = arith.constant 0 : index
    %c0_61 = arith.constant 0 : index
    %127 = vector.load %arg19[%c0_60, %c0_61] : memref<8x32xf32, #tpu.memory_space<vmem>>, vector<8x32xf32>
    tpu.vector_store %arg19[%c0_60, %c0_61], %126 {strides = array<i32>} : memref<8x32xf32, #tpu.memory_space<vmem>>, vector<8x32xf32>,
    %c1_i32 = arith.constant 1 : i32
    %128 = arith.cmpi eq, %arg1, %c1_i32 : i32
    %129 = arith.extui %128 : i1 to i32
    %c0_i32_62 = arith.constant 0 : i32
    %130 = arith.cmpi ne, %129, %c0_i32_62 : i32
    scf.if %130 {
      %c0_63 = arith.constant 0 : index
      %c0_64 = arith.constant 0 : index
      %131 = vector.load %arg16[%c0_63, %c0_64] : memref<1x32xf32, #tpu.memory_space<vmem>>, vector<1x32xf32>
      %c0_65 = arith.constant 0 : index
      %c0_66 = arith.constant 0 : index
      %132 = vector.load %arg17[%c0_65, %c0_66] : memref<1x32xf32, #tpu.memory_space<vmem>>, vector<1x32xf32>
      %cst_67 = arith.constant dense<0.000000e+00> : vector<8xf32>
      %133 = vector.multi_reduction <add>, %126, %cst_67 [1] : vector<8x32xf32> to vector<8xf32>
      %134 = vector.shape_cast %133 : vector<8xf32> to vector<8x1xf32>
      %cst_68 = arith.constant 3.200000e+01 : f32
      %135 = vector.broadcast %cst_68 : f32 to vector<8x1xf32>
      %136 = arith.divf %134, %135 : vector<8x1xf32>
      %137 = vector.broadcast %136 : vector<8x1xf32> to vector<8x32xf32>
      %138 = arith.subf %126, %137 : vector<8x32xf32>
      %139 = arith.mulf %138, %138 : vector<8x32xf32>
      %cst_69 = arith.constant dense<0.000000e+00> : vector<8xf32>
      %140 = vector.multi_reduction <add>, %139, %cst_69 [1] : vector<8x32xf32> to vector<8xf32>
      %141 = vector.shape_cast %140 : vector<8xf32> to vector<8x1xf32>
      %cst_70 = arith.constant 3.100000e+01 : f32
      %142 = vector.broadcast %cst_70 : f32 to vector<8x1xf32>
      %143 = arith.divf %141, %142 : vector<8x1xf32>
      %144 = math.sqrt %143 : vector<8x1xf32>
      %145 = vector.broadcast %136 : vector<8x1xf32> to vector<8x32xf32>
      %146 = arith.subf %126, %145 : vector<8x32xf32>
      %147 = vector.broadcast %131 : vector<1x32xf32> to vector<8x32xf32>
      %148 = arith.mulf %147, %146 : vector<8x32xf32>
      %cst_71 = arith.constant 9.99999974E-6 : f32
      %149 = vector.broadcast %cst_71 : f32 to vector<8x1xf32>
      %150 = arith.addf %144, %149 : vector<8x1xf32>
      %151 = vector.broadcast %150 : vector<8x1xf32> to vector<8x32xf32>
      %152 = arith.divf %148, %151 : vector<8x32xf32>
      %153 = vector.broadcast %132 : vector<1x32xf32> to vector<8x32xf32>
      %154 = arith.addf %152, %153 : vector<8x32xf32>
      %c0_72 = arith.constant 0 : index
      %c0_73 = arith.constant 0 : index
      %c0_74 = arith.constant 0 : index
      %155 = vector.load %arg18[%c0_72, %c0_73, %c0_74] : memref<1x8x32xf32, #tpu.memory_space<vmem>>, vector<1x8x32xf32>
      %156 = vector.shape_cast %155 : vector<1x8x32xf32> to vector<8x32xf32>
      %157 = vector.shape_cast %154 : vector<8x32xf32> to vector<1x8x32xf32>
      tpu.vector_store %arg18[%c0_72, %c0_73, %c0_74], %157 {strides = array<i32>} : memref<1x8x32xf32, #tpu.memory_space<vmem>>, vector<1x8x32xf32>,
    } else {
    }
    return
  }
  func.func @transform_0(%arg0: i32, %arg1: i32) -> (i32, i32, i32) {
    %c0_i32 = arith.constant 0 : i32
    %c0_i32_0 = arith.constant 0 : i32
    %c0_i32_1 = arith.constant 0 : i32
    return %arg0, %c0_i32, %c0_i32_0 : i32, i32, i32
  }
  func.func @transform_1(%arg0: i32, %arg1: i32) -> (i32, i32, i32) {
    %c0_i32 = arith.constant 0 : i32
    %c0_i32_0 = arith.constant 0 : i32
    %c0_i32_1 = arith.constant 0 : i32
    return %arg0, %c0_i32, %c0_i32_0 : i32, i32, i32
  }
  func.func @transform_2(%arg0: i32, %arg1: i32) -> (i32, i32, i32) {
    %c0_i32 = arith.constant 0 : i32
    %c0_i32_0 = arith.constant 0 : i32
    %c0_i32_1 = arith.constant 0 : i32
    return %arg1, %c0_i32, %c0_i32_0 : i32, i32, i32
  }
  func.func @transform_3(%arg0: i32, %arg1: i32) -> (i32, i32, i32) {
    %c0_i32 = arith.constant 0 : i32
    %c0_i32_0 = arith.constant 0 : i32
    %c0_i32_1 = arith.constant 0 : i32
    return %arg1, %c0_i32, %c0_i32_0 : i32, i32, i32
  }
  func.func @transform_4(%arg0: i32, %arg1: i32) -> (i32, i32, i32) {
    %c0_i32 = arith.constant 0 : i32
    %c0_i32_0 = arith.constant 0 : i32
    %c0_i32_1 = arith.constant 0 : i32
    return %arg1, %c0_i32, %c0_i32_0 : i32, i32, i32
  }
  func.func @transform_5(%arg0: i32, %arg1: i32) -> (i32, i32, i32) {
    %c0_i32 = arith.constant 0 : i32
    %c0_i32_0 = arith.constant 0 : i32
    %c0_i32_1 = arith.constant 0 : i32
    return %arg1, %c0_i32, %c0_i32_0 : i32, i32, i32
  }
  func.func @transform_6(%arg0: i32, %arg1: i32) -> (i32, i32, i32) {
    %c0_i32 = arith.constant 0 : i32
    %c0_i32_0 = arith.constant 0 : i32
    %c0_i32_1 = arith.constant 0 : i32
    return %arg1, %c0_i32, %c0_i32_0 : i32, i32, i32
  }
  func.func @transform_7(%arg0: i32, %arg1: i32) -> (i32, i32, i32) {
    %c0_i32 = arith.constant 0 : i32
    %c0_i32_0 = arith.constant 0 : i32
    %c0_i32_1 = arith.constant 0 : i32
    return %arg1, %c0_i32, %c0_i32_0 : i32, i32, i32
  }
  func.func @transform_8(%arg0: i32, %arg1: i32) -> (i32, i32, i32) {
    %c0_i32 = arith.constant 0 : i32
    %c0_i32_0 = arith.constant 0 : i32
    %c0_i32_1 = arith.constant 0 : i32
    return %arg1, %c0_i32, %c0_i32_0 : i32, i32, i32
  }
  func.func @transform_9(%arg0: i32, %arg1: i32) -> (i32, i32, i32) {
    %c0_i32 = arith.constant 0 : i32
    %c0_i32_0 = arith.constant 0 : i32
    %c0_i32_1 = arith.constant 0 : i32
    return %arg1, %c0_i32, %c0_i32_0 : i32, i32, i32
  }
  func.func @transform_10(%arg0: i32, %arg1: i32) -> (i32, i32, i32) {
    %c0_i32 = arith.constant 0 : i32
    %c0_i32_0 = arith.constant 0 : i32
    %c0_i32_1 = arith.constant 0 : i32
    return %arg1, %c0_i32, %c0_i32_0 : i32, i32, i32
  }
  func.func @transform_11(%arg0: i32, %arg1: i32) -> (i32, i32, i32) {
    %c0_i32 = arith.constant 0 : i32
    %c0_i32_0 = arith.constant 0 : i32
    %c0_i32_1 = arith.constant 0 : i32
    return %arg1, %c0_i32, %c0_i32_0 : i32, i32, i32
  }
  func.func @transform_12(%arg0: i32, %arg1: i32) -> (i32, i32, i32) {
    %c0_i32 = arith.constant 0 : i32
    %c0_i32_0 = arith.constant 0 : i32
    %c0_i32_1 = arith.constant 0 : i32
    return %arg1, %c0_i32, %c0_i32_0 : i32, i32, i32
  }
  func.func @transform_13(%arg0: i32, %arg1: i32) -> (i32, i32, i32) {
    %c0_i32 = arith.constant 0 : i32
    %c0_i32_0 = arith.constant 0 : i32
    %c0_i32_1 = arith.constant 0 : i32
    return %arg1, %c0_i32, %c0_i32_0 : i32, i32, i32
  }
  func.func @transform_14(%arg0: i32, %arg1: i32) -> (i32, i32) {
    %c0_i32 = arith.constant 0 : i32
    %c0_i32_0 = arith.constant 0 : i32
    %c0_i32_1 = arith.constant 0 : i32
    return %c0_i32, %c0_i32_0 : i32, i32
  }
  func.func @transform_15(%arg0: i32, %arg1: i32) -> (i32, i32) {
    %c0_i32 = arith.constant 0 : i32
    %c0_i32_0 = arith.constant 0 : i32
    %c0_i32_1 = arith.constant 0 : i32
    return %c0_i32, %c0_i32_0 : i32, i32
  }
  func.func @transform_16(%arg0: i32, %arg1: i32) -> (i32, i32, i32) {
    %c0_i32 = arith.constant 0 : i32
    %c0_i32_0 = arith.constant 0 : i32
    %c0_i32_1 = arith.constant 0 : i32
    return %arg0, %c0_i32, %c0_i32_0 : i32, i32, i32
  }
}

</mosaic_0001>

<llo_original>
// kernel: tpu_custom_call.1
$region0: #{tpu_custom_call.1}
  #allocation0 [shape = 'u32[]', space=smem, size = 0x4, offset = 0x4, fixed_abs, tag = 'smem constant byte address 0x4 - core index']
  #allocation1 [shape = 'u32[144,128]{1,0:T(1,128)}', space=vmem, size = 0x12000, scoped, tag = 'internal scratch']
  #allocation2 [shape = 'f32[8,32]{1,0:T(8,128)}', space=vmem, size = 0x1000, scoped, tag = 'scratch operand']
  %s0 = inlined_call_operand.vmem [shape: f32[2,8,32], index: 0, kind: input, shape index: {}]
  %s1 = inlined_call_operand.vmem [shape: f32[2,1,8], index: 1, kind: input, shape index: {}]
  %s2 = inlined_call_operand.vmem [shape: f32[2,1,32], index: 2, kind: input, shape index: {}]
  %s3 = inlined_call_operand.vmem [shape: f32[2,1,32], index: 3, kind: input, shape index: {}]
  %s4 = inlined_call_operand.vmem [shape: f32[2,32,96], index: 4, kind: input, shape index: {}]
  %s5 = inlined_call_operand.vmem [shape: f32[2,1,96], index: 5, kind: input, shape index: {}]
  %s6 = inlined_call_operand.vmem [shape: f32[2,32,32], index: 6, kind: input, shape index: {}]
  %s7 = inlined_call_operand.vmem [shape: f32[2,1,32], index: 7, kind: input, shape index: {}]
  %s8 = inlined_call_operand.vmem [shape: f32[2,1,32], index: 8, kind: input, shape index: {}]
  %s9 = inlined_call_operand.vmem [shape: f32[2,1,32], index: 9, kind: input, shape index: {}]
  %s10 = inlined_call_operand.vmem [shape: f32[2,32,128], index: 10, kind: input, shape index: {}]
  %s11 = inlined_call_operand.vmem [shape: f32[2,1,128], index: 11, kind: input, shape index: {}]
  %s12 = inlined_call_operand.vmem [shape: f32[2,128,32], index: 12, kind: input, shape index: {}]
  %s13 = inlined_call_operand.vmem [shape: f32[2,1,32], index: 13, kind: input, shape index: {}]
  %s14 = inlined_call_operand.vmem [shape: f32[1,32], index: 14, kind: input, shape index: {}]
  %s15 = inlined_call_operand.vmem [shape: f32[1,32], index: 15, kind: input, shape index: {}]
  %s16 = inlined_call_operand.hbm [shape: f32[2,8,32], index: 16, kind: output, shape index: {}]
  %s17 = sld [smem:[#allocation0]]
  $region105: #{tpu_custom_call.1} parent=0
    _
  %s19 = ssub.s32 1, %s17
  %s20 = scalar_select 0, %s19, %s17
  $region1: #{tpu_custom_call.1} parent=0
    #allocation3 [shape = 'u8[8192]{0}', space=vmem, size = 0x2000, scoped, tag = 'output window, operand 0']
    #allocation4 [shape = 's32[2]{0}', space=sflag, size = 0x8, scoped, tag = 'scoped memory for tpu_custom_call.1']
    %21 = vsyncpa [#allocation4], 0
    %s22 = scalar_lea.sflag [#allocation4], 1
    %23 = vsyncpa %s22, 0
    loop: start=0, step=1, limit=6
    $region2: #{tpu_custom_call.1} parent=1 // loop_pre_header
      _
    $region3: #{tpu_custom_call.1} parent=1 // loop_header
      %s25 = sphi 0, %s29
      %p26 = scmp.ge.s32.totalorder %s25, 6
      %s32 = sphi 0, %s44
      %s33 = sphi 0, %s40
      %s34 = sphi 0, %s32
      %s35 = sphi 0, %s33
      %s36 = sphi 0, %s34
      %s37 = sphi 0, %s35
      %s47 = sphi 0, %s49
      %s50 = sphi 0, %s47
      %s51 = sphi 0, %s50
      %s67 = sphi 0, %s51
      %s73 = sphi 0, %s75
      %s76 = sphi 0, %s73
      %s77 = sphi 0, %s76
      %s93 = sphi 0, %s77
      %s99 = sphi 0, %s101
      %s102 = sphi 0, %s99
      %s103 = sphi 0, %s102
      %s119 = sphi 0, %s103
      %s125 = sphi 0, %s127
      %s128 = sphi 0, %s125
      %s129 = sphi 0, %s128
      %s145 = sphi 0, %s129
      %s151 = sphi 0, %s153
      %s154 = sphi 0, %s151
      %s155 = sphi 0, %s154
      %s171 = sphi 0, %s155
      %s177 = sphi 0, %s179
      %s180 = sphi 0, %s177
      %s181 = sphi 0, %s180
      %s197 = sphi 0, %s181
      %s203 = sphi 0, %s205
      %s206 = sphi 0, %s203
      %s207 = sphi 0, %s206
      %s223 = sphi 0, %s207
      %s229 = sphi 0, %s231
      %s232 = sphi 0, %s229
      %s233 = sphi 0, %s232
      %s249 = sphi 0, %s233
      %s255 = sphi 0, %s257
      %s258 = sphi 0, %s255
      %s259 = sphi 0, %s258
      %s275 = sphi 0, %s259
      %s281 = sphi 0, %s283
      %s284 = sphi 0, %s281
      %s285 = sphi 0, %s284
      %s301 = sphi 0, %s285
      %s307 = sphi 0, %s309
      %s310 = sphi 0, %s307
      %s311 = sphi 0, %s310
      %s327 = sphi 0, %s311
      %s333 = sphi 0, %s335
      %s336 = sphi 0, %s333
      %s337 = sphi 0, %s336
      %s353 = sphi 0, %s337
      %s359 = sphi 0, %s361
      %s362 = sphi 0, %s359
      %s363 = sphi 0, %s362
      %s379 = sphi 0, %s363
      %s385 = sphi 0, %s387
      %s388 = sphi 0, %s385
      %s389 = sphi 0, %s388
      %s405 = sphi 0, %s389
      %s409 = sphi 0, %s409
      %s411 = sphi 0, %s409
      %s412 = sphi 0, %s411
      %s426 = sphi 0, %s412
      %s430 = sphi 0, %s430
      %s432 = sphi 0, %s430
      %s433 = sphi 0, %s432
      %s447 = sphi 0, %s433
      %s453 = sphi 0, %s455
      %s456 = sphi 0, %s453
      %s457 = sphi 0, %s456
      %s473 = sphi 0, %s457
    $region4: #{tpu_custom_call.1} parent=1 // loop_header_branch
      %28 = sbr.rel (%p26) target = $region8
    $region5: #{tpu_custom_call.1} parent=1 // loop_body
      %s30 = ssub.s32 %s25, 1
      %s31 = ssub.s32 %s25, 2
      %s38 = sadd.s32 1, %s33
      %p39 = scmp.ge.s32.totalorder %s38, 2
      %s40 = scalar_select %p39, 0, %s38
      %s41 = sadd.s32 1, %s32
      %s42 = scalar_select %p39, %s41, %s32
      %p43 = scmp.ge.s32.totalorder %s42, 2
      %s44 = scalar_select %p43, 0, %s42
      %s45 = ssub.s32 %s32, %s44
      %p46 = scmp.eq.s32.totalorder %s45, 0
      %s48 = sadd.s32 %s47, 1
      %s49 = scalar_select %p46, %s47, %s48
      %p52 = pneg %p46
      %p53 = scmp.eq.s32.totalorder %s25, 3
      %p54 = por %p52, %p53
      %p55 = scmp.ne.s32.totalorder %s47, %s50
      %p56 = scmp.eq.s32.totalorder %s25, 0
      %p57 = por %p55, %p56
      %p58 = scmp.ne.s32.totalorder %s47, %s50
      %p59 = scmp.eq.s32.totalorder %s30, 3
      %p60 = por %p58, %p59
      %p61 = scmp.ne.s32.totalorder %s50, %s51
      %p62 = scmp.eq.s32.totalorder %s30, 0
      %p63 = por %p61, %p62
      %p64 = scmp.ne.s32.totalorder %s50, %s51
      %p65 = scmp.eq.s32.totalorder %s31, 3
      %p66 = por %p64, %p65
      %p68 = scmp.ne.s32.totalorder %s51, %s67
      %p69 = scmp.eq.s32.totalorder %s31, 0
      %p70 = por %p68, %p69
      %s71 = ssub.s32 %s32, %s44
      %p72 = scmp.eq.s32.totalorder %s71, 0
      %s74 = sadd.s32 %s73, 1
      %s75 = scalar_select %p72, %s73, %s74
      %p78 = pneg %p72
      %p79 = scmp.eq.s32.totalorder %s25, 3
      %p80 = por %p78, %p79
      %p81 = scmp.ne.s32.totalorder %s73, %s76
      %p82 = scmp.eq.s32.totalorder %s25, 0
      %p83 = por %p81, %p82
      %p84 = scmp.ne.s32.totalorder %s73, %s76
      %p85 = scmp.eq.s32.totalorder %s30, 3
      %p86 = por %p84, %p85
      %p87 = scmp.ne.s32.totalorder %s76, %s77
      %p88 = scmp.eq.s32.totalorder %s30, 0
      %p89 = por %p87, %p88
      %p90 = scmp.ne.s32.totalorder %s76, %s77
      %p91 = scmp.eq.s32.totalorder %s31, 3
      %p92 = por %p90, %p91
      %p94 = scmp.ne.s32.totalorder %s77, %s93
      %p95 = scmp.eq.s32.totalorder %s31, 0
      %p96 = por %p94, %p95
      %s97 = ssub.s32 %s33, %s40
      %p98 = scmp.eq.s32.totalorder %s97, 0
      %s100 = sadd.s32 %s99, 1
      %s101 = scalar_select %p98, %s99, %s100
      %p104 = pneg %p98
      %p105 = scmp.eq.s32.totalorder %s25, 3
      %p106 = por %p104, %p105
      %p107 = scmp.ne.s32.totalorder %s99, %s102
      %p108 = scmp.eq.s32.totalorder %s25, 0
      %p109 = por %p107, %p108
      %p110 = scmp.ne.s32.totalorder %s99, %s102
      %p111 = scmp.eq.s32.totalorder %s30, 3
      %p112 = por %p110, %p111
      %p113 = scmp.ne.s32.totalorder %s102, %s103
      %p114 = scmp.eq.s32.totalorder %s30, 0
      %p115 = por %p113, %p114
      %p116 = scmp.ne.s32.totalorder %s102, %s103
      %p117 = scmp.eq.s32.totalorder %s31, 3
      %p118 = por %p116, %p117
      %p120 = scmp.ne.s32.totalorder %s103, %s119
      %p121 = scmp.eq.s32.totalorder %s31, 0
      %p122 = por %p120, %p121
      %s123 = ssub.s32 %s33, %s40
      %p124 = scmp.eq.s32.totalorder %s123, 0
      %s126 = sadd.s32 %s125, 1
      %s127 = scalar_select %p124, %s125, %s126
      %p130 = pneg %p124
      %p131 = scmp.eq.s32.totalorder %s25, 3
      %p132 = por %p130, %p131
      %p133 = scmp.ne.s32.totalorder %s125, %s128
      %p134 = scmp.eq.s32.totalorder %s25, 0
      %p135 = por %p133, %p134
      %p136 = scmp.ne.s32.totalorder %s125, %s128
      %p137 = scmp.eq.s32.totalorder %s30, 3
      %p138 = por %p136, %p137
      %p139 = scmp.ne.s32.totalorder %s128, %s129
      %p140 = scmp.eq.s32.totalorder %s30, 0
      %p141 = por %p139, %p140
      %p142 = scmp.ne.s32.totalorder %s128, %s129
      %p143 = scmp.eq.s32.totalorder %s31, 3
      %p144 = por %p142, %p143
      %p146 = scmp.ne.s32.totalorder %s129, %s145
      %p147 = scmp.eq.s32.totalorder %s31, 0
      %p148 = por %p146, %p147
      %s149 = ssub.s32 %s33, %s40
      %p150 = scmp.eq.s32.totalorder %s149, 0
      %s152 = sadd.s32 %s151, 1
      %s153 = scalar_select %p150, %s151, %s152
      %p156 = pneg %p150
      %p157 = scmp.eq.s32.totalorder %s25, 3
      %p158 = por %p156, %p157
      %p159 = scmp.ne.s32.totalorder %s151, %s154
      %p160 = scmp.eq.s32.totalorder %s25, 0
      %p161 = por %p159, %p160
      %p162 = scmp.ne.s32.totalorder %s151, %s154
      %p163 = scmp.eq.s32.totalorder %s30, 3
      %p164 = por %p162, %p163
      %p165 = scmp.ne.s32.totalorder %s154, %s155
      %p166 = scmp.eq.s32.totalorder %s30, 0
      %p167 = por %p165, %p166
      %p168 = scmp.ne.s32.totalorder %s154, %s155
      %p169 = scmp.eq.s32.totalorder %s31, 3
      %p170 = por %p168, %p169
      %p172 = scmp.ne.s32.totalorder %s155, %s171
      %p173 = scmp.eq.s32.totalorder %s31, 0
      %p174 = por %p172, %p173
      %s175 = ssub.s32 %s33, %s40
      %p176 = scmp.eq.s32.totalorder %s175, 0
      %s178 = sadd.s32 %s177, 1
      %s179 = scalar_select %p176, %s177, %s178
      %p182 = pneg %p176
      %p183 = scmp.eq.s32.totalorder %s25, 3
      %p184 = por %p182, %p183
      %p185 = scmp.ne.s32.totalorder %s177, %s180
      %p186 = scmp.eq.s32.totalorder %s25, 0
      %p187 = por %p185, %p186
      %p188 = scmp.ne.s32.totalorder %s177, %s180
      %p189 = scmp.eq.s32.totalorder %s30, 3
      %p190 = por %p188, %p189
      %p191 = scmp.ne.s32.totalorder %s180, %s181
      %p192 = scmp.eq.s32.totalorder %s30, 0
      %p193 = por %p191, %p192
      %p194 = scmp.ne.s32.totalorder %s180, %s181
      %p195 = scmp.eq.s32.totalorder %s31, 3
      %p196 = por %p194, %p195
      %p198 = scmp.ne.s32.totalorder %s181, %s197
      %p199 = scmp.eq.s32.totalorder %s31, 0
      %p200 = por %p198, %p199
      %s201 = ssub.s32 %s33, %s40
      %p202 = scmp.eq.s32.totalorder %s201, 0
      %s204 = sadd.s32 %s203, 1
      %s205 = scalar_select %p202, %s203, %s204
      %p208 = pneg %p202
      %p209 = scmp.eq.s32.totalorder %s25, 3
      %p210 = por %p208, %p209
      %p211 = scmp.ne.s32.totalorder %s203, %s206
      %p212 = scmp.eq.s32.totalorder %s25, 0
      %p213 = por %p211, %p212
      %p214 = scmp.ne.s32.totalorder %s203, %s206
      %p215 = scmp.eq.s32.totalorder %s30, 3
      %p216 = por %p214, %p215
      %p217 = scmp.ne.s32.totalorder %s206, %s207
      %p218 = scmp.eq.s32.totalorder %s30, 0
      %p219 = por %p217, %p218
      %p220 = scmp.ne.s32.totalorder %s206, %s207
      %p221 = scmp.eq.s32.totalorder %s31, 3
      %p222 = por %p220, %p221
      %p224 = scmp.ne.s32.totalorder %s207, %s223
      %p225 = scmp.eq.s32.totalorder %s31, 0
      %p226 = por %p224, %p225
      %s227 = ssub.s32 %s33, %s40
      %p228 = scmp.eq.s32.totalorder %s227, 0
      %s230 = sadd.s32 %s229, 1
      %s231 = scalar_select %p228, %s229, %s230
      %p234 = pneg %p228
      %p235 = scmp.eq.s32.totalorder %s25, 3
      %p236 = por %p234, %p235
      %p237 = scmp.ne.s32.totalorder %s229, %s232
      %p238 = scmp.eq.s32.totalorder %s25, 0
      %p239 = por %p237, %p238
      %p240 = scmp.ne.s32.totalorder %s229, %s232
      %p241 = scmp.eq.s32.totalorder %s30, 3
      %p242 = por %p240, %p241
      %p243 = scmp.ne.s32.totalorder %s232, %s233
      %p244 = scmp.eq.s32.totalorder %s30, 0
      %p245 = por %p243, %p244
      %p246 = scmp.ne.s32.totalorder %s232, %s233
      %p247 = scmp.eq.s32.totalorder %s31, 3
      %p248 = por %p246, %p247
      %p250 = scmp.ne.s32.totalorder %s233, %s249
      %p251 = scmp.eq.s32.totalorder %s31, 0
      %p252 = por %p250, %p251
      %s253 = ssub.s32 %s33, %s40
      %p254 = scmp.eq.s32.totalorder %s253, 0
      %s256 = sadd.s32 %s255, 1
      %s257 = scalar_select %p254, %s255, %s256
      %p260 = pneg %p254
      %p261 = scmp.eq.s32.totalorder %s25, 3
      %p262 = por %p260, %p261
      %p263 = scmp.ne.s32.totalorder %s255, %s258
      %p264 = scmp.eq.s32.totalorder %s25, 0
      %p265 = por %p263, %p264
      %p266 = scmp.ne.s32.totalorder %s255, %s258
      %p267 = scmp.eq.s32.totalorder %s30, 3
      %p268 = por %p266, %p267
      %p269 = scmp.ne.s32.totalorder %s258, %s259
      %p270 = scmp.eq.s32.totalorder %s30, 0
      %p271 = por %p269, %p270
      %p272 = scmp.ne.s32.totalorder %s258, %s259
      %p273 = scmp.eq.s32.totalorder %s31, 3
      %p274 = por %p272, %p273
      %p276 = scmp.ne.s32.totalorder %s259, %s275
      %p277 = scmp.eq.s32.totalorder %s31, 0
      %p278 = por %p276, %p277
      %s279 = ssub.s32 %s33, %s40
      %p280 = scmp.eq.s32.totalorder %s279, 0
      %s282 = sadd.s32 %s281, 1
      %s283 = scalar_select %p280, %s281, %s282
      %p286 = pneg %p280
      %p287 = scmp.eq.s32.totalorder %s25, 3
      %p288 = por %p286, %p287
      %p289 = scmp.ne.s32.totalorder %s281, %s284
      %p290 = scmp.eq.s32.totalorder %s25, 0
      %p291 = por %p289, %p290
      %p292 = scmp.ne.s32.totalorder %s281, %s284
      %p293 = scmp.eq.s32.totalorder %s30, 3
      %p294 = por %p292, %p293
      %p295 = scmp.ne.s32.totalorder %s284, %s285
      %p296 = scmp.eq.s32.totalorder %s30, 0
      %p297 = por %p295, %p296
      %p298 = scmp.ne.s32.totalorder %s284, %s285
      %p299 = scmp.eq.s32.totalorder %s31, 3
      %p300 = por %p298, %p299
      %p302 = scmp.ne.s32.totalorder %s285, %s301
      %p303 = scmp.eq.s32.totalorder %s31, 0
      %p304 = por %p302, %p303
      %s305 = ssub.s32 %s33, %s40
      %p306 = scmp.eq.s32.totalorder %s305, 0
      %s308 = sadd.s32 %s307, 1
      %s309 = scalar_select %p306, %s307, %s308
      %p312 = pneg %p306
      %p313 = scmp.eq.s32.totalorder %s25, 3
      %p314 = por %p312, %p313
      %p315 = scmp.ne.s32.totalorder %s307, %s310
      %p316 = scmp.eq.s32.totalorder %s25, 0
      %p317 = por %p315, %p316
      %p318 = scmp.ne.s32.totalorder %s307, %s310
      %p319 = scmp.eq.s32.totalorder %s30, 3
      %p320 = por %p318, %p319
      %p321 = scmp.ne.s32.totalorder %s310, %s311
      %p322 = scmp.eq.s32.totalorder %s30, 0
      %p323 = por %p321, %p322
      %p324 = scmp.ne.s32.totalorder %s310, %s311
      %p325 = scmp.eq.s32.totalorder %s31, 3
      %p326 = por %p324, %p325
      %p328 = scmp.ne.s32.totalorder %s311, %s327
      %p329 = scmp.eq.s32.totalorder %s31, 0
      %p330 = por %p328, %p329
      %s331 = ssub.s32 %s33, %s40
      %p332 = scmp.eq.s32.totalorder %s331, 0
      %s334 = sadd.s32 %s333, 1
      %s335 = scalar_select %p332, %s333, %s334
      %p338 = pneg %p332
      %p339 = scmp.eq.s32.totalorder %s25, 3
      %p340 = por %p338, %p339
      %p341 = scmp.ne.s32.totalorder %s333, %s336
      %p342 = scmp.eq.s32.totalorder %s25, 0
      %p343 = por %p341, %p342
      %p344 = scmp.ne.s32.totalorder %s333, %s336
      %p345 = scmp.eq.s32.totalorder %s30, 3
      %p346 = por %p344, %p345
      %p347 = scmp.ne.s32.totalorder %s336, %s337
      %p348 = scmp.eq.s32.totalorder %s30, 0
      %p349 = por %p347, %p348
      %p350 = scmp.ne.s32.totalorder %s336, %s337
      %p351 = scmp.eq.s32.totalorder %s31, 3
      %p352 = por %p350, %p351
      %p354 = scmp.ne.s32.totalorder %s337, %s353
      %p355 = scmp.eq.s32.totalorder %s31, 0
      %p356 = por %p354, %p355
      %s357 = ssub.s32 %s33, %s40
      %p358 = scmp.eq.s32.totalorder %s357, 0
      %s360 = sadd.s32 %s359, 1
      %s361 = scalar_select %p358, %s359, %s360
      %p364 = pneg %p358
      %p365 = scmp.eq.s32.totalorder %s25, 3
      %p366 = por %p364, %p365
      %p367 = scmp.ne.s32.totalorder %s359, %s362
      %p368 = scmp.eq.s32.totalorder %s25, 0
      %p369 = por %p367, %p368
      %p370 = scmp.ne.s32.totalorder %s359, %s362
      %p371 = scmp.eq.s32.totalorder %s30, 3
      %p372 = por %p370, %p371
      %p373 = scmp.ne.s32.totalorder %s362, %s363
      %p374 = scmp.eq.s32.totalorder %s30, 0
      %p375 = por %p373, %p374
      %p376 = scmp.ne.s32.totalorder %s362, %s363
      %p377 = scmp.eq.s32.totalorder %s31, 3
      %p378 = por %p376, %p377
      %p380 = scmp.ne.s32.totalorder %s363, %s379
      %p381 = scmp.eq.s32.totalorder %s31, 0
      %p382 = por %p380, %p381
      %s383 = ssub.s32 %s33, %s40
      %p384 = scmp.eq.s32.totalorder %s383, 0
      %s386 = sadd.s32 %s385, 1
      %s387 = scalar_select %p384, %s385, %s386
      %p390 = pneg %p384
      %p391 = scmp.eq.s32.totalorder %s25, 3
      %p392 = por %p390, %p391
      %p393 = scmp.ne.s32.totalorder %s385, %s388
      %p394 = scmp.eq.s32.totalorder %s25, 0
      %p395 = por %p393, %p394
      %p396 = scmp.ne.s32.totalorder %s385, %s388
      %p397 = scmp.eq.s32.totalorder %s30, 3
      %p398 = por %p396, %p397
      %p399 = scmp.ne.s32.totalorder %s388, %s389
      %p400 = scmp.eq.s32.totalorder %s30, 0
      %p401 = por %p399, %p400
      %p402 = scmp.ne.s32.totalorder %s388, %s389
      %p403 = scmp.eq.s32.totalorder %s31, 3
      %p404 = por %p402, %p403
      %p406 = scmp.ne.s32.totalorder %s389, %s405
      %p407 = scmp.eq.s32.totalorder %s31, 0
      %p408 = por %p406, %p407
      %s410 = sadd.s32 %s409, 1
      %p413 = scmp.eq.s32.totalorder %s25, 3
      %p414 = scmp.ne.s32.totalorder %s409, %s411
      %p415 = scmp.eq.s32.totalorder %s25, 0
      %p416 = por %p414, %p415
      %p417 = scmp.ne.s32.totalorder %s409, %s411
      %p418 = scmp.eq.s32.totalorder %s30, 3
      %p419 = por %p417, %p418
      %p420 = scmp.ne.s32.totalorder %s411, %s412
      %p421 = scmp.eq.s32.totalorder %s30, 0
      %p422 = por %p420, %p421
      %p423 = scmp.ne.s32.totalorder %s411, %s412
      %p424 = scmp.eq.s32.totalorder %s31, 3
      %p425 = por %p423, %p424
      %p427 = scmp.ne.s32.totalorder %s412, %s426
      %p428 = scmp.eq.s32.totalorder %s31, 0
      %p429 = por %p427, %p428
      %s431 = sadd.s32 %s430, 1
      %p434 = scmp.eq.s32.totalorder %s25, 3
      %p435 = scmp.ne.s32.totalorder %s430, %s432
      %p436 = scmp.eq.s32.totalorder %s25, 0
      %p437 = por %p435, %p436
      %p438 = scmp.ne.s32.totalorder %s430, %s432
      %p439 = scmp.eq.s32.totalorder %s30, 3
      %p440 = por %p438, %p439
      %p441 = scmp.ne.s32.totalorder %s432, %s433
      %p442 = scmp.eq.s32.totalorder %s30, 0
      %p443 = por %p441, %p442
      %p444 = scmp.ne.s32.totalorder %s432, %s433
      %p445 = scmp.eq.s32.totalorder %s31, 3
      %p446 = por %p444, %p445
      %p448 = scmp.ne.s32.totalorder %s433, %s447
      %p449 = scmp.eq.s32.totalorder %s31, 0
      %p450 = por %p448, %p449
      %s451 = ssub.s32 %s32, %s44
      %p452 = scmp.eq.s32.totalorder %s451, 0
      %s454 = sadd.s32 %s453, 1
      %s455 = scalar_select %p452, %s453, %s454
      %p458 = pneg %p452
      %p459 = scmp.eq.s32.totalorder %s25, 3
      %p460 = por %p458, %p459
      %p461 = scmp.ne.s32.totalorder %s453, %s456
      %p462 = scmp.eq.s32.totalorder %s25, 0
      %p463 = por %p461, %p462
      %p464 = scmp.ne.s32.totalorder %s453, %s456
      %p465 = scmp.eq.s32.totalorder %s30, 3
      %p466 = por %p464, %p465
      %p467 = scmp.ne.s32.totalorder %s456, %s457
      %p468 = scmp.eq.s32.totalorder %s30, 0
      %p469 = por %p467, %p468
      %p470 = scmp.ne.s32.totalorder %s456, %s457
      %p471 = scmp.eq.s32.totalorder %s31, 3
      %p472 = por %p470, %p471
      %p474 = scmp.ne.s32.totalorder %s457, %s473
      %p475 = scmp.eq.s32.totalorder %s31, 0
      %p476 = por %p474, %p475
      %p477 = scmp.le.s32.totalorder 1, %s25
      %p478 = scmp.lt.s32.totalorder %s25, 5
      %p479 = pnand %p477, %p478
      %p480 = pneg %p479
      // Predicated region
      $region9: #{tpu_custom_call.1} parent=5 // pred_check
        _
      $region10: #{tpu_custom_call.1} parent=5 // pred_check_branch
        %482 = sbr.rel (%p479) target = $region12
      $region11: #{tpu_custom_call.1} parent=5 // pred_region
        %s483 = ssub.s32 %s25, 1
        // Predicated region
        $region13: #{tpu_custom_call.1} parent=11 // pred_check
          %p484 = pneg %p422
        $region14: #{tpu_custom_call.1} parent=11 // pred_check_branch
          %486 = sbr.rel (%p484) target = $region16
        $region15: #{tpu_custom_call.1} parent=11 // pred_region
          _
        $region16: #{tpu_custom_call.1} parent=11 // pred_fallthru
          _
        // Predicated region
        $region17: #{tpu_custom_call.1} parent=11 // pred_check
          %p487 = pneg %p443
        $region18: #{tpu_custom_call.1} parent=11 // pred_check_branch
          %489 = sbr.rel (%p487) target = $region20
        $region19: #{tpu_custom_call.1} parent=11 // pred_region
          _
        $region20: #{tpu_custom_call.1} parent=11 // pred_fallthru
          _
      $region12: #{tpu_custom_call.1} parent=5 // pred_fallthru
        _
      %p490 = scmp.lt.s32.totalorder %s25, 4
      // Predicated region
      $region21: #{tpu_custom_call.1} parent=5 // pred_check
        %p491 = pneg %p490
      $region22: #{tpu_custom_call.1} parent=5 // pred_check_branch
        %493 = sbr.rel (%p491) target = $region24
      $region23: #{tpu_custom_call.1} parent=5 // pred_region
        // Predicated region
        $region25: #{tpu_custom_call.1} parent=23 // pred_check
          %p494 = pneg %p57
        $region26: #{tpu_custom_call.1} parent=23 // pred_check_branch
          %496 = sbr.rel (%p494) target = $region28
        $region27: #{tpu_custom_call.1} parent=23 // pred_region
          %p497 = scmp.lt.s32.totalorder %s32, 1
          %s498 = scalar_select %p497, %s32, 1
          %s499 = smul.addr %s498, 8
          %s500 = scalar_lea.vmem %s0, %s499
        $region28: #{tpu_custom_call.1} parent=23 // pred_fallthru
          _
        // Predicated region
        $region29: #{tpu_custom_call.1} parent=23 // pred_check
          %p501 = pneg %p83
        $region30: #{tpu_custom_call.1} parent=23 // pred_check_branch
          %503 = sbr.rel (%p501) target = $region32
        $region31: #{tpu_custom_call.1} parent=23 // pred_region
          %p504 = scmp.lt.s32.totalorder %s32, 1
          %s505 = scalar_select %p504, %s32, 1
          %s506 = scalar_lea.vmem %s1, %s505
        $region32: #{tpu_custom_call.1} parent=23 // pred_fallthru
          _
        // Predicated region
        $region33: #{tpu_custom_call.1} parent=23 // pred_check
          %p507 = pneg %p109
        $region34: #{tpu_custom_call.1} parent=23 // pred_check_branch
          %509 = sbr.rel (%p507) target = $region36
        $region35: #{tpu_custom_call.1} parent=23 // pred_region
          %p510 = scmp.lt.s32.totalorder %s33, 1
          %s511 = scalar_select %p510, %s33, 1
          %s512 = scalar_lea.vmem %s2, %s511
        $region36: #{tpu_custom_call.1} parent=23 // pred_fallthru
          _
        // Predicated region
        $region37: #{tpu_custom_call.1} parent=23 // pred_check
          %p513 = pneg %p135
        $region38: #{tpu_custom_call.1} parent=23 // pred_check_branch
          %515 = sbr.rel (%p513) target = $region40
        $region39: #{tpu_custom_call.1} parent=23 // pred_region
          %p516 = scmp.lt.s32.totalorder %s33, 1
          %s517 = scalar_select %p516, %s33, 1
          %s518 = scalar_lea.vmem %s3, %s517
        $region40: #{tpu_custom_call.1} parent=23 // pred_fallthru
          _
        // Predicated region
        $region41: #{tpu_custom_call.1} parent=23 // pred_check
          %p519 = pneg %p161
        $region42: #{tpu_custom_call.1} parent=23 // pred_check_branch
          %521 = sbr.rel (%p519) target = $region44
        $region43: #{tpu_custom_call.1} parent=23 // pred_region
          %p522 = scmp.lt.s32.totalorder %s33, 1
          %s523 = scalar_select %p522, %s33, 1
          %s524 = smul.addr %s523, 4
          %s525 = smul.addr %s524, 8
          %s526 = scalar_lea.vmem %s4, %s525
        $region44: #{tpu_custom_call.1} parent=23 // pred_fallthru
          _
        // Predicated region
        $region45: #{tpu_custom_call.1} parent=23 // pred_check
          %p527 = pneg %p187
        $region46: #{tpu_custom_call.1} parent=23 // pred_check_branch
          %529 = sbr.rel (%p527) target = $region48
        $region47: #{tpu_custom_call.1} parent=23 // pred_region
          %p530 = scmp.lt.s32.totalorder %s33, 1
          %s531 = scalar_select %p530, %s33, 1
          %s532 = scalar_lea.vmem %s5, %s531
        $region48: #{tpu_custom_call.1} parent=23 // pred_fallthru
          _
        // Predicated region
        $region49: #{tpu_custom_call.1} parent=23 // pred_check
          %p533 = pneg %p213
        $region50: #{tpu_custom_call.1} parent=23 // pred_check_branch
          %535 = sbr.rel (%p533) target = $region52
        $region51: #{tpu_custom_call.1} parent=23 // pred_region
          %p536 = scmp.lt.s32.totalorder %s33, 1
          %s537 = scalar_select %p536, %s33, 1
          %s538 = smul.addr %s537, 4
          %s539 = smul.addr %s538, 8
          %s540 = scalar_lea.vmem %s6, %s539
        $region52: #{tpu_custom_call.1} parent=23 // pred_fallthru
          _
        // Predicated region
        $region53: #{tpu_custom_call.1} parent=23 // pred_check
          %p541 = pneg %p239
        $region54: #{tpu_custom_call.1} parent=23 // pred_check_branch
          %543 = sbr.rel (%p541) target = $region56
        $region55: #{tpu_custom_call.1} parent=23 // pred_region
          %p544 = scmp.lt.s32.totalorder %s33, 1
          %s545 = scalar_select %p544, %s33, 1
          %s546 = scalar_lea.vmem %s7, %s545
        $region56: #{tpu_custom_call.1} parent=23 // pred_fallthru
          _
        // Predicated region
        $region57: #{tpu_custom_call.1} parent=23 // pred_check
          %p547 = pneg %p265
        $region58: #{tpu_custom_call.1} parent=23 // pred_check_branch
          %549 = sbr.rel (%p547) target = $region60
        $region59: #{tpu_custom_call.1} parent=23 // pred_region
          %p550 = scmp.lt.s32.totalorder %s33, 1
          %s551 = scalar_select %p550, %s33, 1
          %s552 = scalar_lea.vmem %s8, %s551
        $region60: #{tpu_custom_call.1} parent=23 // pred_fallthru
          _
        // Predicated region
        $region61: #{tpu_custom_call.1} parent=23 // pred_check
          %p553 = pneg %p291
        $region62: #{tpu_custom_call.1} parent=23 // pred_check_branch
          %555 = sbr.rel (%p553) target = $region64
        $region63: #{tpu_custom_call.1} parent=23 // pred_region
          %p556 = scmp.lt.s32.totalorder %s33, 1
          %s557 = scalar_select %p556, %s33, 1
          %s558 = scalar_lea.vmem %s9, %s557
        $region64: #{tpu_custom_call.1} parent=23 // pred_fallthru
          _
        // Predicated region
        $region65: #{tpu_custom_call.1} parent=23 // pred_check
          %p559 = pneg %p317
        $region66: #{tpu_custom_call.1} parent=23 // pred_check_branch
          %561 = sbr.rel (%p559) target = $region68
        $region67: #{tpu_custom_call.1} parent=23 // pred_region
          %p562 = scmp.lt.s32.totalorder %s33, 1
          %s563 = scalar_select %p562, %s33, 1
          %s564 = smul.addr %s563, 4
          %s565 = smul.addr %s564, 8
          %s566 = scalar_lea.vmem %s10, %s565
        $region68: #{tpu_custom_call.1} parent=23 // pred_fallthru
          _
        // Predicated region
        $region69: #{tpu_custom_call.1} parent=23 // pred_check
          %p567 = pneg %p343
        $region70: #{tpu_custom_call.1} parent=23 // pred_check_branch
          %569 = sbr.rel (%p567) target = $region72
        $region71: #{tpu_custom_call.1} parent=23 // pred_region
          %p570 = scmp.lt.s32.totalorder %s33, 1
          %s571 = scalar_select %p570, %s33, 1
          %s572 = scalar_lea.vmem %s11, %s571
        $region72: #{tpu_custom_call.1} parent=23 // pred_fallthru
          _
        // Predicated region
        $region73: #{tpu_custom_call.1} parent=23 // pred_check
          %p573 = pneg %p369
        $region74: #{tpu_custom_call.1} parent=23 // pred_check_branch
          %575 = sbr.rel (%p573) target = $region76
        $region75: #{tpu_custom_call.1} parent=23 // pred_region
          %p576 = scmp.lt.s32.totalorder %s33, 1
          %s577 = scalar_select %p576, %s33, 1
          %s578 = smul.addr %s577, 16
          %s579 = smul.addr %s578, 8
          %s580 = scalar_lea.vmem %s12, %s579
        $region76: #{tpu_custom_call.1} parent=23 // pred_fallthru
          _
        // Predicated region
        $region77: #{tpu_custom_call.1} parent=23 // pred_check
          %p581 = pneg %p395
        $region78: #{tpu_custom_call.1} parent=23 // pred_check_branch
          %583 = sbr.rel (%p581) target = $region80
        $region79: #{tpu_custom_call.1} parent=23 // pred_region
          %p584 = scmp.lt.s32.totalorder %s33, 1
          %s585 = scalar_select %p584, %s33, 1
          %s586 = scalar_lea.vmem %s13, %s585
        $region80: #{tpu_custom_call.1} parent=23 // pred_fallthru
          _
      $region24: #{tpu_custom_call.1} parent=5 // pred_fallthru
        _
      %p587 = scmp.le.s32.totalorder 1, %s25
      %p588 = scmp.lt.s32.totalorder %s25, 5
      %p589 = pnand %p587, %p588
      %p590 = pneg %p589
      // Predicated region
      $region81: #{tpu_custom_call.1} parent=5 // pred_check
        _
      $region82: #{tpu_custom_call.1} parent=5 // pred_check_branch
        %592 = sbr.rel (%p589) target = $region84
      $region83: #{tpu_custom_call.1} parent=5 // pred_region
        %s593 = ssub.s32 %s25, 1
        %p594 = scmp.lt.s32.totalorder %s34, 1
        %s595 = scalar_select %p594, %s34, 1
        %s596 = smul.addr %s595, 8
        %s597 = scalar_lea.vmem %s0, %s596
        %p598 = pneg %p63
        %p599 = pneg %p60
        %p600 = scmp.lt.s32.totalorder %s34, 1
        %s601 = scalar_select %p600, %s34, 1
        %s602 = scalar_lea.vmem %s1, %s601
        %p603 = pneg %p89
        %p604 = pneg %p86
        %p605 = scmp.lt.s32.totalorder %s35, 1
        %s606 = scalar_select %p605, %s35, 1
        %s607 = scalar_lea.vmem %s2, %s606
        %p608 = pneg %p115
        %p609 = pneg %p112
        %p610 = scmp.lt.s32.totalorder %s35, 1
        %s611 = scalar_select %p610, %s35, 1
        %s612 = scalar_lea.vmem %s3, %s611
        %p613 = pneg %p141
        %p614 = pneg %p138
        %p615 = scmp.lt.s32.totalorder %s35, 1
        %s616 = scalar_select %p615, %s35, 1
        %s617 = smul.addr %s616, 4
        %s618 = smul.addr %s617, 8
        %s619 = scalar_lea.vmem %s4, %s618
        %p620 = pneg %p167
        %p621 = pneg %p164
        %p622 = scmp.lt.s32.totalorder %s35, 1
        %s623 = scalar_select %p622, %s35, 1
        %s624 = scalar_lea.vmem %s5, %s623
        %p625 = pneg %p193
        %p626 = pneg %p190
        %p627 = scmp.lt.s32.totalorder %s35, 1
        %s628 = scalar_select %p627, %s35, 1
        %s629 = smul.addr %s628, 4
        %s630 = smul.addr %s629, 8
        %s631 = scalar_lea.vmem %s6, %s630
        %p632 = pneg %p219
        %p633 = pneg %p216
        %p634 = scmp.lt.s32.totalorder %s35, 1
        %s635 = scalar_select %p634, %s35, 1
        %s636 = scalar_lea.vmem %s7, %s635
        %p637 = pneg %p245
        %p638 = pneg %p242
        %p639 = scmp.lt.s32.totalorder %s35, 1
        %s640 = scalar_select %p639, %s35, 1
        %s641 = scalar_lea.vmem %s8, %s640
        %p642 = pneg %p271
        %p643 = pneg %p268
        %p644 = scmp.lt.s32.totalorder %s35, 1
        %s645 = scalar_select %p644, %s35, 1
        %s646 = scalar_lea.vmem %s9, %s645
        %p647 = pneg %p297
        %p648 = pneg %p294
        %p649 = scmp.lt.s32.totalorder %s35, 1
        %s650 = scalar_select %p649, %s35, 1
        %s651 = smul.addr %s650, 4
        %s652 = smul.addr %s651, 8
        %s653 = scalar_lea.vmem %s10, %s652
        %p654 = pneg %p323
        %p655 = pneg %p320
        %p656 = scmp.lt.s32.totalorder %s35, 1
        %s657 = scalar_select %p656, %s35, 1
        %s658 = scalar_lea.vmem %s11, %s657
        %p659 = pneg %p349
        %p660 = pneg %p346
        %p661 = scmp.lt.s32.totalorder %s35, 1
        %s662 = scalar_select %p661, %s35, 1
        %s663 = smul.addr %s662, 16
        %s664 = smul.addr %s663, 8
        %s665 = scalar_lea.vmem %s12, %s664
        %p666 = pneg %p375
        %p667 = pneg %p372
        %p668 = scmp.lt.s32.totalorder %s35, 1
        %s669 = scalar_select %p668, %s35, 1
        %s670 = scalar_lea.vmem %s13, %s669
        %p671 = pneg %p401
        %p672 = pneg %p398
        %p673 = pneg %p422
        %p674 = pneg %p419
        %p675 = pneg %p443
        %p676 = pneg %p440
        %p677 = pneg %p469
        %p678 = pneg %p466
        %s679 = sand.u32 %s456, 1
        %s680 = scalar_lea.sflag [#allocation4], %s679
        %s681 = sand.u32 %s456, 1
        %s682 = smul.addr %s681, 8
        %s683 = scalar_lea.vmem [#allocation3], %s682
        %p684 = scmp.lt.s32.totalorder %s34, 1
        %s685 = scalar_select %p684, %s34, 1
        %s686 = smul.addr %s685, 8
        %s687 = scalar_lea.vmem %s0, %s686
        %p688 = scmp.lt.s32.totalorder %s34, 1
        %s689 = scalar_select %p688, %s34, 1
        %s690 = scalar_lea.vmem %s1, %s689
        %p691 = scmp.lt.s32.totalorder %s35, 1
        %s692 = scalar_select %p691, %s35, 1
        %s693 = scalar_lea.vmem %s2, %s692
        %p694 = scmp.lt.s32.totalorder %s35, 1
        %s695 = scalar_select %p694, %s35, 1
        %s696 = scalar_lea.vmem %s3, %s695
        %p697 = scmp.lt.s32.totalorder %s35, 1
        %s698 = scalar_select %p697, %s35, 1
        %s699 = smul.addr %s698, 4
        %s700 = smul.addr %s699, 8
        %s701 = scalar_lea.vmem %s4, %s700
        %p702 = scmp.lt.s32.totalorder %s35, 1
        %s703 = scalar_select %p702, %s35, 1
        %s704 = scalar_lea.vmem %s5, %s703
        %p705 = scmp.lt.s32.totalorder %s35, 1
        %s706 = scalar_select %p705, %s35, 1
        %s707 = smul.addr %s706, 4
        %s708 = smul.addr %s707, 8
        %s709 = scalar_lea.vmem %s6, %s708
        %p710 = scmp.lt.s32.totalorder %s35, 1
        %s711 = scalar_select %p710, %s35, 1
        %s712 = scalar_lea.vmem %s7, %s711
        %p713 = scmp.lt.s32.totalorder %s35, 1
        %s714 = scalar_select %p713, %s35, 1
        %s715 = scalar_lea.vmem %s8, %s714
        %p716 = scmp.lt.s32.totalorder %s35, 1
        %s717 = scalar_select %p716, %s35, 1
        %s718 = scalar_lea.vmem %s9, %s717
        %p719 = scmp.lt.s32.totalorder %s35, 1
        %s720 = scalar_select %p719, %s35, 1
        %s721 = smul.addr %s720, 4
        %s722 = smul.addr %s721, 8
        %s723 = scalar_lea.vmem %s10, %s722
        %p724 = scmp.lt.s32.totalorder %s35, 1
        %s725 = scalar_select %p724, %s35, 1
        %s726 = scalar_lea.vmem %s11, %s725
        %p727 = scmp.lt.s32.totalorder %s35, 1
        %s728 = scalar_select %p727, %s35, 1
        %s729 = smul.addr %s728, 16
        %s730 = smul.addr %s729, 8
        %s731 = scalar_lea.vmem %s12, %s730
        %p732 = scmp.lt.s32.totalorder %s35, 1
        %s733 = scalar_select %p732, %s35, 1
        %s734 = scalar_lea.vmem %s13, %s733
        %p736 = scmp.eq.s32.totalorder %s35, 0
        // Predicated region
        $region85: #{tpu_custom_call.1} parent=83 // pred_check
          %p737 = pneg %p736
        $region86: #{tpu_custom_call.1} parent=83 // pred_check_branch
          %739 = sbr.rel (%p737) target = $region88
        $region87: #{tpu_custom_call.1} parent=83 // pred_region
          %v740 = vld [vmem:[%s687] sm:$0xff]
          %vm741 = vcmask 261120
          %742 = vst.msk [vmem:[#allocation2] sm:$0xff] %vm741, %v740
        $region88: #{tpu_custom_call.1} parent=83 // pred_fallthru
          _
        %v743 = vld [vmem:[#allocation2] sm:$0xff]
        %v744 = vld [vmem:[%s693] sm:$0x1]
        %v745 = vld [vmem:[%s696] sm:$0x1]
        %vm746 = vcmask 261120
        %v747 = vsel %vm746, %v743, 0.0
        %748 = vadd.xlane.f32.xlu0 %v747
        %v749 = vpop.xlane.xlu0 %748
        %v750 = vrcp.pop 32.0
        %v751 = vmul.f32 %v749, %v750
        %v752 = vsub.f32 %v743, %v751
        %v753 = vmul.f32 %v752, %v752
        %v754 = vsel %vm746, %v753, 0.0
        %755 = vadd.xlane.f32.xlu0 %v754
        %v756 = vpop.xlane.xlu0 %755
        %v757 = vrcp.pop 31.0
        %v758 = vmul.f32 %v756, %v757
        %v759 = vrsqrt.pop %v758
        %v760 = vmul.f32 %v758, %v759
        %vm761 = vcmp.eq.f32.partialorder %v758, inf
        %v762 = vsel %vm761, %v758, %v760
        %vm763 = vcmp.eq.f32.partialorder %v758, 0.0
        %v764 = vand.u32 %v758, 2147483648
        %v765 = vsel %vm763, %v764, %v762
        %v767 = vlaneseq
        %v768 = vshrl.u32 %v767, 7
        %v769 = vsub.s32 0, %v768
        %v770 = vrot.slane %v744, %v769
        %v772 = vmul.f32 %v770, %v752
        %v773 = vadd.f32 %v765, 1e-05
        %v774 = vrcp.pop %v773
        %v775 = vmul.f32 %v772, %v774
        %v777 = vlaneseq
        %v778 = vshrl.u32 %v777, 7
        %v779 = vsub.s32 0, %v778
        %v780 = vrot.slane %v745, %v779
        %v782 = vadd.f32 %v775, %v780
        %v783 = vpack.c.bf16 %v782, %v782
        %v784 = vld [vmem:[%s701] sm:$0xff]
        %v785 = vld [vmem:[%s701 + $0x8] sm:$0xff]
        %v786 = vld [vmem:[%s701 + $0x10] sm:$0xff]
        %v787 = vld [vmem:[%s701 + $0x18] sm:$0xff]
        %v788 = vpack.c.bf16 %v785, %v784
        %v789 = vpack.c.bf16 %v787, %v786
        %v790 = vld [vmem:[%s704] sm:$0x1]
        %v792 = vlaneseq
        %v793 = vshrl.u32 %v792, 7
        %v794 = vsub.s32 0, %v793
        %v795 = vrot.slane %v790, %v794
        %v798 = vsel %vm746, %v783, 0
        %800 = vmatprep.subr.bf16.mxu0 0
        %801 = vmatpush1.bf16.msra.mxu0 %v788
        %802 = vmatprep.subr.bf16.mxu0 0
        %803 = vmatpush1.bf16.msra.mxu0 %v789
        %804 = vmatprep.subr.bf16.mxu0 0
        %805 = vmatpush1.bf16.msra.mxu0 0
        %806 = vmatprep.subr.bf16.mxu0 0
        %807 = vmatpush1.bf16.msra.mxu0 0
        %808 = vmatprep.subr.bf16.mxu0 0
        %809 = vmatpush1.bf16.msra.mxu0 0
        %810 = vmatprep.subr.bf16.mxu0 0
        %811 = vmatpush1.bf16.msra.mxu0 0
        %812 = vmatprep.subr.bf16.mxu0 0
        %813 = vmatpush1.bf16.msra.mxu0 0
        %814 = vmatprep.subr.bf16.mxu0 0
        %815 = vmatpush1.bf16.msra.mxu0 0
        %816 = vmatprep.subr.bf16.mxu0 0
        %817 = vmatpush1.bf16.msra.mxu0 0
        %818 = vmatprep.subr.bf16.mxu0 0
        %819 = vmatpush1.bf16.msra.mxu0 0
        %820 = vmatprep.subr.bf16.mxu0 0
        %821 = vmatpush1.bf16.msra.mxu0 0
        %822 = vmatprep.subr.bf16.mxu0 0
        %823 = vmatpush1.bf16.msra.mxu0 0
        %824 = vmatprep.subr.bf16.mxu0 0
        %825 = vmatpush1.bf16.msra.mxu0 0
        %826 = vmatprep.subr.bf16.mxu0 0
        %827 = vmatpush1.bf16.msra.mxu0 0
        %828 = vmatprep.subr.bf16.mxu0 0
        %829 = vmatpush1.bf16.msra.mxu0 0
        %830 = vmatprep.subr.bf16.mxu0 0
        %831 = vmatpush1.bf16.msra.mxu0 0
        %832 = vmatprep.mubr.bf16.mxu0 0
        %833 = vmatmul.mubr.bf16.gmra.mrb[0].mxu0 %v798
        %v834 = vpop.f32.mrb[0].mxu0
        %v835 = vadd.f32 %v795, %v834
        %v836 = vpop.f32.mrb[0].mxu0
        %v837 = vpop.f32.mrb[0].mxu0
        %v838 = vpop.f32.mrb[0].mxu0
        %839 = vdwg.mxu0
        %841 = vrot.lane.b32.xlu0 %v835, 120
        %v842 = vpop.permute.xlu0 %841
        %844 = vrot.lane.b32.xlu0 %v835, 112
        %v845 = vpop.permute.xlu0 %844
        %847 = vrot.lane.b32.xlu0 %v835, 104
        %v848 = vpop.permute.xlu0 %847
        %v850 = vcombine.low %v835, %v845
        %v851 = vcombine.high %v835, %v845
        %v853 = vunpack.c.l.s4 1983009808
        %v854 = vunpack.c.0.s8 %v853
        %v855 = vlaneseq
        %v856 = vshrl.u32 %v855, 7
        %v857 = vsub.s32 %v854, %v856
        %v858 = vrot.slane %v850, %v857
        %v860 = vunpack.c.l.s4 1983009808
        %v861 = vunpack.c.0.s8 %v860
        %v862 = vlaneseq
        %v863 = vshrl.u32 %v862, 7
        %v864 = vsub.s32 %v861, %v863
        %v865 = vrot.slane %v851, %v864
        %v866 = vcombine.low %v842, %v848
        %v867 = vcombine.high %v842, %v848
        %v869 = vunpack.c.l.s4 1983009808
        %v870 = vunpack.c.0.s8 %v869
        %v871 = vlaneseq
        %v872 = vshrl.u32 %v871, 7
        %v873 = vsub.s32 %v870, %v872
        %v874 = vrot.slane %v866, %v873
        %v876 = vunpack.c.l.s4 1983009808
        %v877 = vunpack.c.0.s8 %v876
        %v878 = vlaneseq
        %v879 = vshrl.u32 %v878, 7
        %v880 = vsub.s32 %v877, %v879
        %v881 = vrot.slane %v867, %v880
        %v882 = vcombine.low %v858, %v874
        %v883 = vcombine.high %v858, %v874
        %v885 = vunpack.c.l.s4 1934713408
        %v886 = vunpack.c.0.s8 %v885
        %v887 = vlaneseq
        %v888 = vshrl.u32 %v887, 7
        %v889 = vsub.s32 %v886, %v888
        %v890 = vrot.slane %v882, %v889
        %v892 = vunpack.c.l.s4 1934713408
        %v893 = vunpack.c.0.s8 %v892
        %v894 = vlaneseq
        %v895 = vshrl.u32 %v894, 7
        %v896 = vsub.s32 %v893, %v895
        %v897 = vrot.slane %v883, %v896
        %v898 = vcombine.low %v865, %v881
        %v899 = vcombine.high %v865, %v881
        %v901 = vunpack.c.l.s4 1934713408
        %v902 = vunpack.c.0.s8 %v901
        %v903 = vlaneseq
        %v904 = vshrl.u32 %v903, 7
        %v905 = vsub.s32 %v902, %v904
        %v906 = vrot.slane %v898, %v905
        %v908 = vunpack.c.l.s4 1934713408
        %v909 = vunpack.c.0.s8 %v908
        %v910 = vlaneseq
        %v911 = vshrl.u32 %v910, 7
        %v912 = vsub.s32 %v909, %v911
        %v913 = vrot.slane %v899, %v912
        %v914 = vcombine.high %v890, 0.0
        %v915 = vcombine.high %v897, 0.0
        %v916 = vcombine.high %v906, 0.0
        %v917 = vcombine.high %v913, 0.0
        %918 = vrot.lane.b32.xlu0 %v835, 96
        %v919 = vpop.permute.xlu0 %918
        %920 = vrot.lane.b32.xlu0 %v842, 96
        %v921 = vpop.permute.xlu0 %920
        %922 = vrot.lane.b32.xlu0 %v845, 96
        %v923 = vpop.permute.xlu0 %922
        %924 = vrot.lane.b32.xlu0 %v848, 96
        %v925 = vpop.permute.xlu0 %924
        %v930 = vcombine.low %v919, %v923
        %v931 = vcombine.high %v919, %v923
        %v933 = vunpack.c.l.s4 1983009808
        %v934 = vunpack.c.0.s8 %v933
        %v935 = vlaneseq
        %v936 = vshrl.u32 %v935, 7
        %v937 = vsub.s32 %v934, %v936
        %v938 = vrot.slane %v930, %v937
        %v940 = vunpack.c.l.s4 1983009808
        %v941 = vunpack.c.0.s8 %v940
        %v942 = vlaneseq
        %v943 = vshrl.u32 %v942, 7
        %v944 = vsub.s32 %v941, %v943
        %v945 = vrot.slane %v931, %v944
        %v946 = vcombine.low %v921, %v925
        %v947 = vcombine.high %v921, %v925
        %v949 = vunpack.c.l.s4 1983009808
        %v950 = vunpack.c.0.s8 %v949
        %v951 = vlaneseq
        %v952 = vshrl.u32 %v951, 7
        %v953 = vsub.s32 %v950, %v952
        %v954 = vrot.slane %v946, %v953
        %v956 = vunpack.c.l.s4 1983009808
        %v957 = vunpack.c.0.s8 %v956
        %v958 = vlaneseq
        %v959 = vshrl.u32 %v958, 7
        %v960 = vsub.s32 %v957, %v959
        %v961 = vrot.slane %v947, %v960
        %v962 = vcombine.low %v938, %v954
        %v963 = vcombine.high %v938, %v954
        %v965 = vunpack.c.l.s4 1934713408
        %v966 = vunpack.c.0.s8 %v965
        %v967 = vlaneseq
        %v968 = vshrl.u32 %v967, 7
        %v969 = vsub.s32 %v966, %v968
        %v970 = vrot.slane %v962, %v969
        %v972 = vunpack.c.l.s4 1934713408
        %v973 = vunpack.c.0.s8 %v972
        %v974 = vlaneseq
        %v975 = vshrl.u32 %v974, 7
        %v976 = vsub.s32 %v973, %v975
        %v977 = vrot.slane %v963, %v976
        %v978 = vcombine.low %v945, %v961
        %v979 = vcombine.high %v945, %v961
        %v981 = vunpack.c.l.s4 1934713408
        %v982 = vunpack.c.0.s8 %v981
        %v983 = vlaneseq
        %v984 = vshrl.u32 %v983, 7
        %v985 = vsub.s32 %v982, %v984
        %v986 = vrot.slane %v978, %v985
        %v988 = vunpack.c.l.s4 1934713408
        %v989 = vunpack.c.0.s8 %v988
        %v990 = vlaneseq
        %v991 = vshrl.u32 %v990, 7
        %v992 = vsub.s32 %v989, %v991
        %v993 = vrot.slane %v979, %v992
        %v994 = vcombine.high %v970, 0.0
        %v995 = vcombine.high %v977, 0.0
        %v996 = vcombine.high %v986, 0.0
        %v997 = vcombine.high %v993, 0.0
        %998 = vrot.lane.b32.xlu0 %v835, 64
        %v999 = vpop.permute.xlu0 %998
        %1000 = vrot.lane.b32.xlu0 %v842, 64
        %v1001 = vpop.permute.xlu0 %1000
        %1002 = vrot.lane.b32.xlu0 %v845, 64
        %v1003 = vpop.permute.xlu0 %1002
        %1004 = vrot.lane.b32.xlu0 %v848, 64
        %v1005 = vpop.permute.xlu0 %1004
        %v1010 = vcombine.low %v999, %v1003
        %v1011 = vcombine.high %v999, %v1003
        %v1013 = vunpack.c.l.s4 1983009808
        %v1014 = vunpack.c.0.s8 %v1013
        %v1015 = vlaneseq
        %v1016 = vshrl.u32 %v1015, 7
        %v1017 = vsub.s32 %v1014, %v1016
        %v1018 = vrot.slane %v1010, %v1017
        %v1020 = vunpack.c.l.s4 1983009808
        %v1021 = vunpack.c.0.s8 %v1020
        %v1022 = vlaneseq
        %v1023 = vshrl.u32 %v1022, 7
        %v1024 = vsub.s32 %v1021, %v1023
        %v1025 = vrot.slane %v1011, %v1024
        %v1026 = vcombine.low %v1001, %v1005
        %v1027 = vcombine.high %v1001, %v1005
        %v1029 = vunpack.c.l.s4 1983009808
        %v1030 = vunpack.c.0.s8 %v1029
        %v1031 = vlaneseq
        %v1032 = vshrl.u32 %v1031, 7
        %v1033 = vsub.s32 %v1030, %v1032
        %v1034 = vrot.slane %v1026, %v1033
        %v1036 = vunpack.c.l.s4 1983009808
        %v1037 = vunpack.c.0.s8 %v1036
        %v1038 = vlaneseq
        %v1039 = vshrl.u32 %v1038, 7
        %v1040 = vsub.s32 %v1037, %v1039
        %v1041 = vrot.slane %v1027, %v1040
        %v1042 = vcombine.low %v1018, %v1034
        %v1043 = vcombine.high %v1018, %v1034
        %v1045 = vunpack.c.l.s4 1934713408
        %v1046 = vunpack.c.0.s8 %v1045
        %v1047 = vlaneseq
        %v1048 = vshrl.u32 %v1047, 7
        %v1049 = vsub.s32 %v1046, %v1048
        %v1050 = vrot.slane %v1042, %v1049
        %v1052 = vunpack.c.l.s4 1934713408
        %v1053 = vunpack.c.0.s8 %v1052
        %v1054 = vlaneseq
        %v1055 = vshrl.u32 %v1054, 7
        %v1056 = vsub.s32 %v1053, %v1055
        %v1057 = vrot.slane %v1043, %v1056
        %v1058 = vcombine.low %v1025, %v1041
        %v1059 = vcombine.high %v1025, %v1041
        %v1061 = vunpack.c.l.s4 1934713408
        %v1062 = vunpack.c.0.s8 %v1061
        %v1063 = vlaneseq
        %v1064 = vshrl.u32 %v1063, 7
        %v1065 = vsub.s32 %v1062, %v1064
        %v1066 = vrot.slane %v1058, %v1065
        %v1068 = vunpack.c.l.s4 1934713408
        %v1069 = vunpack.c.0.s8 %v1068
        %v1070 = vlaneseq
        %v1071 = vshrl.u32 %v1070, 7
        %v1072 = vsub.s32 %v1069, %v1071
        %v1073 = vrot.slane %v1059, %v1072
        %v1074 = vcombine.high %v1050, 0.0
        %v1075 = vcombine.high %v1057, 0.0
        %v1076 = vcombine.high %v1066, 0.0
        %v1077 = vcombine.high %v1073, 0.0
        %v1078 = vpack.c.bf16 %v890, %v890
        %v1079 = vpack.c.bf16 %v914, %v914
        %v1080 = vpack.c.bf16 %v897, %v897
        %v1081 = vpack.c.bf16 %v915, %v915
        %v1082 = vpack.c.bf16 %v906, %v906
        %v1083 = vpack.c.bf16 %v916, %v916
        %v1084 = vpack.c.bf16 %v913, %v913
        %v1085 = vpack.c.bf16 %v917, %v917
        %v1086 = vpack.c.bf16 %v970, %v970
        %v1087 = vpack.c.bf16 %v994, %v994
        %v1088 = vpack.c.bf16 %v977, %v977
        %v1089 = vpack.c.bf16 %v995, %v995
        %v1090 = vpack.c.bf16 %v986, %v986
        %v1091 = vpack.c.bf16 %v996, %v996
        %v1092 = vpack.c.bf16 %v993, %v993
        %v1093 = vpack.c.bf16 %v997, %v997
        %v1094 = vcombine.low %v1078, %v1082
        %v1096 = vunpack.c.l.s4 1983009808
        %v1097 = vunpack.c.0.s8 %v1096
        %v1098 = vlaneseq
        %v1099 = vshrl.u32 %v1098, 7
        %v1100 = vsub.s32 %v1097, %v1099
        %v1101 = vrot.slane %v1094, %v1100
        %v1102 = vcombine.low %v1080, %v1084
        %v1104 = vunpack.c.l.s4 1983009808
        %v1105 = vunpack.c.0.s8 %v1104
        %v1106 = vlaneseq
        %v1107 = vshrl.u32 %v1106, 7
        %v1108 = vsub.s32 %v1105, %v1107
        %v1109 = vrot.slane %v1102, %v1108
        %v1110 = vcombine.low %v1101, %v1109
        %v1112 = vunpack.c.l.s4 1934713408
        %v1113 = vunpack.c.0.s8 %v1112
        %v1114 = vlaneseq
        %v1115 = vshrl.u32 %v1114, 7
        %v1116 = vsub.s32 %v1113, %v1115
        %v1117 = vrot.slane %v1110, %v1116
        %v1118 = vcombine.high %v1117, 0
        %v1119 = vcombine.low %v1079, %v1083
        %v1121 = vunpack.c.l.s4 1983009808
        %v1122 = vunpack.c.0.s8 %v1121
        %v1123 = vlaneseq
        %v1124 = vshrl.u32 %v1123, 7
        %v1125 = vsub.s32 %v1122, %v1124
        %v1126 = vrot.slane %v1119, %v1125
        %v1127 = vcombine.low %v1081, %v1085
        %v1129 = vunpack.c.l.s4 1983009808
        %v1130 = vunpack.c.0.s8 %v1129
        %v1131 = vlaneseq
        %v1132 = vshrl.u32 %v1131, 7
        %v1133 = vsub.s32 %v1130, %v1132
        %v1134 = vrot.slane %v1127, %v1133
        %v1135 = vcombine.low %v1126, %v1134
        %v1137 = vunpack.c.l.s4 1934713408
        %v1138 = vunpack.c.0.s8 %v1137
        %v1139 = vlaneseq
        %v1140 = vshrl.u32 %v1139, 7
        %v1141 = vsub.s32 %v1138, %v1140
        %v1142 = vrot.slane %v1135, %v1141
        %v1143 = vcombine.high %v1142, 0
        %v1146 = vpack.i.b16 %v1142, %v1117
        %v1147 = vshrl.u32 %v1117, 16
        %v1148 = vshrl.u32 %v1142, 16
        %v1149 = vpack.i.b16 %v1148, %v1147
        %v1152 = vpack.i.b16 %v1143, %v1118
        %v1153 = vshrl.u32 %v1118, 16
        %v1154 = vshrl.u32 %v1143, 16
        %v1155 = vpack.i.b16 %v1154, %v1153
        %1156 = vxpose.xlu0.c.b16.start [1/8] %v1086, 128
        %1157 = vxpose.xlu0.c.b16.cont [2/8] 0, 128
        %1158 = vxpose.xlu0.c.b16.cont [3/8] 0, 128
        %1159 = vxpose.xlu0.c.b16.cont [4/8] 0, 128
        %1160 = vxpose.xlu0.c.b16.cont [5/8] 0, 128
        %1161 = vxpose.xlu0.c.b16.cont [6/8] 0, 128
        %1162 = vxpose.xlu0.c.b16.cont [7/8] 0, 128
        %1163 = vxpose.xlu0.c.b16.end [8/8] 0, 128
        %v1164 = vpop.trf.xlu0
        %v1165 = vpop.trf.xlu0
        %v1166 = vpop.trf.xlu0
        %v1167 = vpop.trf.xlu0
        %v1168 = vpop.trf.xlu0
        %v1169 = vpop.trf.xlu0
        %v1170 = vpop.trf.xlu0
        %v1171 = vpop.trf.xlu0
        %1172 = vxpose.xlu0.c.b16.start [1/8] %v1087, 128
        %1173 = vxpose.xlu0.c.b16.cont [2/8] 0, 128
        %1174 = vxpose.xlu0.c.b16.cont [3/8] 0, 128
        %1175 = vxpose.xlu0.c.b16.cont [4/8] 0, 128
        %1176 = vxpose.xlu0.c.b16.cont [5/8] 0, 128
        %1177 = vxpose.xlu0.c.b16.cont [6/8] 0, 128
        %1178 = vxpose.xlu0.c.b16.cont [7/8] 0, 128
        %1179 = vxpose.xlu0.c.b16.end [8/8] 0, 128
        %v1180 = vpop.trf.xlu0
        %v1181 = vpop.trf.xlu0
        %v1182 = vpop.trf.xlu0
        %v1183 = vpop.trf.xlu0
        %v1184 = vpop.trf.xlu0
        %v1185 = vpop.trf.xlu0
        %v1186 = vpop.trf.xlu0
        %v1187 = vpop.trf.xlu0
        %1188 = vxpose.xlu0.c.b16.start [1/8] %v1088, 128
        %1189 = vxpose.xlu0.c.b16.cont [2/8] 0, 128
        %1190 = vxpose.xlu0.c.b16.cont [3/8] 0, 128
        %1191 = vxpose.xlu0.c.b16.cont [4/8] 0, 128
        %1192 = vxpose.xlu0.c.b16.cont [5/8] 0, 128
        %1193 = vxpose.xlu0.c.b16.cont [6/8] 0, 128
        %1194 = vxpose.xlu0.c.b16.cont [7/8] 0, 128
        %1195 = vxpose.xlu0.c.b16.end [8/8] 0, 128
        %v1196 = vpop.trf.xlu0
        %v1197 = vpop.trf.xlu0
        %v1198 = vpop.trf.xlu0
        %v1199 = vpop.trf.xlu0
        %v1200 = vpop.trf.xlu0
        %v1201 = vpop.trf.xlu0
        %v1202 = vpop.trf.xlu0
        %v1203 = vpop.trf.xlu0
        %1204 = vxpose.xlu0.c.b16.start [1/8] %v1089, 128
        %1205 = vxpose.xlu0.c.b16.cont [2/8] 0, 128
        %1206 = vxpose.xlu0.c.b16.cont [3/8] 0, 128
        %1207 = vxpose.xlu0.c.b16.cont [4/8] 0, 128
        %1208 = vxpose.xlu0.c.b16.cont [5/8] 0, 128
        %1209 = vxpose.xlu0.c.b16.cont [6/8] 0, 128
        %1210 = vxpose.xlu0.c.b16.cont [7/8] 0, 128
        %1211 = vxpose.xlu0.c.b16.end [8/8] 0, 128
        %v1212 = vpop.trf.xlu0
        %v1213 = vpop.trf.xlu0
        %v1214 = vpop.trf.xlu0
        %v1215 = vpop.trf.xlu0
        %v1216 = vpop.trf.xlu0
        %v1217 = vpop.trf.xlu0
        %v1218 = vpop.trf.xlu0
        %v1219 = vpop.trf.xlu0
        %1220 = vxpose.xlu0.c.b16.start [1/8] %v1090, 128
        %1221 = vxpose.xlu0.c.b16.cont [2/8] 0, 128
        %1222 = vxpose.xlu0.c.b16.cont [3/8] 0, 128
        %1223 = vxpose.xlu0.c.b16.cont [4/8] 0, 128
        %1224 = vxpose.xlu0.c.b16.cont [5/8] 0, 128
        %1225 = vxpose.xlu0.c.b16.cont [6/8] 0, 128
        %1226 = vxpose.xlu0.c.b16.cont [7/8] 0, 128
        %1227 = vxpose.xlu0.c.b16.end [8/8] 0, 128
        %v1228 = vpop.trf.xlu0
        %v1229 = vpop.trf.xlu0
        %v1230 = vpop.trf.xlu0
        %v1231 = vpop.trf.xlu0
        %v1232 = vpop.trf.xlu0
        %v1233 = vpop.trf.xlu0
        %v1234 = vpop.trf.xlu0
        %v1235 = vpop.trf.xlu0
        %1236 = vxpose.xlu0.c.b16.start [1/8] %v1091, 128
        %1237 = vxpose.xlu0.c.b16.cont [2/8] 0, 128
        %1238 = vxpose.xlu0.c.b16.cont [3/8] 0, 128
        %1239 = vxpose.xlu0.c.b16.cont [4/8] 0, 128
        %1240 = vxpose.xlu0.c.b16.cont [5/8] 0, 128
        %1241 = vxpose.xlu0.c.b16.cont [6/8] 0, 128
        %1242 = vxpose.xlu0.c.b16.cont [7/8] 0, 128
        %1243 = vxpose.xlu0.c.b16.end [8/8] 0, 128
        %v1244 = vpop.trf.xlu0
        %v1245 = vpop.trf.xlu0
        %v1246 = vpop.trf.xlu0
        %v1247 = vpop.trf.xlu0
        %v1248 = vpop.trf.xlu0
        %v1249 = vpop.trf.xlu0
        %v1250 = vpop.trf.xlu0
        %v1251 = vpop.trf.xlu0
        %1252 = vxpose.xlu0.c.b16.start [1/8] %v1092, 128
        %1253 = vxpose.xlu0.c.b16.cont [2/8] 0, 128
        %1254 = vxpose.xlu0.c.b16.cont [3/8] 0, 128
        %1255 = vxpose.xlu0.c.b16.cont [4/8] 0, 128
        %1256 = vxpose.xlu0.c.b16.cont [5/8] 0, 128
        %1257 = vxpose.xlu0.c.b16.cont [6/8] 0, 128
        %1258 = vxpose.xlu0.c.b16.cont [7/8] 0, 128
        %1259 = vxpose.xlu0.c.b16.end [8/8] 0, 128
        %v1260 = vpop.trf.xlu0
        %v1261 = vpop.trf.xlu0
        %v1262 = vpop.trf.xlu0
        %v1263 = vpop.trf.xlu0
        %v1264 = vpop.trf.xlu0
        %v1265 = vpop.trf.xlu0
        %v1266 = vpop.trf.xlu0
        %v1267 = vpop.trf.xlu0
        %1268 = vxpose.xlu0.c.b16.start [1/8] %v1093, 128
        %1269 = vxpose.xlu0.c.b16.cont [2/8] 0, 128
        %1270 = vxpose.xlu0.c.b16.cont [3/8] 0, 128
        %1271 = vxpose.xlu0.c.b16.cont [4/8] 0, 128
        %1272 = vxpose.xlu0.c.b16.cont [5/8] 0, 128
        %1273 = vxpose.xlu0.c.b16.cont [6/8] 0, 128
        %1274 = vxpose.xlu0.c.b16.cont [7/8] 0, 128
        %1275 = vxpose.xlu0.c.b16.end [8/8] 0, 128
        %v1276 = vpop.trf.xlu0
        %v1277 = vpop.trf.xlu0
        %v1278 = vpop.trf.xlu0
        %v1279 = vpop.trf.xlu0
        %v1280 = vpop.trf.xlu0
        %v1281 = vpop.trf.xlu0
        %v1282 = vpop.trf.xlu0
        %v1283 = vpop.trf.xlu0
        %v1284 = vcombine.low %v1164, %v1228
        %v1286 = vunpack.c.l.s4 1983009808
        %v1287 = vunpack.c.0.s8 %v1286
        %v1288 = vlaneseq
        %v1289 = vshrl.u32 %v1288, 7
        %v1290 = vsub.s32 %v1287, %v1289
        %v1291 = vrot.slane %v1284, %v1290
        %v1292 = vcombine.low %v1196, %v1260
        %v1294 = vunpack.c.l.s4 1983009808
        %v1295 = vunpack.c.0.s8 %v1294
        %v1296 = vlaneseq
        %v1297 = vshrl.u32 %v1296, 7
        %v1298 = vsub.s32 %v1295, %v1297
        %v1299 = vrot.slane %v1292, %v1298
        %v1300 = vcombine.low %v1291, %v1299
        %v1301 = vcombine.high %v1291, %v1299
        %v1303 = vunpack.c.l.s4 1934713408
        %v1304 = vunpack.c.0.s8 %v1303
        %v1305 = vlaneseq
        %v1306 = vshrl.u32 %v1305, 7
        %v1307 = vsub.s32 %v1304, %v1306
        %v1308 = vrot.slane %v1300, %v1307
        %v1310 = vunpack.c.l.s4 1934713408
        %v1311 = vunpack.c.0.s8 %v1310
        %v1312 = vlaneseq
        %v1313 = vshrl.u32 %v1312, 7
        %v1314 = vsub.s32 %v1311, %v1313
        %v1315 = vrot.slane %v1301, %v1314
        %v1316 = vcombine.high %v1308, 0
        %v1317 = vcombine.high %v1315, 0
        %v1318 = vcombine.low %v1180, %v1244
        %v1320 = vunpack.c.l.s4 1983009808
        %v1321 = vunpack.c.0.s8 %v1320
        %v1322 = vlaneseq
        %v1323 = vshrl.u32 %v1322, 7
        %v1324 = vsub.s32 %v1321, %v1323
        %v1325 = vrot.slane %v1318, %v1324
        %v1326 = vcombine.low %v1212, %v1276
        %v1328 = vunpack.c.l.s4 1983009808
        %v1329 = vunpack.c.0.s8 %v1328
        %v1330 = vlaneseq
        %v1331 = vshrl.u32 %v1330, 7
        %v1332 = vsub.s32 %v1329, %v1331
        %v1333 = vrot.slane %v1326, %v1332
        %v1334 = vcombine.low %v1325, %v1333
        %v1335 = vcombine.high %v1325, %v1333
        %v1337 = vunpack.c.l.s4 1934713408
        %v1338 = vunpack.c.0.s8 %v1337
        %v1339 = vlaneseq
        %v1340 = vshrl.u32 %v1339, 7
        %v1341 = vsub.s32 %v1338, %v1340
        %v1342 = vrot.slane %v1334, %v1341
        %v1344 = vunpack.c.l.s4 1934713408
        %v1345 = vunpack.c.0.s8 %v1344
        %v1346 = vlaneseq
        %v1347 = vshrl.u32 %v1346, 7
        %v1348 = vsub.s32 %v1345, %v1347
        %v1349 = vrot.slane %v1335, %v1348
        %v1350 = vcombine.high %v1342, 0
        %v1351 = vcombine.high %v1349, 0
        %v1354 = vpack.i.b16 %v1342, %v1308
        %v1356 = vshrl.u32 %v1308, 16
        %v1357 = vshrl.u32 %v1342, 16
        %v1358 = vpack.i.b16 %v1357, %v1356
        %v1362 = vpack.i.b16 %v1350, %v1316
        %v1364 = vshrl.u32 %v1316, 16
        %v1365 = vshrl.u32 %v1350, 16
        %v1366 = vpack.i.b16 %v1365, %v1364
        %v1370 = vpack.i.b16 %v1349, %v1315
        %v1372 = vshrl.u32 %v1315, 16
        %v1373 = vshrl.u32 %v1349, 16
        %v1374 = vpack.i.b16 %v1373, %v1372
        %v1378 = vpack.i.b16 %v1351, %v1317
        %v1380 = vshrl.u32 %v1317, 16
        %v1381 = vshrl.u32 %v1351, 16
        %v1382 = vpack.i.b16 %v1381, %v1380
        %1384 = vxpose.xlu0.c.b16.start [1/8] %v1354, 128
        %1385 = vxpose.xlu0.c.b16.cont [2/8] 0, 128
        %1386 = vxpose.xlu0.c.b16.cont [3/8] 0, 128
        %1387 = vxpose.xlu0.c.b16.cont [4/8] 0, 128
        %1388 = vxpose.xlu0.c.b16.cont [5/8] 0, 128
        %1389 = vxpose.xlu0.c.b16.cont [6/8] 0, 128
        %1390 = vxpose.xlu0.c.b16.cont [7/8] 0, 128
        %1391 = vxpose.xlu0.c.b16.end [8/8] 0, 128
        %v1392 = vpop.trf.xlu0
        %v1393 = vpop.trf.xlu0
        %v1394 = vpop.trf.xlu0
        %v1395 = vpop.trf.xlu0
        %v1396 = vpop.trf.xlu0
        %v1397 = vpop.trf.xlu0
        %v1398 = vpop.trf.xlu0
        %v1399 = vpop.trf.xlu0
        %1400 = vxpose.xlu0.c.b16.start [1/8] %v1358, 128
        %1401 = vxpose.xlu0.c.b16.cont [2/8] 0, 128
        %1402 = vxpose.xlu0.c.b16.cont [3/8] 0, 128
        %1403 = vxpose.xlu0.c.b16.cont [4/8] 0, 128
        %1404 = vxpose.xlu0.c.b16.cont [5/8] 0, 128
        %1405 = vxpose.xlu0.c.b16.cont [6/8] 0, 128
        %1406 = vxpose.xlu0.c.b16.cont [7/8] 0, 128
        %1407 = vxpose.xlu0.c.b16.end [8/8] 0, 128
        %v1408 = vpop.trf.xlu0
        %v1409 = vpop.trf.xlu0
        %v1410 = vpop.trf.xlu0
        %v1411 = vpop.trf.xlu0
        %v1412 = vpop.trf.xlu0
        %v1413 = vpop.trf.xlu0
        %v1414 = vpop.trf.xlu0
        %v1415 = vpop.trf.xlu0
        %1416 = vxpose.xlu0.c.b16.start [1/8] %v1362, 128
        %1417 = vxpose.xlu0.c.b16.cont [2/8] 0, 128
        %1418 = vxpose.xlu0.c.b16.cont [3/8] 0, 128
        %1419 = vxpose.xlu0.c.b16.cont [4/8] 0, 128
        %1420 = vxpose.xlu0.c.b16.cont [5/8] 0, 128
        %1421 = vxpose.xlu0.c.b16.cont [6/8] 0, 128
        %1422 = vxpose.xlu0.c.b16.cont [7/8] 0, 128
        %1423 = vxpose.xlu0.c.b16.end [8/8] 0, 128
        %v1424 = vpop.trf.xlu0
        %v1425 = vpop.trf.xlu0
        %v1426 = vpop.trf.xlu0
        %v1427 = vpop.trf.xlu0
        %v1428 = vpop.trf.xlu0
        %v1429 = vpop.trf.xlu0
        %v1430 = vpop.trf.xlu0
        %v1431 = vpop.trf.xlu0
        %1432 = vxpose.xlu0.c.b16.start [1/8] %v1366, 128
        %1433 = vxpose.xlu0.c.b16.cont [2/8] 0, 128
        %1434 = vxpose.xlu0.c.b16.cont [3/8] 0, 128
        %1435 = vxpose.xlu0.c.b16.cont [4/8] 0, 128
        %1436 = vxpose.xlu0.c.b16.cont [5/8] 0, 128
        %1437 = vxpose.xlu0.c.b16.cont [6/8] 0, 128
        %1438 = vxpose.xlu0.c.b16.cont [7/8] 0, 128
        %1439 = vxpose.xlu0.c.b16.end [8/8] 0, 128
        %v1440 = vpop.trf.xlu0
        %v1441 = vpop.trf.xlu0
        %v1442 = vpop.trf.xlu0
        %v1443 = vpop.trf.xlu0
        %v1444 = vpop.trf.xlu0
        %v1445 = vpop.trf.xlu0
        %v1446 = vpop.trf.xlu0
        %v1447 = vpop.trf.xlu0
        %1448 = vxpose.xlu0.c.b16.start [1/8] %v1370, 128
        %1449 = vxpose.xlu0.c.b16.cont [2/8] 0, 128
        %1450 = vxpose.xlu0.c.b16.cont [3/8] 0, 128
        %1451 = vxpose.xlu0.c.b16.cont [4/8] 0, 128
        %1452 = vxpose.xlu0.c.b16.cont [5/8] 0, 128
        %1453 = vxpose.xlu0.c.b16.cont [6/8] 0, 128
        %1454 = vxpose.xlu0.c.b16.cont [7/8] 0, 128
        %1455 = vxpose.xlu0.c.b16.end [8/8] 0, 128
        %v1456 = vpop.trf.xlu0
        %v1457 = vpop.trf.xlu0
        %v1458 = vpop.trf.xlu0
        %v1459 = vpop.trf.xlu0
        %v1460 = vpop.trf.xlu0
        %v1461 = vpop.trf.xlu0
        %v1462 = vpop.trf.xlu0
        %v1463 = vpop.trf.xlu0
        %1464 = vxpose.xlu0.c.b16.start [1/8] %v1374, 128
        %1465 = vxpose.xlu0.c.b16.cont [2/8] 0, 128
        %1466 = vxpose.xlu0.c.b16.cont [3/8] 0, 128
        %1467 = vxpose.xlu0.c.b16.cont [4/8] 0, 128
        %1468 = vxpose.xlu0.c.b16.cont [5/8] 0, 128
        %1469 = vxpose.xlu0.c.b16.cont [6/8] 0, 128
        %1470 = vxpose.xlu0.c.b16.cont [7/8] 0, 128
        %1471 = vxpose.xlu0.c.b16.end [8/8] 0, 128
        %v1472 = vpop.trf.xlu0
        %v1473 = vpop.trf.xlu0
        %v1474 = vpop.trf.xlu0
        %v1475 = vpop.trf.xlu0
        %v1476 = vpop.trf.xlu0
        %v1477 = vpop.trf.xlu0
        %v1478 = vpop.trf.xlu0
        %v1479 = vpop.trf.xlu0
        %1480 = vxpose.xlu0.c.b16.start [1/8] %v1378, 128
        %1481 = vxpose.xlu0.c.b16.cont [2/8] 0, 128
        %1482 = vxpose.xlu0.c.b16.cont [3/8] 0, 128
        %1483 = vxpose.xlu0.c.b16.cont [4/8] 0, 128
        %1484 = vxpose.xlu0.c.b16.cont [5/8] 0, 128
        %1485 = vxpose.xlu0.c.b16.cont [6/8] 0, 128
        %1486 = vxpose.xlu0.c.b16.cont [7/8] 0, 128
        %1487 = vxpose.xlu0.c.b16.end [8/8] 0, 128
        %v1488 = vpop.trf.xlu0
        %v1489 = vpop.trf.xlu0
        %v1490 = vpop.trf.xlu0
        %v1491 = vpop.trf.xlu0
        %v1492 = vpop.trf.xlu0
        %v1493 = vpop.trf.xlu0
        %v1494 = vpop.trf.xlu0
        %v1495 = vpop.trf.xlu0
        %1496 = vxpose.xlu0.c.b16.start [1/8] %v1382, 128
        %1497 = vxpose.xlu0.c.b16.cont [2/8] 0, 128
        %1498 = vxpose.xlu0.c.b16.cont [3/8] 0, 128
        %1499 = vxpose.xlu0.c.b16.cont [4/8] 0, 128
        %1500 = vxpose.xlu0.c.b16.cont [5/8] 0, 128
        %1501 = vxpose.xlu0.c.b16.cont [6/8] 0, 128
        %1502 = vxpose.xlu0.c.b16.cont [7/8] 0, 128
        %1503 = vxpose.xlu0.c.b16.end [8/8] 0, 128
        %v1504 = vpop.trf.xlu0
        %v1505 = vpop.trf.xlu0
        %v1506 = vpop.trf.xlu0
        %v1507 = vpop.trf.xlu0
        %v1508 = vpop.trf.xlu0
        %v1509 = vpop.trf.xlu0
        %v1510 = vpop.trf.xlu0
        %v1511 = vpop.trf.xlu0
        %v1512 = vcombine.low %v1392, %v1456
        %v1514 = vunpack.c.l.s4 1983009808
        %v1515 = vunpack.c.0.s8 %v1514
        %v1516 = vlaneseq
        %v1517 = vshrl.u32 %v1516, 7
        %v1518 = vsub.s32 %v1515, %v1517
        %v1519 = vrot.slane %v1512, %v1518
        %v1520 = vcombine.low %v1424, %v1488
        %v1522 = vunpack.c.l.s4 1983009808
        %v1523 = vunpack.c.0.s8 %v1522
        %v1524 = vlaneseq
        %v1525 = vshrl.u32 %v1524, 7
        %v1526 = vsub.s32 %v1523, %v1525
        %v1527 = vrot.slane %v1520, %v1526
        %v1528 = vcombine.low %v1519, %v1527
        %v1530 = vunpack.c.l.s4 1934713408
        %v1531 = vunpack.c.0.s8 %v1530
        %v1532 = vlaneseq
        %v1533 = vshrl.u32 %v1532, 7
        %v1534 = vsub.s32 %v1531, %v1533
        %v1535 = vrot.slane %v1528, %v1534
        %v1536 = vcombine.high %v1535, 0
        %v1537 = vcombine.low %v1408, %v1472
        %v1539 = vunpack.c.l.s4 1983009808
        %v1540 = vunpack.c.0.s8 %v1539
        %v1541 = vlaneseq
        %v1542 = vshrl.u32 %v1541, 7
        %v1543 = vsub.s32 %v1540, %v1542
        %v1544 = vrot.slane %v1537, %v1543
        %v1545 = vcombine.low %v1440, %v1504
        %v1547 = vunpack.c.l.s4 1983009808
        %v1548 = vunpack.c.0.s8 %v1547
        %v1549 = vlaneseq
        %v1550 = vshrl.u32 %v1549, 7
        %v1551 = vsub.s32 %v1548, %v1550
        %v1552 = vrot.slane %v1545, %v1551
        %v1553 = vcombine.low %v1544, %v1552
        %v1555 = vunpack.c.l.s4 1934713408
        %v1556 = vunpack.c.0.s8 %v1555
        %v1557 = vlaneseq
        %v1558 = vshrl.u32 %v1557, 7
        %v1559 = vsub.s32 %v1556, %v1558
        %v1560 = vrot.slane %v1553, %v1559
        %v1561 = vcombine.high %v1560, 0
        %v1564 = vpack.i.b16 %v1560, %v1535
        %v1565 = vshrl.u32 %v1535, 16
        %v1566 = vshrl.u32 %v1560, 16
        %v1567 = vpack.i.b16 %v1566, %v1565
        %v1570 = vpack.i.b16 %v1561, %v1536
        %v1571 = vshrl.u32 %v1536, 16
        %v1572 = vshrl.u32 %v1561, 16
        %v1573 = vpack.i.b16 %v1572, %v1571
        %vm1574 = vcmask 64512
        %v1576 = vsel %vm1574, %v1146, 0
        %vm1578 = vcmask 1043456
        %v1580 = vsel %vm1578, %v1564, 0
        %1582 = vmatprep.subr.bf16.mxu0 0
        %1583 = vmatpush1.bf16.msra.mxu0 %v1580
        %1584 = vmatprep.subr.bf16.mxu0 0
        %1585 = vmatpush1.bf16.msra.mxu0 0
        %1586 = vmatprep.subr.bf16.mxu0 0
        %1587 = vmatpush1.bf16.msra.mxu0 0
        %1588 = vmatprep.subr.bf16.mxu0 0
        %1589 = vmatpush1.bf16.msra.mxu0 0
        %1590 = vmatprep.subr.bf16.mxu0 0
        %1591 = vmatpush1.bf16.msra.mxu0 0
        %1592 = vmatprep.subr.bf16.mxu0 0
        %1593 = vmatpush1.bf16.msra.mxu0 0
        %1594 = vmatprep.subr.bf16.mxu0 0
        %1595 = vmatpush1.bf16.msra.mxu0 0
        %1596 = vmatprep.subr.bf16.mxu0 0
        %1597 = vmatpush1.bf16.msra.mxu0 0
        %1598 = vmatprep.subr.bf16.mxu0 0
        %1599 = vmatpush1.bf16.msra.mxu0 0
        %1600 = vmatprep.subr.bf16.mxu0 0
        %1601 = vmatpush1.bf16.msra.mxu0 0
        %1602 = vmatprep.subr.bf16.mxu0 0
        %1603 = vmatpush1.bf16.msra.mxu0 0
        %1604 = vmatprep.subr.bf16.mxu0 0
        %1605 = vmatpush1.bf16.msra.mxu0 0
        %1606 = vmatprep.subr.bf16.mxu0 0
        %1607 = vmatpush1.bf16.msra.mxu0 0
        %1608 = vmatprep.subr.bf16.mxu0 0
        %1609 = vmatpush1.bf16.msra.mxu0 0
        %1610 = vmatprep.subr.bf16.mxu0 0
        %1611 = vmatpush1.bf16.msra.mxu0 0
        %1612 = vmatprep.subr.bf16.mxu0 0
        %1613 = vmatpush1.bf16.msra.mxu0 0
        %1614 = vmatprep.mubr.bf16.mxu0 0
        %1615 = vmatmul.mubr.bf16.gmra.mrb[0].mxu0 %v1576
        %v1616 = vpop.f32.mrb[0].mxu0
        %v1617 = vadd.f32 0.0, %v1616
        %v1618 = vpop.f32.mrb[0].mxu0
        %v1619 = vpop.f32.mrb[0].mxu0
        %v1620 = vpop.f32.mrb[0].mxu0
        %1621 = vdwg.mxu0
        %v1623 = vsel %vm1574, %v1149, 0
        %v1626 = vsel %vm1578, %v1567, 0
        %1628 = vmatprep.subr.bf16.mxu0 0
        %1629 = vmatpush1.bf16.msra.mxu0 %v1626
        %1630 = vmatprep.subr.bf16.mxu0 0
        %1631 = vmatpush1.bf16.msra.mxu0 0
        %1632 = vmatprep.subr.bf16.mxu0 0
        %1633 = vmatpush1.bf16.msra.mxu0 0
        %1634 = vmatprep.subr.bf16.mxu0 0
        %1635 = vmatpush1.bf16.msra.mxu0 0
        %1636 = vmatprep.subr.bf16.mxu0 0
        %1637 = vmatpush1.bf16.msra.mxu0 0
        %1638 = vmatprep.subr.bf16.mxu0 0
        %1639 = vmatpush1.bf16.msra.mxu0 0
        %1640 = vmatprep.subr.bf16.mxu0 0
        %1641 = vmatpush1.bf16.msra.mxu0 0
        %1642 = vmatprep.subr.bf16.mxu0 0
        %1643 = vmatpush1.bf16.msra.mxu0 0
        %1644 = vmatprep.subr.bf16.mxu0 0
        %1645 = vmatpush1.bf16.msra.mxu0 0
        %1646 = vmatprep.subr.bf16.mxu0 0
        %1647 = vmatpush1.bf16.msra.mxu0 0
        %1648 = vmatprep.subr.bf16.mxu0 0
        %1649 = vmatpush1.bf16.msra.mxu0 0
        %1650 = vmatprep.subr.bf16.mxu0 0
        %1651 = vmatpush1.bf16.msra.mxu0 0
        %1652 = vmatprep.subr.bf16.mxu0 0
        %1653 = vmatpush1.bf16.msra.mxu0 0
        %1654 = vmatprep.subr.bf16.mxu0 0
        %1655 = vmatpush1.bf16.msra.mxu0 0
        %1656 = vmatprep.subr.bf16.mxu0 0
        %1657 = vmatpush1.bf16.msra.mxu0 0
        %1658 = vmatprep.subr.bf16.mxu0 0
        %1659 = vmatpush1.bf16.msra.mxu0 0
        %1660 = vmatprep.mubr.bf16.mxu0 0
        %1661 = vmatmul.mubr.bf16.gmra.mrb[0].mxu0 %v1623
        %v1662 = vpop.f32.mrb[0].mxu0
        %v1663 = vadd.f32 0.0, %v1662
        %v1664 = vpop.f32.mrb[0].mxu0
        %v1665 = vpop.f32.mrb[0].mxu0
        %v1666 = vpop.f32.mrb[0].mxu0
        %1667 = vdwg.mxu0
        %v1669 = vsel %vm1574, %v1152, 0
        %v1672 = vsel %vm1578, %v1570, 0
        %1674 = vmatprep.subr.bf16.mxu0 0
        %1675 = vmatpush1.bf16.msra.mxu0 %v1672
        %1676 = vmatprep.subr.bf16.mxu0 0
        %1677 = vmatpush1.bf16.msra.mxu0 0
        %1678 = vmatprep.subr.bf16.mxu0 0
        %1679 = vmatpush1.bf16.msra.mxu0 0
        %1680 = vmatprep.subr.bf16.mxu0 0
        %1681 = vmatpush1.bf16.msra.mxu0 0
        %1682 = vmatprep.subr.bf16.mxu0 0
        %1683 = vmatpush1.bf16.msra.mxu0 0
        %1684 = vmatprep.subr.bf16.mxu0 0
        %1685 = vmatpush1.bf16.msra.mxu0 0
        %1686 = vmatprep.subr.bf16.mxu0 0
        %1687 = vmatpush1.bf16.msra.mxu0 0
        %1688 = vmatprep.subr.bf16.mxu0 0
        %1689 = vmatpush1.bf16.msra.mxu0 0
        %1690 = vmatprep.subr.bf16.mxu0 0
        %1691 = vmatpush1.bf16.msra.mxu0 0
        %1692 = vmatprep.subr.bf16.mxu0 0
        %1693 = vmatpush1.bf16.msra.mxu0 0
        %1694 = vmatprep.subr.bf16.mxu0 0
        %1695 = vmatpush1.bf16.msra.mxu0 0
        %1696 = vmatprep.subr.bf16.mxu0 0
        %1697 = vmatpush1.bf16.msra.mxu0 0
        %1698 = vmatprep.subr.bf16.mxu0 0
        %1699 = vmatpush1.bf16.msra.mxu0 0
        %1700 = vmatprep.subr.bf16.mxu0 0
        %1701 = vmatpush1.bf16.msra.mxu0 0
        %1702 = vmatprep.subr.bf16.mxu0 0
        %1703 = vmatpush1.bf16.msra.mxu0 0
        %1704 = vmatprep.subr.bf16.mxu0 0
        %1705 = vmatpush1.bf16.msra.mxu0 0
        %1706 = vmatprep.mubr.bf16.mxu0 0
        %1707 = vmatmul.mubr.bf16.gmra.mrb[0].mxu0 %v1669
        %v1708 = vpop.f32.mrb[0].mxu0
        %v1709 = vadd.f32 0.0, %v1708
        %v1710 = vpop.f32.mrb[0].mxu0
        %v1711 = vpop.f32.mrb[0].mxu0
        %v1712 = vpop.f32.mrb[0].mxu0
        %1713 = vdwg.mxu0
        %v1715 = vsel %vm1574, %v1155, 0
        %v1718 = vsel %vm1578, %v1573, 0
        %1720 = vmatprep.subr.bf16.mxu0 0
        %1721 = vmatpush1.bf16.msra.mxu0 %v1718
        %1722 = vmatprep.subr.bf16.mxu0 0
        %1723 = vmatpush1.bf16.msra.mxu0 0
        %1724 = vmatprep.subr.bf16.mxu0 0
        %1725 = vmatpush1.bf16.msra.mxu0 0
        %1726 = vmatprep.subr.bf16.mxu0 0
        %1727 = vmatpush1.bf16.msra.mxu0 0
        %1728 = vmatprep.subr.bf16.mxu0 0
        %1729 = vmatpush1.bf16.msra.mxu0 0
        %1730 = vmatprep.subr.bf16.mxu0 0
        %1731 = vmatpush1.bf16.msra.mxu0 0
        %1732 = vmatprep.subr.bf16.mxu0 0
        %1733 = vmatpush1.bf16.msra.mxu0 0
        %1734 = vmatprep.subr.bf16.mxu0 0
        %1735 = vmatpush1.bf16.msra.mxu0 0
        %1736 = vmatprep.subr.bf16.mxu0 0
        %1737 = vmatpush1.bf16.msra.mxu0 0
        %1738 = vmatprep.subr.bf16.mxu0 0
        %1739 = vmatpush1.bf16.msra.mxu0 0
        %1740 = vmatprep.subr.bf16.mxu0 0
        %1741 = vmatpush1.bf16.msra.mxu0 0
        %1742 = vmatprep.subr.bf16.mxu0 0
        %1743 = vmatpush1.bf16.msra.mxu0 0
        %1744 = vmatprep.subr.bf16.mxu0 0
        %1745 = vmatpush1.bf16.msra.mxu0 0
        %1746 = vmatprep.subr.bf16.mxu0 0
        %1747 = vmatpush1.bf16.msra.mxu0 0
        %1748 = vmatprep.subr.bf16.mxu0 0
        %1749 = vmatpush1.bf16.msra.mxu0 0
        %1750 = vmatprep.subr.bf16.mxu0 0
        %1751 = vmatpush1.bf16.msra.mxu0 0
        %1752 = vmatprep.mubr.bf16.mxu0 0
        %1753 = vmatmul.mubr.bf16.gmra.mrb[0].mxu0 %v1715
        %v1754 = vpop.f32.mrb[0].mxu0
        %v1755 = vadd.f32 0.0, %v1754
        %v1756 = vpop.f32.mrb[0].mxu0
        %v1757 = vpop.f32.mrb[0].mxu0
        %v1758 = vpop.f32.mrb[0].mxu0
        %1759 = vdwg.mxu0
        %v1760 = vmul.f32 %v1617, 0.35355338
        %v1761 = vmul.f32 %v1663, 0.35355338
        %v1762 = vmul.f32 %v1709, 0.35355338
        %v1763 = vmul.f32 %v1755, 0.35355338
        %v1764 = vld [vmem:[%s690] sm:$0x1]
        %v1766 = vlaneseq
        %v1767 = vshrl.u32 %v1766, 7
        %v1768 = vsub.s32 0, %v1767
        %v1769 = vrot.slane %v1764, %v1768
        %v1771 = vadd.f32 %v1760, %v1769
        %v1772 = vadd.f32 %v1761, %v1769
        %v1773 = vadd.f32 %v1762, %v1769
        %v1774 = vadd.f32 %v1763, %v1769
        %v1775 = vsel %vm1574, %v1771, -inf
        %1776 = vmax.xlane.f32.xlu0 %v1775
        %v1777 = vpop.xlane.xlu0 %1776
        %v1778 = vsel %vm1574, %v1772, -inf
        %1779 = vmax.xlane.f32.xlu0 %v1778
        %v1780 = vpop.xlane.xlu0 %1779
        %v1781 = vsel %vm1574, %v1773, -inf
        %1782 = vmax.xlane.f32.xlu0 %v1781
        %v1783 = vpop.xlane.xlu0 %1782
        %v1784 = vsel %vm1574, %v1774, -inf
        %1785 = vmax.xlane.f32.xlu0 %v1784
        %v1786 = vpop.xlane.xlu0 %1785
        %v1787 = vsub.f32 %v1771, %v1777
        %v1788 = vsub.f32 %v1772, %v1780
        %v1789 = vsub.f32 %v1773, %v1783
        %v1790 = vsub.f32 %v1774, %v1786
        %v1791 = vmul.f32 %v1787, 1.442695
        %v1792 = vpow.pop %v1791
        %v1793 = vmul.f32 %v1788, 1.442695
        %v1794 = vpow.pop %v1793
        %v1795 = vmul.f32 %v1789, 1.442695
        %v1796 = vpow.pop %v1795
        %v1797 = vmul.f32 %v1790, 1.442695
        %v1798 = vpow.pop %v1797
        %v1799 = vsel %vm1574, %v1792, 0.0
        %1800 = vadd.xlane.f32.xlu0 %v1799
        %v1801 = vpop.xlane.xlu0 %1800
        %v1802 = vsel %vm1574, %v1794, 0.0
        %1803 = vadd.xlane.f32.xlu0 %v1802
        %v1804 = vpop.xlane.xlu0 %1803
        %v1805 = vsel %vm1574, %v1796, 0.0
        %1806 = vadd.xlane.f32.xlu0 %v1805
        %v1807 = vpop.xlane.xlu0 %1806
        %v1808 = vsel %vm1574, %v1798, 0.0
        %1809 = vadd.xlane.f32.xlu0 %v1808
        %v1810 = vpop.xlane.xlu0 %1809
        %v1811 = vrcp.pop %v1801
        %v1812 = vrcp.pop %v1804
        %v1813 = vrcp.pop %v1807
        %v1814 = vrcp.pop %v1810
        %v1815 = vmul.f32 %v1792, %v1811
        %v1816 = vmul.f32 %v1794, %v1812
        %v1817 = vmul.f32 %v1796, %v1813
        %v1818 = vmul.f32 %v1798, %v1814
        %v1819 = vpack.c.bf16 %v1815, %v1815
        %v1820 = vpack.c.bf16 %v1816, %v1816
        %v1821 = vpack.c.bf16 %v1817, %v1817
        %v1822 = vpack.c.bf16 %v1818, %v1818
        %v1823 = vpack.c.bf16 %v1050, %v1050
        %v1824 = vpack.c.bf16 %v1074, %v1074
        %v1825 = vpack.c.bf16 %v1057, %v1057
        %v1826 = vpack.c.bf16 %v1075, %v1075
        %v1827 = vpack.c.bf16 %v1066, %v1066
        %v1828 = vpack.c.bf16 %v1076, %v1076
        %v1829 = vpack.c.bf16 %v1073, %v1073
        %v1830 = vpack.c.bf16 %v1077, %v1077
        %1831 = vxpose.xlu0.c.b16.start [1/8] %v1823, 128
        %1832 = vxpose.xlu0.c.b16.cont [2/8] 0, 128
        %1833 = vxpose.xlu0.c.b16.cont [3/8] 0, 128
        %1834 = vxpose.xlu0.c.b16.cont [4/8] 0, 128
        %1835 = vxpose.xlu0.c.b16.cont [5/8] 0, 128
        %1836 = vxpose.xlu0.c.b16.cont [6/8] 0, 128
        %1837 = vxpose.xlu0.c.b16.cont [7/8] 0, 128
        %1838 = vxpose.xlu0.c.b16.end [8/8] 0, 128
        %v1839 = vpop.trf.xlu0
        %v1840 = vpop.trf.xlu0
        %v1841 = vpop.trf.xlu0
        %v1842 = vpop.trf.xlu0
        %v1843 = vpop.trf.xlu0
        %v1844 = vpop.trf.xlu0
        %v1845 = vpop.trf.xlu0
        %v1846 = vpop.trf.xlu0
        %1847 = vxpose.xlu0.c.b16.start [1/8] %v1824, 128
        %1848 = vxpose.xlu0.c.b16.cont [2/8] 0, 128
        %1849 = vxpose.xlu0.c.b16.cont [3/8] 0, 128
        %1850 = vxpose.xlu0.c.b16.cont [4/8] 0, 128
        %1851 = vxpose.xlu0.c.b16.cont [5/8] 0, 128
        %1852 = vxpose.xlu0.c.b16.cont [6/8] 0, 128
        %1853 = vxpose.xlu0.c.b16.cont [7/8] 0, 128
        %1854 = vxpose.xlu0.c.b16.end [8/8] 0, 128
        %v1855 = vpop.trf.xlu0
        %v1856 = vpop.trf.xlu0
        %v1857 = vpop.trf.xlu0
        %v1858 = vpop.trf.xlu0
        %v1859 = vpop.trf.xlu0
        %v1860 = vpop.trf.xlu0
        %v1861 = vpop.trf.xlu0
        %v1862 = vpop.trf.xlu0
        %1863 = vxpose.xlu0.c.b16.start [1/8] %v1825, 128
        %1864 = vxpose.xlu0.c.b16.cont [2/8] 0, 128
        %1865 = vxpose.xlu0.c.b16.cont [3/8] 0, 128
        %1866 = vxpose.xlu0.c.b16.cont [4/8] 0, 128
        %1867 = vxpose.xlu0.c.b16.cont [5/8] 0, 128
        %1868 = vxpose.xlu0.c.b16.cont [6/8] 0, 128
        %1869 = vxpose.xlu0.c.b16.cont [7/8] 0, 128
        %1870 = vxpose.xlu0.c.b16.end [8/8] 0, 128
        %v1871 = vpop.trf.xlu0
        %v1872 = vpop.trf.xlu0
        %v1873 = vpop.trf.xlu0
        %v1874 = vpop.trf.xlu0
        %v1875 = vpop.trf.xlu0
        %v1876 = vpop.trf.xlu0
        %v1877 = vpop.trf.xlu0
        %v1878 = vpop.trf.xlu0
        %1879 = vxpose.xlu0.c.b16.start [1/8] %v1826, 128
        %1880 = vxpose.xlu0.c.b16.cont [2/8] 0, 128
        %1881 = vxpose.xlu0.c.b16.cont [3/8] 0, 128
        %1882 = vxpose.xlu0.c.b16.cont [4/8] 0, 128
        %1883 = vxpose.xlu0.c.b16.cont [5/8] 0, 128
        %1884 = vxpose.xlu0.c.b16.cont [6/8] 0, 128
        %1885 = vxpose.xlu0.c.b16.cont [7/8] 0, 128
        %1886 = vxpose.xlu0.c.b16.end [8/8] 0, 128
        %v1887 = vpop.trf.xlu0
        %v1888 = vpop.trf.xlu0
        %v1889 = vpop.trf.xlu0
        %v1890 = vpop.trf.xlu0
        %v1891 = vpop.trf.xlu0
        %v1892 = vpop.trf.xlu0
        %v1893 = vpop.trf.xlu0
        %v1894 = vpop.trf.xlu0
        %1895 = vxpose.xlu0.c.b16.start [1/8] %v1827, 128
        %1896 = vxpose.xlu0.c.b16.cont [2/8] 0, 128
        %1897 = vxpose.xlu0.c.b16.cont [3/8] 0, 128
        %1898 = vxpose.xlu0.c.b16.cont [4/8] 0, 128
        %1899 = vxpose.xlu0.c.b16.cont [5/8] 0, 128
        %1900 = vxpose.xlu0.c.b16.cont [6/8] 0, 128
        %1901 = vxpose.xlu0.c.b16.cont [7/8] 0, 128
        %1902 = vxpose.xlu0.c.b16.end [8/8] 0, 128
        %v1903 = vpop.trf.xlu0
        %v1904 = vpop.trf.xlu0
        %v1905 = vpop.trf.xlu0
        %v1906 = vpop.trf.xlu0
        %v1907 = vpop.trf.xlu0
        %v1908 = vpop.trf.xlu0
        %v1909 = vpop.trf.xlu0
        %v1910 = vpop.trf.xlu0
        %1911 = vxpose.xlu0.c.b16.start [1/8] %v1828, 128
        %1912 = vxpose.xlu0.c.b16.cont [2/8] 0, 128
        %1913 = vxpose.xlu0.c.b16.cont [3/8] 0, 128
        %1914 = vxpose.xlu0.c.b16.cont [4/8] 0, 128
        %1915 = vxpose.xlu0.c.b16.cont [5/8] 0, 128
        %1916 = vxpose.xlu0.c.b16.cont [6/8] 0, 128
        %1917 = vxpose.xlu0.c.b16.cont [7/8] 0, 128
        %1918 = vxpose.xlu0.c.b16.end [8/8] 0, 128
        %v1919 = vpop.trf.xlu0
        %v1920 = vpop.trf.xlu0
        %v1921 = vpop.trf.xlu0
        %v1922 = vpop.trf.xlu0
        %v1923 = vpop.trf.xlu0
        %v1924 = vpop.trf.xlu0
        %v1925 = vpop.trf.xlu0
        %v1926 = vpop.trf.xlu0
        %1927 = vxpose.xlu0.c.b16.start [1/8] %v1829, 128
        %1928 = vxpose.xlu0.c.b16.cont [2/8] 0, 128
        %1929 = vxpose.xlu0.c.b16.cont [3/8] 0, 128
        %1930 = vxpose.xlu0.c.b16.cont [4/8] 0, 128
        %1931 = vxpose.xlu0.c.b16.cont [5/8] 0, 128
        %1932 = vxpose.xlu0.c.b16.cont [6/8] 0, 128
        %1933 = vxpose.xlu0.c.b16.cont [7/8] 0, 128
        %1934 = vxpose.xlu0.c.b16.end [8/8] 0, 128
        %v1935 = vpop.trf.xlu0
        %v1936 = vpop.trf.xlu0
        %v1937 = vpop.trf.xlu0
        %v1938 = vpop.trf.xlu0
        %v1939 = vpop.trf.xlu0
        %v1940 = vpop.trf.xlu0
        %v1941 = vpop.trf.xlu0
        %v1942 = vpop.trf.xlu0
        %1943 = vxpose.xlu0.c.b16.start [1/8] %v1830, 128
        %1944 = vxpose.xlu0.c.b16.cont [2/8] 0, 128
        %1945 = vxpose.xlu0.c.b16.cont [3/8] 0, 128
        %1946 = vxpose.xlu0.c.b16.cont [4/8] 0, 128
        %1947 = vxpose.xlu0.c.b16.cont [5/8] 0, 128
        %1948 = vxpose.xlu0.c.b16.cont [6/8] 0, 128
        %1949 = vxpose.xlu0.c.b16.cont [7/8] 0, 128
        %1950 = vxpose.xlu0.c.b16.end [8/8] 0, 128
        %v1951 = vpop.trf.xlu0
        %v1952 = vpop.trf.xlu0
        %v1953 = vpop.trf.xlu0
        %v1954 = vpop.trf.xlu0
        %v1955 = vpop.trf.xlu0
        %v1956 = vpop.trf.xlu0
        %v1957 = vpop.trf.xlu0
        %v1958 = vpop.trf.xlu0
        %v1959 = vcombine.low %v1839, %v1903
        %v1961 = vunpack.c.l.s4 1983009808
        %v1962 = vunpack.c.0.s8 %v1961
        %v1963 = vlaneseq
        %v1964 = vshrl.u32 %v1963, 7
        %v1965 = vsub.s32 %v1962, %v1964
        %v1966 = vrot.slane %v1959, %v1965
        %v1967 = vcombine.low %v1871, %v1935
        %v1969 = vunpack.c.l.s4 1983009808
        %v1970 = vunpack.c.0.s8 %v1969
        %v1971 = vlaneseq
        %v1972 = vshrl.u32 %v1971, 7
        %v1973 = vsub.s32 %v1970, %v1972
        %v1974 = vrot.slane %v1967, %v1973
        %v1975 = vcombine.low %v1966, %v1974
        %v1976 = vcombine.high %v1966, %v1974
        %v1978 = vunpack.c.l.s4 1934713408
        %v1979 = vunpack.c.0.s8 %v1978
        %v1980 = vlaneseq
        %v1981 = vshrl.u32 %v1980, 7
        %v1982 = vsub.s32 %v1979, %v1981
        %v1983 = vrot.slane %v1975, %v1982
        %v1985 = vunpack.c.l.s4 1934713408
        %v1986 = vunpack.c.0.s8 %v1985
        %v1987 = vlaneseq
        %v1988 = vshrl.u32 %v1987, 7
        %v1989 = vsub.s32 %v1986, %v1988
        %v1990 = vrot.slane %v1976, %v1989
        %v1991 = vcombine.high %v1983, 0
        %v1992 = vcombine.high %v1990, 0
        %v1993 = vcombine.low %v1855, %v1919
        %v1995 = vunpack.c.l.s4 1983009808
        %v1996 = vunpack.c.0.s8 %v1995
        %v1997 = vlaneseq
        %v1998 = vshrl.u32 %v1997, 7
        %v1999 = vsub.s32 %v1996, %v1998
        %v2000 = vrot.slane %v1993, %v1999
        %v2001 = vcombine.low %v1887, %v1951
        %v2003 = vunpack.c.l.s4 1983009808
        %v2004 = vunpack.c.0.s8 %v2003
        %v2005 = vlaneseq
        %v2006 = vshrl.u32 %v2005, 7
        %v2007 = vsub.s32 %v2004, %v2006
        %v2008 = vrot.slane %v2001, %v2007
        %v2009 = vcombine.low %v2000, %v2008
        %v2010 = vcombine.high %v2000, %v2008
        %v2012 = vunpack.c.l.s4 1934713408
        %v2013 = vunpack.c.0.s8 %v2012
        %v2014 = vlaneseq
        %v2015 = vshrl.u32 %v2014, 7
        %v2016 = vsub.s32 %v2013, %v2015
        %v2017 = vrot.slane %v2009, %v2016
        %v2019 = vunpack.c.l.s4 1934713408
        %v2020 = vunpack.c.0.s8 %v2019
        %v2021 = vlaneseq
        %v2022 = vshrl.u32 %v2021, 7
        %v2023 = vsub.s32 %v2020, %v2022
        %v2024 = vrot.slane %v2010, %v2023
        %v2025 = vcombine.high %v2017, 0
        %v2026 = vcombine.high %v2024, 0
        %v2029 = vpack.i.b16 %v2017, %v1983
        %v2031 = vshrl.u32 %v1983, 16
        %v2032 = vshrl.u32 %v2017, 16
        %v2033 = vpack.i.b16 %v2032, %v2031
        %v2037 = vpack.i.b16 %v2025, %v1991
        %v2039 = vshrl.u32 %v1991, 16
        %v2040 = vshrl.u32 %v2025, 16
        %v2041 = vpack.i.b16 %v2040, %v2039
        %v2045 = vpack.i.b16 %v2024, %v1990
        %v2047 = vshrl.u32 %v1990, 16
        %v2048 = vshrl.u32 %v2024, 16
        %v2049 = vpack.i.b16 %v2048, %v2047
        %v2053 = vpack.i.b16 %v2026, %v1992
        %v2055 = vshrl.u32 %v1992, 16
        %v2056 = vshrl.u32 %v2026, 16
        %v2057 = vpack.i.b16 %v2056, %v2055
        %2059 = vxpose.xlu0.c.b16.start [1/8] %v2029, 128
        %2060 = vxpose.xlu0.c.b16.cont [2/8] 0, 128
        %2061 = vxpose.xlu0.c.b16.cont [3/8] 0, 128
        %2062 = vxpose.xlu0.c.b16.cont [4/8] 0, 128
        %2063 = vxpose.xlu0.c.b16.cont [5/8] 0, 128
        %2064 = vxpose.xlu0.c.b16.cont [6/8] 0, 128
        %2065 = vxpose.xlu0.c.b16.cont [7/8] 0, 128
        %2066 = vxpose.xlu0.c.b16.end [8/8] 0, 128
        %v2067 = vpop.trf.xlu0
        %v2068 = vpop.trf.xlu0
        %v2069 = vpop.trf.xlu0
        %v2070 = vpop.trf.xlu0
        %v2071 = vpop.trf.xlu0
        %v2072 = vpop.trf.xlu0
        %v2073 = vpop.trf.xlu0
        %v2074 = vpop.trf.xlu0
        %2075 = vxpose.xlu0.c.b16.start [1/8] %v2033, 128
        %2076 = vxpose.xlu0.c.b16.cont [2/8] 0, 128
        %2077 = vxpose.xlu0.c.b16.cont [3/8] 0, 128
        %2078 = vxpose.xlu0.c.b16.cont [4/8] 0, 128
        %2079 = vxpose.xlu0.c.b16.cont [5/8] 0, 128
        %2080 = vxpose.xlu0.c.b16.cont [6/8] 0, 128
        %2081 = vxpose.xlu0.c.b16.cont [7/8] 0, 128
        %2082 = vxpose.xlu0.c.b16.end [8/8] 0, 128
        %v2083 = vpop.trf.xlu0
        %v2084 = vpop.trf.xlu0
        %v2085 = vpop.trf.xlu0
        %v2086 = vpop.trf.xlu0
        %v2087 = vpop.trf.xlu0
        %v2088 = vpop.trf.xlu0
        %v2089 = vpop.trf.xlu0
        %v2090 = vpop.trf.xlu0
        %2091 = vxpose.xlu0.c.b16.start [1/8] %v2037, 128
        %2092 = vxpose.xlu0.c.b16.cont [2/8] 0, 128
        %2093 = vxpose.xlu0.c.b16.cont [3/8] 0, 128
        %2094 = vxpose.xlu0.c.b16.cont [4/8] 0, 128
        %2095 = vxpose.xlu0.c.b16.cont [5/8] 0, 128
        %2096 = vxpose.xlu0.c.b16.cont [6/8] 0, 128
        %2097 = vxpose.xlu0.c.b16.cont [7/8] 0, 128
        %2098 = vxpose.xlu0.c.b16.end [8/8] 0, 128
        %v2099 = vpop.trf.xlu0
        %v2100 = vpop.trf.xlu0
        %v2101 = vpop.trf.xlu0
        %v2102 = vpop.trf.xlu0
        %v2103 = vpop.trf.xlu0
        %v2104 = vpop.trf.xlu0
        %v2105 = vpop.trf.xlu0
        %v2106 = vpop.trf.xlu0
        %2107 = vxpose.xlu0.c.b16.start [1/8] %v2041, 128
        %2108 = vxpose.xlu0.c.b16.cont [2/8] 0, 128
        %2109 = vxpose.xlu0.c.b16.cont [3/8] 0, 128
        %2110 = vxpose.xlu0.c.b16.cont [4/8] 0, 128
        %2111 = vxpose.xlu0.c.b16.cont [5/8] 0, 128
        %2112 = vxpose.xlu0.c.b16.cont [6/8] 0, 128
        %2113 = vxpose.xlu0.c.b16.cont [7/8] 0, 128
        %2114 = vxpose.xlu0.c.b16.end [8/8] 0, 128
        %v2115 = vpop.trf.xlu0
        %v2116 = vpop.trf.xlu0
        %v2117 = vpop.trf.xlu0
        %v2118 = vpop.trf.xlu0
        %v2119 = vpop.trf.xlu0
        %v2120 = vpop.trf.xlu0
        %v2121 = vpop.trf.xlu0
        %v2122 = vpop.trf.xlu0
        %2123 = vxpose.xlu0.c.b16.start [1/8] %v2045, 128
        %2124 = vxpose.xlu0.c.b16.cont [2/8] 0, 128
        %2125 = vxpose.xlu0.c.b16.cont [3/8] 0, 128
        %2126 = vxpose.xlu0.c.b16.cont [4/8] 0, 128
        %2127 = vxpose.xlu0.c.b16.cont [5/8] 0, 128
        %2128 = vxpose.xlu0.c.b16.cont [6/8] 0, 128
        %2129 = vxpose.xlu0.c.b16.cont [7/8] 0, 128
        %2130 = vxpose.xlu0.c.b16.end [8/8] 0, 128
        %v2131 = vpop.trf.xlu0
        %v2132 = vpop.trf.xlu0
        %v2133 = vpop.trf.xlu0
        %v2134 = vpop.trf.xlu0
        %v2135 = vpop.trf.xlu0
        %v2136 = vpop.trf.xlu0
        %v2137 = vpop.trf.xlu0
        %v2138 = vpop.trf.xlu0
        %2139 = vxpose.xlu0.c.b16.start [1/8] %v2049, 128
        %2140 = vxpose.xlu0.c.b16.cont [2/8] 0, 128
        %2141 = vxpose.xlu0.c.b16.cont [3/8] 0, 128
        %2142 = vxpose.xlu0.c.b16.cont [4/8] 0, 128
        %2143 = vxpose.xlu0.c.b16.cont [5/8] 0, 128
        %2144 = vxpose.xlu0.c.b16.cont [6/8] 0, 128
        %2145 = vxpose.xlu0.c.b16.cont [7/8] 0, 128
        %2146 = vxpose.xlu0.c.b16.end [8/8] 0, 128
        %v2147 = vpop.trf.xlu0
        %v2148 = vpop.trf.xlu0
        %v2149 = vpop.trf.xlu0
        %v2150 = vpop.trf.xlu0
        %v2151 = vpop.trf.xlu0
        %v2152 = vpop.trf.xlu0
        %v2153 = vpop.trf.xlu0
        %v2154 = vpop.trf.xlu0
        %2155 = vxpose.xlu0.c.b16.start [1/8] %v2053, 128
        %2156 = vxpose.xlu0.c.b16.cont [2/8] 0, 128
        %2157 = vxpose.xlu0.c.b16.cont [3/8] 0, 128
        %2158 = vxpose.xlu0.c.b16.cont [4/8] 0, 128
        %2159 = vxpose.xlu0.c.b16.cont [5/8] 0, 128
        %2160 = vxpose.xlu0.c.b16.cont [6/8] 0, 128
        %2161 = vxpose.xlu0.c.b16.cont [7/8] 0, 128
        %2162 = vxpose.xlu0.c.b16.end [8/8] 0, 128
        %v2163 = vpop.trf.xlu0
        %v2164 = vpop.trf.xlu0
        %v2165 = vpop.trf.xlu0
        %v2166 = vpop.trf.xlu0
        %v2167 = vpop.trf.xlu0
        %v2168 = vpop.trf.xlu0
        %v2169 = vpop.trf.xlu0
        %v2170 = vpop.trf.xlu0
        %2171 = vxpose.xlu0.c.b16.start [1/8] %v2057, 128
        %2172 = vxpose.xlu0.c.b16.cont [2/8] 0, 128
        %2173 = vxpose.xlu0.c.b16.cont [3/8] 0, 128
        %2174 = vxpose.xlu0.c.b16.cont [4/8] 0, 128
        %2175 = vxpose.xlu0.c.b16.cont [5/8] 0, 128
        %2176 = vxpose.xlu0.c.b16.cont [6/8] 0, 128
        %2177 = vxpose.xlu0.c.b16.cont [7/8] 0, 128
        %2178 = vxpose.xlu0.c.b16.end [8/8] 0, 128
        %v2179 = vpop.trf.xlu0
        %v2180 = vpop.trf.xlu0
        %v2181 = vpop.trf.xlu0
        %v2182 = vpop.trf.xlu0
        %v2183 = vpop.trf.xlu0
        %v2184 = vpop.trf.xlu0
        %v2185 = vpop.trf.xlu0
        %v2186 = vpop.trf.xlu0
        %v2187 = vcombine.low %v2067, %v2131
        %v2189 = vunpack.c.l.s4 1983009808
        %v2190 = vunpack.c.0.s8 %v2189
        %v2191 = vlaneseq
        %v2192 = vshrl.u32 %v2191, 7
        %v2193 = vsub.s32 %v2190, %v2192
        %v2194 = vrot.slane %v2187, %v2193
        %v2195 = vcombine.low %v2099, %v2163
        %v2197 = vunpack.c.l.s4 1983009808
        %v2198 = vunpack.c.0.s8 %v2197
        %v2199 = vlaneseq
        %v2200 = vshrl.u32 %v2199, 7
        %v2201 = vsub.s32 %v2198, %v2200
        %v2202 = vrot.slane %v2195, %v2201
        %v2203 = vcombine.low %v2194, %v2202
        %v2205 = vunpack.c.l.s4 1934713408
        %v2206 = vunpack.c.0.s8 %v2205
        %v2207 = vlaneseq
        %v2208 = vshrl.u32 %v2207, 7
        %v2209 = vsub.s32 %v2206, %v2208
        %v2210 = vrot.slane %v2203, %v2209
        %v2211 = vcombine.high %v2210, 0
        %v2212 = vcombine.low %v2083, %v2147
        %v2214 = vunpack.c.l.s4 1983009808
        %v2215 = vunpack.c.0.s8 %v2214
        %v2216 = vlaneseq
        %v2217 = vshrl.u32 %v2216, 7
        %v2218 = vsub.s32 %v2215, %v2217
        %v2219 = vrot.slane %v2212, %v2218
        %v2220 = vcombine.low %v2115, %v2179
        %v2222 = vunpack.c.l.s4 1983009808
        %v2223 = vunpack.c.0.s8 %v2222
        %v2224 = vlaneseq
        %v2225 = vshrl.u32 %v2224, 7
        %v2226 = vsub.s32 %v2223, %v2225
        %v2227 = vrot.slane %v2220, %v2226
        %v2228 = vcombine.low %v2219, %v2227
        %v2230 = vunpack.c.l.s4 1934713408
        %v2231 = vunpack.c.0.s8 %v2230
        %v2232 = vlaneseq
        %v2233 = vshrl.u32 %v2232, 7
        %v2234 = vsub.s32 %v2231, %v2233
        %v2235 = vrot.slane %v2228, %v2234
        %v2236 = vcombine.high %v2235, 0
        %v2239 = vpack.i.b16 %v2235, %v2210
        %v2240 = vshrl.u32 %v2210, 16
        %v2241 = vshrl.u32 %v2235, 16
        %v2242 = vpack.i.b16 %v2241, %v2240
        %v2245 = vpack.i.b16 %v2236, %v2211
        %v2246 = vshrl.u32 %v2211, 16
        %v2247 = vshrl.u32 %v2236, 16
        %v2248 = vpack.i.b16 %v2247, %v2246
        %v2250 = vsel %vm1574, %v2239, 0
        %v2253 = vsel %vm1574, %v1819, 0
        %2255 = vmatprep.subr.bf16.mxu0 0
        %2256 = vmatpush1.bf16.xpose.msra.mxu0 %v2253
        %2257 = vmatprep.subr.bf16.mxu0 0
        %2258 = vmatpush1.bf16.xpose.msra.mxu0 0
        %2259 = vmatprep.subr.bf16.mxu0 0
        %2260 = vmatpush1.bf16.xpose.msra.mxu0 0
        %2261 = vmatprep.subr.bf16.mxu0 0
        %2262 = vmatpush1.bf16.xpose.msra.mxu0 0
        %2263 = vmatprep.subr.bf16.mxu0 0
        %2264 = vmatpush1.bf16.xpose.msra.mxu0 0
        %2265 = vmatprep.subr.bf16.mxu0 0
        %2266 = vmatpush1.bf16.xpose.msra.mxu0 0
        %2267 = vmatprep.subr.bf16.mxu0 0
        %2268 = vmatpush1.bf16.xpose.msra.mxu0 0
        %2269 = vmatprep.subr.bf16.mxu0 0
        %2270 = vmatpush1.bf16.xpose.msra.mxu0 0
        %2271 = vmatprep.subr.bf16.mxu0 0
        %2272 = vmatpush1.bf16.xpose.msra.mxu0 0
        %2273 = vmatprep.subr.bf16.mxu0 0
        %2274 = vmatpush1.bf16.xpose.msra.mxu0 0
        %2275 = vmatprep.subr.bf16.mxu0 0
        %2276 = vmatpush1.bf16.xpose.msra.mxu0 0
        %2277 = vmatprep.subr.bf16.mxu0 0
        %2278 = vmatpush1.bf16.xpose.msra.mxu0 0
        %2279 = vmatprep.subr.bf16.mxu0 0
        %2280 = vmatpush1.bf16.xpose.msra.mxu0 0
        %2281 = vmatprep.subr.bf16.mxu0 0
        %2282 = vmatpush1.bf16.xpose.msra.mxu0 0
        %2283 = vmatprep.subr.bf16.mxu0 0
        %2284 = vmatpush1.bf16.xpose.msra.mxu0 0
        %2285 = vmatprep.subr.bf16.mxu0 0
        %2286 = vmatpush1.bf16.xpose.msra.mxu0 0
        %2287 = vmatprep.mubr.bf16.mxu0 0
        %2288 = vmatmul.mubr.bf16.gmra.mrb[0].mxu0 %v2250
        %v2289 = vpop.f32.mrb[0].mxu0
        %v2290 = vadd.f32 0.0, %v2289
        %v2291 = vpop.f32.mrb[0].mxu0
        %v2292 = vpop.f32.mrb[0].mxu0
        %v2293 = vpop.f32.mrb[0].mxu0
        %2294 = vdwg.mxu0
        %v2296 = vsel %vm1574, %v2242, 0
        %v2299 = vsel %vm1574, %v1820, 0
        %2301 = vmatprep.subr.bf16.mxu0 0
        %2302 = vmatpush1.bf16.xpose.msra.mxu0 %v2299
        %2303 = vmatprep.subr.bf16.mxu0 0
        %2304 = vmatpush1.bf16.xpose.msra.mxu0 0
        %2305 = vmatprep.subr.bf16.mxu0 0
        %2306 = vmatpush1.bf16.xpose.msra.mxu0 0
        %2307 = vmatprep.subr.bf16.mxu0 0
        %2308 = vmatpush1.bf16.xpose.msra.mxu0 0
        %2309 = vmatprep.subr.bf16.mxu0 0
        %2310 = vmatpush1.bf16.xpose.msra.mxu0 0
        %2311 = vmatprep.subr.bf16.mxu0 0
        %2312 = vmatpush1.bf16.xpose.msra.mxu0 0
        %2313 = vmatprep.subr.bf16.mxu0 0
        %2314 = vmatpush1.bf16.xpose.msra.mxu0 0
        %2315 = vmatprep.subr.bf16.mxu0 0
        %2316 = vmatpush1.bf16.xpose.msra.mxu0 0
        %2317 = vmatprep.subr.bf16.mxu0 0
        %2318 = vmatpush1.bf16.xpose.msra.mxu0 0
        %2319 = vmatprep.subr.bf16.mxu0 0
        %2320 = vmatpush1.bf16.xpose.msra.mxu0 0
        %2321 = vmatprep.subr.bf16.mxu0 0
        %2322 = vmatpush1.bf16.xpose.msra.mxu0 0
        %2323 = vmatprep.subr.bf16.mxu0 0
        %2324 = vmatpush1.bf16.xpose.msra.mxu0 0
        %2325 = vmatprep.subr.bf16.mxu0 0
        %2326 = vmatpush1.bf16.xpose.msra.mxu0 0
        %2327 = vmatprep.subr.bf16.mxu0 0
        %2328 = vmatpush1.bf16.xpose.msra.mxu0 0
        %2329 = vmatprep.subr.bf16.mxu0 0
        %2330 = vmatpush1.bf16.xpose.msra.mxu0 0
        %2331 = vmatprep.subr.bf16.mxu0 0
        %2332 = vmatpush1.bf16.xpose.msra.mxu0 0
        %2333 = vmatprep.mubr.bf16.mxu0 0
        %2334 = vmatmul.mubr.bf16.gmra.mrb[0].mxu0 %v2296
        %v2335 = vpop.f32.mrb[0].mxu0
        %v2336 = vadd.f32 0.0, %v2335
        %v2337 = vpop.f32.mrb[0].mxu0
        %v2338 = vpop.f32.mrb[0].mxu0
        %v2339 = vpop.f32.mrb[0].mxu0
        %2340 = vdwg.mxu0
        %v2342 = vsel %vm1574, %v2245, 0
        %v2345 = vsel %vm1574, %v1821, 0
        %2347 = vmatprep.subr.bf16.mxu0 0
        %2348 = vmatpush1.bf16.xpose.msra.mxu0 %v2345
        %2349 = vmatprep.subr.bf16.mxu0 0
        %2350 = vmatpush1.bf16.xpose.msra.mxu0 0
        %2351 = vmatprep.subr.bf16.mxu0 0
        %2352 = vmatpush1.bf16.xpose.msra.mxu0 0
        %2353 = vmatprep.subr.bf16.mxu0 0
        %2354 = vmatpush1.bf16.xpose.msra.mxu0 0
        %2355 = vmatprep.subr.bf16.mxu0 0
        %2356 = vmatpush1.bf16.xpose.msra.mxu0 0
        %2357 = vmatprep.subr.bf16.mxu0 0
        %2358 = vmatpush1.bf16.xpose.msra.mxu0 0
        %2359 = vmatprep.subr.bf16.mxu0 0
        %2360 = vmatpush1.bf16.xpose.msra.mxu0 0
        %2361 = vmatprep.subr.bf16.mxu0 0
        %2362 = vmatpush1.bf16.xpose.msra.mxu0 0
        %2363 = vmatprep.subr.bf16.mxu0 0
        %2364 = vmatpush1.bf16.xpose.msra.mxu0 0
        %2365 = vmatprep.subr.bf16.mxu0 0
        %2366 = vmatpush1.bf16.xpose.msra.mxu0 0
        %2367 = vmatprep.subr.bf16.mxu0 0
        %2368 = vmatpush1.bf16.xpose.msra.mxu0 0
        %2369 = vmatprep.subr.bf16.mxu0 0
        %2370 = vmatpush1.bf16.xpose.msra.mxu0 0
        %2371 = vmatprep.subr.bf16.mxu0 0
        %2372 = vmatpush1.bf16.xpose.msra.mxu0 0
        %2373 = vmatprep.subr.bf16.mxu0 0
        %2374 = vmatpush1.bf16.xpose.msra.mxu0 0
        %2375 = vmatprep.subr.bf16.mxu0 0
        %2376 = vmatpush1.bf16.xpose.msra.mxu0 0
        %2377 = vmatprep.subr.bf16.mxu0 0
        %2378 = vmatpush1.bf16.xpose.msra.mxu0 0
        %2379 = vmatprep.mubr.bf16.mxu0 0
        %2380 = vmatmul.mubr.bf16.gmra.mrb[0].mxu0 %v2342
        %v2381 = vpop.f32.mrb[0].mxu0
        %v2382 = vadd.f32 0.0, %v2381
        %v2383 = vpop.f32.mrb[0].mxu0
        %v2384 = vpop.f32.mrb[0].mxu0
        %v2385 = vpop.f32.mrb[0].mxu0
        %2386 = vdwg.mxu0
        %v2388 = vsel %vm1574, %v2248, 0
        %v2391 = vsel %vm1574, %v1822, 0
        %2393 = vmatprep.subr.bf16.mxu0 0
        %2394 = vmatpush1.bf16.xpose.msra.mxu0 %v2391
        %2395 = vmatprep.subr.bf16.mxu0 0
        %2396 = vmatpush1.bf16.xpose.msra.mxu0 0
        %2397 = vmatprep.subr.bf16.mxu0 0
        %2398 = vmatpush1.bf16.xpose.msra.mxu0 0
        %2399 = vmatprep.subr.bf16.mxu0 0
        %2400 = vmatpush1.bf16.xpose.msra.mxu0 0
        %2401 = vmatprep.subr.bf16.mxu0 0
        %2402 = vmatpush1.bf16.xpose.msra.mxu0 0
        %2403 = vmatprep.subr.bf16.mxu0 0
        %2404 = vmatpush1.bf16.xpose.msra.mxu0 0
        %2405 = vmatprep.subr.bf16.mxu0 0
        %2406 = vmatpush1.bf16.xpose.msra.mxu0 0
        %2407 = vmatprep.subr.bf16.mxu0 0
        %2408 = vmatpush1.bf16.xpose.msra.mxu0 0
        %2409 = vmatprep.subr.bf16.mxu0 0
        %2410 = vmatpush1.bf16.xpose.msra.mxu0 0
        %2411 = vmatprep.subr.bf16.mxu0 0
        %2412 = vmatpush1.bf16.xpose.msra.mxu0 0
        %2413 = vmatprep.subr.bf16.mxu0 0
        %2414 = vmatpush1.bf16.xpose.msra.mxu0 0
        %2415 = vmatprep.subr.bf16.mxu0 0
        %2416 = vmatpush1.bf16.xpose.msra.mxu0 0
        %2417 = vmatprep.subr.bf16.mxu0 0
        %2418 = vmatpush1.bf16.xpose.msra.mxu0 0
        %2419 = vmatprep.subr.bf16.mxu0 0
        %2420 = vmatpush1.bf16.xpose.msra.mxu0 0
        %2421 = vmatprep.subr.bf16.mxu0 0
        %2422 = vmatpush1.bf16.xpose.msra.mxu0 0
        %2423 = vmatprep.subr.bf16.mxu0 0
        %2424 = vmatpush1.bf16.xpose.msra.mxu0 0
        %2425 = vmatprep.mubr.bf16.mxu0 0
        %2426 = vmatmul.mubr.bf16.gmra.mrb[0].mxu0 %v2388
        %v2427 = vpop.f32.mrb[0].mxu0
        %v2428 = vadd.f32 0.0, %v2427
        %v2429 = vpop.f32.mrb[0].mxu0
        %v2430 = vpop.f32.mrb[0].mxu0
        %v2431 = vpop.f32.mrb[0].mxu0
        %2432 = vdwg.mxu0
        %2433 = vxpose.xlu0.b32.start [1/16] %v2290, 128
        %2434 = vxpose.xlu0.b32.cont [2/16] 0.0, 128
        %2435 = vxpose.xlu0.b32.cont [3/16] 0.0, 128
        %2436 = vxpose.xlu0.b32.cont [4/16] 0.0, 128
        %2437 = vxpose.xlu0.b32.cont [5/16] 0.0, 128
        %2438 = vxpose.xlu0.b32.cont [6/16] 0.0, 128
        %2439 = vxpose.xlu0.b32.cont [7/16] 0.0, 128
        %2440 = vxpose.xlu0.b32.cont [8/16] 0.0, 128
        %2441 = vxpose.xlu0.b32.cont [9/16] 0.0, 128
        %2442 = vxpose.xlu0.b32.cont [10/16] 0.0, 128
        %2443 = vxpose.xlu0.b32.cont [11/16] 0.0, 128
        %2444 = vxpose.xlu0.b32.cont [12/16] 0.0, 128
        %2445 = vxpose.xlu0.b32.cont [13/16] 0.0, 128
        %2446 = vxpose.xlu0.b32.cont [14/16] 0.0, 128
        %2447 = vxpose.xlu0.b32.cont [15/16] 0.0, 128
        %2448 = vxpose.xlu0.b32.end [16/16] 0.0, 128
        %v2449 = vpop.trf.xlu0
        %v2450 = vpop.trf.xlu0
        %v2451 = vpop.trf.xlu0
        %v2452 = vpop.trf.xlu0
        %v2453 = vpop.trf.xlu0
        %v2454 = vpop.trf.xlu0
        %v2455 = vpop.trf.xlu0
        %v2456 = vpop.trf.xlu0
        %v2457 = vpop.trf.xlu0
        %v2458 = vpop.trf.xlu0
        %v2459 = vpop.trf.xlu0
        %v2460 = vpop.trf.xlu0
        %v2461 = vpop.trf.xlu0
        %v2462 = vpop.trf.xlu0
        %v2463 = vpop.trf.xlu0
        %v2464 = vpop.trf.xlu0
        %2465 = vxpose.xlu0.b32.start [1/16] %v2336, 128
        %2466 = vxpose.xlu0.b32.cont [2/16] 0.0, 128
        %2467 = vxpose.xlu0.b32.cont [3/16] 0.0, 128
        %2468 = vxpose.xlu0.b32.cont [4/16] 0.0, 128
        %2469 = vxpose.xlu0.b32.cont [5/16] 0.0, 128
        %2470 = vxpose.xlu0.b32.cont [6/16] 0.0, 128
        %2471 = vxpose.xlu0.b32.cont [7/16] 0.0, 128
        %2472 = vxpose.xlu0.b32.cont [8/16] 0.0, 128
        %2473 = vxpose.xlu0.b32.cont [9/16] 0.0, 128
        %2474 = vxpose.xlu0.b32.cont [10/16] 0.0, 128
        %2475 = vxpose.xlu0.b32.cont [11/16] 0.0, 128
        %2476 = vxpose.xlu0.b32.cont [12/16] 0.0, 128
        %2477 = vxpose.xlu0.b32.cont [13/16] 0.0, 128
        %2478 = vxpose.xlu0.b32.cont [14/16] 0.0, 128
        %2479 = vxpose.xlu0.b32.cont [15/16] 0.0, 128
        %2480 = vxpose.xlu0.b32.end [16/16] 0.0, 128
        %v2481 = vpop.trf.xlu0
        %v2482 = vpop.trf.xlu0
        %v2483 = vpop.trf.xlu0
        %v2484 = vpop.trf.xlu0
        %v2485 = vpop.trf.xlu0
        %v2486 = vpop.trf.xlu0
        %v2487 = vpop.trf.xlu0
        %v2488 = vpop.trf.xlu0
        %v2489 = vpop.trf.xlu0
        %v2490 = vpop.trf.xlu0
        %v2491 = vpop.trf.xlu0
        %v2492 = vpop.trf.xlu0
        %v2493 = vpop.trf.xlu0
        %v2494 = vpop.trf.xlu0
        %v2495 = vpop.trf.xlu0
        %v2496 = vpop.trf.xlu0
        %2497 = vxpose.xlu0.b32.start [1/16] %v2382, 128
        %2498 = vxpose.xlu0.b32.cont [2/16] 0.0, 128
        %2499 = vxpose.xlu0.b32.cont [3/16] 0.0, 128
        %2500 = vxpose.xlu0.b32.cont [4/16] 0.0, 128
        %2501 = vxpose.xlu0.b32.cont [5/16] 0.0, 128
        %2502 = vxpose.xlu0.b32.cont [6/16] 0.0, 128
        %2503 = vxpose.xlu0.b32.cont [7/16] 0.0, 128
        %2504 = vxpose.xlu0.b32.cont [8/16] 0.0, 128
        %2505 = vxpose.xlu0.b32.cont [9/16] 0.0, 128
        %2506 = vxpose.xlu0.b32.cont [10/16] 0.0, 128
        %2507 = vxpose.xlu0.b32.cont [11/16] 0.0, 128
        %2508 = vxpose.xlu0.b32.cont [12/16] 0.0, 128
        %2509 = vxpose.xlu0.b32.cont [13/16] 0.0, 128
        %2510 = vxpose.xlu0.b32.cont [14/16] 0.0, 128
        %2511 = vxpose.xlu0.b32.cont [15/16] 0.0, 128
        %2512 = vxpose.xlu0.b32.end [16/16] 0.0, 128
        %v2513 = vpop.trf.xlu0
        %v2514 = vpop.trf.xlu0
        %v2515 = vpop.trf.xlu0
        %v2516 = vpop.trf.xlu0
        %v2517 = vpop.trf.xlu0
        %v2518 = vpop.trf.xlu0
        %v2519 = vpop.trf.xlu0
        %v2520 = vpop.trf.xlu0
        %v2521 = vpop.trf.xlu0
        %v2522 = vpop.trf.xlu0
        %v2523 = vpop.trf.xlu0
        %v2524 = vpop.trf.xlu0
        %v2525 = vpop.trf.xlu0
        %v2526 = vpop.trf.xlu0
        %v2527 = vpop.trf.xlu0
        %v2528 = vpop.trf.xlu0
        %2529 = vxpose.xlu0.b32.start [1/16] %v2428, 128
        %2530 = vxpose.xlu0.b32.cont [2/16] 0.0, 128
        %2531 = vxpose.xlu0.b32.cont [3/16] 0.0, 128
        %2532 = vxpose.xlu0.b32.cont [4/16] 0.0, 128
        %2533 = vxpose.xlu0.b32.cont [5/16] 0.0, 128
        %2534 = vxpose.xlu0.b32.cont [6/16] 0.0, 128
        %2535 = vxpose.xlu0.b32.cont [7/16] 0.0, 128
        %2536 = vxpose.xlu0.b32.cont [8/16] 0.0, 128
        %2537 = vxpose.xlu0.b32.cont [9/16] 0.0, 128
        %2538 = vxpose.xlu0.b32.cont [10/16] 0.0, 128
        %2539 = vxpose.xlu0.b32.cont [11/16] 0.0, 128
        %2540 = vxpose.xlu0.b32.cont [12/16] 0.0, 128
        %2541 = vxpose.xlu0.b32.cont [13/16] 0.0, 128
        %2542 = vxpose.xlu0.b32.cont [14/16] 0.0, 128
        %2543 = vxpose.xlu0.b32.cont [15/16] 0.0, 128
        %2544 = vxpose.xlu0.b32.end [16/16] 0.0, 128
        %v2545 = vpop.trf.xlu0
        %v2546 = vpop.trf.xlu0
        %v2547 = vpop.trf.xlu0
        %v2548 = vpop.trf.xlu0
        %v2549 = vpop.trf.xlu0
        %v2550 = vpop.trf.xlu0
        %v2551 = vpop.trf.xlu0
        %v2552 = vpop.trf.xlu0
        %v2553 = vpop.trf.xlu0
        %v2554 = vpop.trf.xlu0
        %v2555 = vpop.trf.xlu0
        %v2556 = vpop.trf.xlu0
        %v2557 = vpop.trf.xlu0
        %v2558 = vpop.trf.xlu0
        %v2559 = vpop.trf.xlu0
        %v2560 = vpop.trf.xlu0
        %v2561 = vcombine.low %v2449, %v2513
        %v2562 = vcombine.high %v2449, %v2513
        %v2564 = vunpack.c.l.s4 1983009808
        %v2565 = vunpack.c.0.s8 %v2564
        %v2566 = vlaneseq
        %v2567 = vshrl.u32 %v2566, 7
        %v2568 = vsub.s32 %v2565, %v2567
        %v2569 = vrot.slane %v2561, %v2568
        %v2571 = vunpack.c.l.s4 1983009808
        %v2572 = vunpack.c.0.s8 %v2571
        %v2573 = vlaneseq
        %v2574 = vshrl.u32 %v2573, 7
        %v2575 = vsub.s32 %v2572, %v2574
        %v2576 = vrot.slane %v2562, %v2575
        %v2577 = vcombine.low %v2481, %v2545
        %v2578 = vcombine.high %v2481, %v2545
        %v2580 = vunpack.c.l.s4 1983009808
        %v2581 = vunpack.c.0.s8 %v2580
        %v2582 = vlaneseq
        %v2583 = vshrl.u32 %v2582, 7
        %v2584 = vsub.s32 %v2581, %v2583
        %v2585 = vrot.slane %v2577, %v2584
        %v2587 = vunpack.c.l.s4 1983009808
        %v2588 = vunpack.c.0.s8 %v2587
        %v2589 = vlaneseq
        %v2590 = vshrl.u32 %v2589, 7
        %v2591 = vsub.s32 %v2588, %v2590
        %v2592 = vrot.slane %v2578, %v2591
        %v2593 = vcombine.low %v2569, %v2585
        %v2594 = vcombine.high %v2569, %v2585
        %v2596 = vunpack.c.l.s4 1934713408
        %v2597 = vunpack.c.0.s8 %v2596
        %v2598 = vlaneseq
        %v2599 = vshrl.u32 %v2598, 7
        %v2600 = vsub.s32 %v2597, %v2599
        %v2601 = vrot.slane %v2593, %v2600
        %v2603 = vunpack.c.l.s4 1934713408
        %v2604 = vunpack.c.0.s8 %v2603
        %v2605 = vlaneseq
        %v2606 = vshrl.u32 %v2605, 7
        %v2607 = vsub.s32 %v2604, %v2606
        %v2608 = vrot.slane %v2594, %v2607
        %v2609 = vcombine.low %v2576, %v2592
        %v2610 = vcombine.high %v2576, %v2592
        %v2612 = vunpack.c.l.s4 1934713408
        %v2613 = vunpack.c.0.s8 %v2612
        %v2614 = vlaneseq
        %v2615 = vshrl.u32 %v2614, 7
        %v2616 = vsub.s32 %v2613, %v2615
        %v2617 = vrot.slane %v2609, %v2616
        %v2619 = vunpack.c.l.s4 1934713408
        %v2620 = vunpack.c.0.s8 %v2619
        %v2621 = vlaneseq
        %v2622 = vshrl.u32 %v2621, 7
        %v2623 = vsub.s32 %v2620, %v2622
        %v2624 = vrot.slane %v2610, %v2623
        %v2625 = vcombine.high %v2601, 0.0
        %v2626 = vcombine.high %v2608, 0.0
        %v2627 = vcombine.high %v2617, 0.0
        %v2628 = vcombine.high %v2624, 0.0
        %v2629 = vcombine.low %v2601, %v2608
        %v2631 = vunpack.c.l.s4 1983009808
        %v2632 = vunpack.c.0.s8 %v2631
        %v2633 = vlaneseq
        %v2634 = vshrl.u32 %v2633, 7
        %v2635 = vsub.s32 %v2632, %v2634
        %v2636 = vrot.slane %v2629, %v2635
        %v2637 = vcombine.low %v2625, %v2626
        %v2639 = vunpack.c.l.s4 1983009808
        %v2640 = vunpack.c.0.s8 %v2639
        %v2641 = vlaneseq
        %v2642 = vshrl.u32 %v2641, 7
        %v2643 = vsub.s32 %v2640, %v2642
        %v2644 = vrot.slane %v2637, %v2643
        %v2645 = vcombine.low %v2617, %v2624
        %v2647 = vunpack.c.l.s4 1983009808
        %v2648 = vunpack.c.0.s8 %v2647
        %v2649 = vlaneseq
        %v2650 = vshrl.u32 %v2649, 7
        %v2651 = vsub.s32 %v2648, %v2650
        %v2652 = vrot.slane %v2645, %v2651
        %v2653 = vcombine.low %v2627, %v2628
        %v2655 = vunpack.c.l.s4 1983009808
        %v2656 = vunpack.c.0.s8 %v2655
        %v2657 = vlaneseq
        %v2658 = vshrl.u32 %v2657, 7
        %v2659 = vsub.s32 %v2656, %v2658
        %v2660 = vrot.slane %v2653, %v2659
        %v2661 = vcombine.low %v2636, %v2644
        %v2662 = vcombine.high %v2636, %v2644
        %v2664 = vunpack.c.l.s4 1934713408
        %v2665 = vunpack.c.0.s8 %v2664
        %v2666 = vlaneseq
        %v2667 = vshrl.u32 %v2666, 7
        %v2668 = vsub.s32 %v2665, %v2667
        %v2669 = vrot.slane %v2661, %v2668
        %v2671 = vunpack.c.l.s4 1934713408
        %v2672 = vunpack.c.0.s8 %v2671
        %v2673 = vlaneseq
        %v2674 = vshrl.u32 %v2673, 7
        %v2675 = vsub.s32 %v2672, %v2674
        %v2676 = vrot.slane %v2662, %v2675
        %v2677 = vcombine.low %v2652, %v2660
        %v2678 = vcombine.high %v2652, %v2660
        %v2680 = vunpack.c.l.s4 1934713408
        %v2681 = vunpack.c.0.s8 %v2680
        %v2682 = vlaneseq
        %v2683 = vshrl.u32 %v2682, 7
        %v2684 = vsub.s32 %v2681, %v2683
        %v2685 = vrot.slane %v2677, %v2684
        %v2687 = vunpack.c.l.s4 1934713408
        %v2688 = vunpack.c.0.s8 %v2687
        %v2689 = vlaneseq
        %v2690 = vshrl.u32 %v2689, 7
        %v2691 = vsub.s32 %v2688, %v2690
        %v2692 = vrot.slane %v2678, %v2691
        %v2693 = vcombine.low %v2669, %v2685
        %v2694 = vcombine.high %v2669, %v2685
        %v2695 = vcombine.low %v2676, %v2692
        %v2696 = vcombine.high %v2676, %v2692
        %2698 = vrot.lane.b32.xlu0 %v2694, 8
        %v2699 = vpop.permute.xlu0 %2698
        %2702 = vrot.lane.b32.xlu0 %v2695, 16
        %v2703 = vpop.permute.xlu0 %2702
        %2706 = vrot.lane.b32.xlu0 %v2696, 24
        %v2707 = vpop.permute.xlu0 %2706
        %v2709 = vsel %vm1574, %v2693, %v2699
        %vm2710 = vcmask 130048
        %v2711 = vsel %vm2710, %v2709, %v2703
        %vm2712 = vcmask 195584
        %v2713 = vsel %vm2712, %v2711, %v2707
        %v2714 = vpack.c.bf16 %v2713, %v2713
        %v2715 = vld [vmem:[%s709] sm:$0xff]
        %v2716 = vld [vmem:[%s709 + $0x8] sm:$0xff]
        %v2717 = vld [vmem:[%s709 + $0x10] sm:$0xff]
        %v2718 = vld [vmem:[%s709 + $0x18] sm:$0xff]
        %v2719 = vpack.c.bf16 %v2716, %v2715
        %v2720 = vpack.c.bf16 %v2718, %v2717
        %v2721 = vld [vmem:[%s712] sm:$0x1]
        %v2723 = vlaneseq
        %v2724 = vshrl.u32 %v2723, 7
        %v2725 = vsub.s32 0, %v2724
        %v2726 = vrot.slane %v2721, %v2725
        %v2729 = vsel %vm746, %v2714, 0
        %2731 = vmatprep.subr.bf16.mxu0 0
        %2732 = vmatpush1.bf16.msra.mxu0 %v2719
        %2733 = vmatprep.subr.bf16.mxu0 0
        %2734 = vmatpush1.bf16.msra.mxu0 %v2720
        %2735 = vmatprep.subr.bf16.mxu0 0
        %2736 = vmatpush1.bf16.msra.mxu0 0
        %2737 = vmatprep.subr.bf16.mxu0 0
        %2738 = vmatpush1.bf16.msra.mxu0 0
        %2739 = vmatprep.subr.bf16.mxu0 0
        %2740 = vmatpush1.bf16.msra.mxu0 0
        %2741 = vmatprep.subr.bf16.mxu0 0
        %2742 = vmatpush1.bf16.msra.mxu0 0
        %2743 = vmatprep.subr.bf16.mxu0 0
        %2744 = vmatpush1.bf16.msra.mxu0 0
        %2745 = vmatprep.subr.bf16.mxu0 0
        %2746 = vmatpush1.bf16.msra.mxu0 0
        %2747 = vmatprep.subr.bf16.mxu0 0
        %2748 = vmatpush1.bf16.msra.mxu0 0
        %2749 = vmatprep.subr.bf16.mxu0 0
        %2750 = vmatpush1.bf16.msra.mxu0 0
        %2751 = vmatprep.subr.bf16.mxu0 0
        %2752 = vmatpush1.bf16.msra.mxu0 0
        %2753 = vmatprep.subr.bf16.mxu0 0
        %2754 = vmatpush1.bf16.msra.mxu0 0
        %2755 = vmatprep.subr.bf16.mxu0 0
        %2756 = vmatpush1.bf16.msra.mxu0 0
        %2757 = vmatprep.subr.bf16.mxu0 0
        %2758 = vmatpush1.bf16.msra.mxu0 0
        %2759 = vmatprep.subr.bf16.mxu0 0
        %2760 = vmatpush1.bf16.msra.mxu0 0
        %2761 = vmatprep.subr.bf16.mxu0 0
        %2762 = vmatpush1.bf16.msra.mxu0 0
        %2763 = vmatprep.mubr.bf16.mxu0 0
        %2764 = vmatmul.mubr.bf16.gmra.mrb[0].mxu0 %v2729
        %v2765 = vpop.f32.mrb[0].mxu0
        %v2766 = vadd.f32 %v2726, %v2765
        %v2767 = vpop.f32.mrb[0].mxu0
        %v2768 = vpop.f32.mrb[0].mxu0
        %v2769 = vpop.f32.mrb[0].mxu0
        %2770 = vdwg.mxu0
        %v2771 = vadd.f32 %v743, %v2766
        %v2772 = vld [vmem:[%s715] sm:$0x1]
        %v2773 = vld [vmem:[%s718] sm:$0x1]
        %v2774 = vsel %vm746, %v2771, 0.0
        %2775 = vadd.xlane.f32.xlu0 %v2774
        %v2776 = vpop.xlane.xlu0 %2775
        %v2777 = vmul.f32 %v2776, %v750
        %v2778 = vsub.f32 %v2771, %v2777
        %v2779 = vmul.f32 %v2778, %v2778
        %v2780 = vsel %vm746, %v2779, 0.0
        %2781 = vadd.xlane.f32.xlu0 %v2780
        %v2782 = vpop.xlane.xlu0 %2781
        %v2783 = vmul.f32 %v2782, %v757
        %v2784 = vrsqrt.pop %v2783
        %v2785 = vmul.f32 %v2783, %v2784
        %vm2786 = vcmp.eq.f32.partialorder %v2783, inf
        %v2787 = vsel %vm2786, %v2783, %v2785
        %vm2788 = vcmp.eq.f32.partialorder %v2783, 0.0
        %v2789 = vand.u32 %v2783, 2147483648
        %v2790 = vsel %vm2788, %v2789, %v2787
        %v2792 = vlaneseq
        %v2793 = vshrl.u32 %v2792, 7
        %v2794 = vsub.s32 0, %v2793
        %v2795 = vrot.slane %v2772, %v2794
        %v2797 = vmul.f32 %v2795, %v2778
        %v2798 = vadd.f32 %v2790, 1e-05
        %v2799 = vrcp.pop %v2798
        %v2800 = vmul.f32 %v2797, %v2799
        %v2802 = vlaneseq
        %v2803 = vshrl.u32 %v2802, 7
        %v2804 = vsub.s32 0, %v2803
        %v2805 = vrot.slane %v2773, %v2804
        %v2807 = vadd.f32 %v2800, %v2805
        %v2808 = vpack.c.bf16 %v2807, %v2807
        %v2809 = vld [vmem:[%s723] sm:$0xff]
        %v2810 = vld [vmem:[%s723 + $0x8] sm:$0xff]
        %v2811 = vld [vmem:[%s723 + $0x10] sm:$0xff]
        %v2812 = vld [vmem:[%s723 + $0x18] sm:$0xff]
        %v2813 = vpack.c.bf16 %v2810, %v2809
        %v2814 = vpack.c.bf16 %v2812, %v2811
        %v2815 = vld [vmem:[%s726] sm:$0x1]
        %v2817 = vlaneseq
        %v2818 = vshrl.u32 %v2817, 7
        %v2819 = vsub.s32 0, %v2818
        %v2820 = vrot.slane %v2815, %v2819
        %v2823 = vsel %vm746, %v2808, 0
        %2825 = vmatprep.subr.bf16.mxu0 0
        %2826 = vmatpush1.bf16.msra.mxu0 %v2813
        %2827 = vmatprep.subr.bf16.mxu0 0
        %2828 = vmatpush1.bf16.msra.mxu0 %v2814
        %2829 = vmatprep.subr.bf16.mxu0 0
        %2830 = vmatpush1.bf16.msra.mxu0 0
        %2831 = vmatprep.subr.bf16.mxu0 0
        %2832 = vmatpush1.bf16.msra.mxu0 0
        %2833 = vmatprep.subr.bf16.mxu0 0
        %2834 = vmatpush1.bf16.msra.mxu0 0
        %2835 = vmatprep.subr.bf16.mxu0 0
        %2836 = vmatpush1.bf16.msra.mxu0 0
        %2837 = vmatprep.subr.bf16.mxu0 0
        %2838 = vmatpush1.bf16.msra.mxu0 0
        %2839 = vmatprep.subr.bf16.mxu0 0
        %2840 = vmatpush1.bf16.msra.mxu0 0
        %2841 = vmatprep.subr.bf16.mxu0 0
        %2842 = vmatpush1.bf16.msra.mxu0 0
        %2843 = vmatprep.subr.bf16.mxu0 0
        %2844 = vmatpush1.bf16.msra.mxu0 0
        %2845 = vmatprep.subr.bf16.mxu0 0
        %2846 = vmatpush1.bf16.msra.mxu0 0
        %2847 = vmatprep.subr.bf16.mxu0 0
        %2848 = vmatpush1.bf16.msra.mxu0 0
        %2849 = vmatprep.subr.bf16.mxu0 0
        %2850 = vmatpush1.bf16.msra.mxu0 0
        %2851 = vmatprep.subr.bf16.mxu0 0
        %2852 = vmatpush1.bf16.msra.mxu0 0
        %2853 = vmatprep.subr.bf16.mxu0 0
        %2854 = vmatpush1.bf16.msra.mxu0 0
        %2855 = vmatprep.subr.bf16.mxu0 0
        %2856 = vmatpush1.bf16.msra.mxu0 0
        %2857 = vmatprep.mubr.bf16.mxu0 0
        %2858 = vmatmul.mubr.bf16.gmra.mrb[0].mxu0 %v2823
        %v2859 = vpop.f32.mrb[0].mxu0
        %v2860 = vadd.f32 %v2820, %v2859
        %v2861 = vpop.f32.mrb[0].mxu0
        %v2862 = vpop.f32.mrb[0].mxu0
        %v2863 = vpop.f32.mrb[0].mxu0
        %2864 = vdwg.mxu0
        %v2865 = vmax.f32 %v2860, 0.0
        %v2866 = vpack.c.bf16 %v2865, %v2865
        %v2867 = vld [vmem:[%s731] sm:$0xff]
        %v2868 = vld [vmem:[%s731 + $0x8] sm:$0xff]
        %v2869 = vld [vmem:[%s731 + $0x10] sm:$0xff]
        %v2870 = vld [vmem:[%s731 + $0x18] sm:$0xff]
        %v2871 = vld [vmem:[%s731 + $0x20] sm:$0xff]
        %v2872 = vld [vmem:[%s731 + $0x28] sm:$0xff]
        %v2873 = vld [vmem:[%s731 + $0x30] sm:$0xff]
        %v2874 = vld [vmem:[%s731 + $0x38] sm:$0xff]
        %v2875 = vld [vmem:[%s731 + $0x40] sm:$0xff]
        %v2876 = vld [vmem:[%s731 + $0x48] sm:$0xff]
        %v2877 = vld [vmem:[%s731 + $0x50] sm:$0xff]
        %v2878 = vld [vmem:[%s731 + $0x58] sm:$0xff]
        %v2879 = vld [vmem:[%s731 + $0x60] sm:$0xff]
        %v2880 = vld [vmem:[%s731 + $0x68] sm:$0xff]
        %v2881 = vld [vmem:[%s731 + $0x70] sm:$0xff]
        %v2882 = vld [vmem:[%s731 + $0x78] sm:$0xff]
        %v2883 = vpack.c.bf16 %v2868, %v2867
        %v2884 = vpack.c.bf16 %v2870, %v2869
        %v2885 = vpack.c.bf16 %v2872, %v2871
        %v2886 = vpack.c.bf16 %v2874, %v2873
        %v2887 = vpack.c.bf16 %v2876, %v2875
        %v2888 = vpack.c.bf16 %v2878, %v2877
        %v2889 = vpack.c.bf16 %v2880, %v2879
        %v2890 = vpack.c.bf16 %v2882, %v2881
        %v2891 = vld [vmem:[%s734] sm:$0x1]
        %v2893 = vlaneseq
        %v2894 = vshrl.u32 %v2893, 7
        %v2895 = vsub.s32 0, %v2894
        %v2896 = vrot.slane %v2891, %v2895
        %2898 = vmatprep.subr.bf16.mxu0 0
        %2899 = vmatpush1.bf16.msra.mxu0 %v2883
        %2900 = vmatprep.subr.bf16.mxu0 0
        %2901 = vmatpush1.bf16.msra.mxu0 %v2884
        %2902 = vmatprep.subr.bf16.mxu0 0
        %2903 = vmatpush1.bf16.msra.mxu0 %v2885
        %2904 = vmatprep.subr.bf16.mxu0 0
        %2905 = vmatpush1.bf16.msra.mxu0 %v2886
        %2906 = vmatprep.subr.bf16.mxu0 0
        %2907 = vmatpush1.bf16.msra.mxu0 %v2887
        %2908 = vmatprep.subr.bf16.mxu0 0
        %2909 = vmatpush1.bf16.msra.mxu0 %v2888
        %2910 = vmatprep.subr.bf16.mxu0 0
        %2911 = vmatpush1.bf16.msra.mxu0 %v2889
        %2912 = vmatprep.subr.bf16.mxu0 0
        %2913 = vmatpush1.bf16.msra.mxu0 %v2890
        %2914 = vmatprep.subr.bf16.mxu0 0
        %2915 = vmatpush1.bf16.msra.mxu0 0
        %2916 = vmatprep.subr.bf16.mxu0 0
        %2917 = vmatpush1.bf16.msra.mxu0 0
        %2918 = vmatprep.subr.bf16.mxu0 0
        %2919 = vmatpush1.bf16.msra.mxu0 0
        %2920 = vmatprep.subr.bf16.mxu0 0
        %2921 = vmatpush1.bf16.msra.mxu0 0
        %2922 = vmatprep.subr.bf16.mxu0 0
        %2923 = vmatpush1.bf16.msra.mxu0 0
        %2924 = vmatprep.subr.bf16.mxu0 0
        %2925 = vmatpush1.bf16.msra.mxu0 0
        %2926 = vmatprep.subr.bf16.mxu0 0
        %2927 = vmatpush1.bf16.msra.mxu0 0
        %2928 = vmatprep.subr.bf16.mxu0 0
        %2929 = vmatpush1.bf16.msra.mxu0 0
        %2930 = vmatprep.mubr.bf16.mxu0 0
        %2931 = vmatmul.mubr.bf16.gmra.mrb[0].mxu0 %v2866
        %v2932 = vpop.f32.mrb[0].mxu0
        %v2933 = vadd.f32 %v2896, %v2932
        %v2934 = vpop.f32.mrb[0].mxu0
        %v2935 = vpop.f32.mrb[0].mxu0
        %v2936 = vpop.f32.mrb[0].mxu0
        %2937 = vdwg.mxu0
        %v2938 = vadd.f32 %v2771, %v2933
        %2939 = vst.msk [vmem:[#allocation2] sm:$0xff] %vm746, %v2938
        %p2940 = scmp.eq.s32.totalorder %s35, 1
        // Predicated region
        $region89: #{tpu_custom_call.1} parent=83 // pred_check
          %p2941 = pneg %p2940
        $region90: #{tpu_custom_call.1} parent=83 // pred_check_branch
          %2943 = sbr.rel (%p2941) target = $region92
        $region91: #{tpu_custom_call.1} parent=83 // pred_region
          %v2944 = vld [vmem:[%s14] sm:$0x1]
          %v2945 = vld [vmem:[%s15] sm:$0x1]
          %v2946 = vsel %vm746, %v2938, 0.0
          %2947 = vadd.xlane.f32.xlu0 %v2946
          %v2948 = vpop.xlane.xlu0 %2947
          %v2949 = vmul.f32 %v2948, %v750
          %v2950 = vsub.f32 %v2938, %v2949
          %v2951 = vmul.f32 %v2950, %v2950
          %v2952 = vsel %vm746, %v2951, 0.0
          %2953 = vadd.xlane.f32.xlu0 %v2952
          %v2954 = vpop.xlane.xlu0 %2953
          %v2955 = vmul.f32 %v2954, %v757
          %v2956 = vrsqrt.pop %v2955
          %v2957 = vmul.f32 %v2955, %v2956
          %vm2958 = vcmp.eq.f32.partialorder %v2955, inf
          %v2959 = vsel %vm2958, %v2955, %v2957
          %vm2960 = vcmp.eq.f32.partialorder %v2955, 0.0
          %v2961 = vand.u32 %v2955, 2147483648
          %v2962 = vsel %vm2960, %v2961, %v2959
          %v2964 = vlaneseq
          %v2965 = vshrl.u32 %v2964, 7
          %v2966 = vsub.s32 0, %v2965
          %v2967 = vrot.slane %v2944, %v2966
          %v2969 = vmul.f32 %v2967, %v2950
          %v2970 = vadd.f32 %v2962, 1e-05
          %v2971 = vrcp.pop %v2970
          %v2972 = vmul.f32 %v2969, %v2971
          %v2974 = vlaneseq
          %v2975 = vshrl.u32 %v2974, 7
          %v2976 = vsub.s32 0, %v2975
          %v2977 = vrot.slane %v2945, %v2976
          %v2979 = vadd.f32 %v2972, %v2977
          %2980 = vst.msk [vmem:[%s683] sm:$0xff] %vm746, %v2979
        $region92: #{tpu_custom_call.1} parent=83 // pred_fallthru
          _
        %s2981 = sand.u32 %s456, 1
        %s2982 = scalar_lea.sflag [#allocation4], %s2981
        %s2983 = sand.u32 %s456, 1
        %s2984 = smul.addr %s2983, 8
        %s2985 = scalar_lea.vmem [#allocation3], %s2984
        // Predicated region
        $region93: #{tpu_custom_call.1} parent=83 // pred_check
          %p2986 = pneg %p466
        $region94: #{tpu_custom_call.1} parent=83 // pred_check_branch
          %2988 = sbr.rel (%p2986) target = $region96
        $region95: #{tpu_custom_call.1} parent=83 // pred_region
          %s2990 = ssub.s32 128, 128
          %2991 = vsyncadd %s2982, %s2990
          %s2992 = smul.addr %s34, 128
          %s2993 = scalar_lea.hbm %s16, %s2992
          %s2995 = sshll.u32 %s2985, 4
          %s2996 = int_to_ptr.vmem [resolvable:$true] %s2995
          %2998 = dma.vmem_to_hbm [thread:$0]  %s2996, 128, %s2993, %s2982
        $region96: #{tpu_custom_call.1} parent=83 // pred_fallthru
          _
      $region84: #{tpu_custom_call.1} parent=5 // pred_fallthru
        _
      %p2999 = scmp.le.s32.totalorder 2, %s25
      // Predicated region
      $region97: #{tpu_custom_call.1} parent=5 // pred_check
        %p3000 = pneg %p2999
      $region98: #{tpu_custom_call.1} parent=5 // pred_check_branch
        %3002 = sbr.rel (%p3000) target = $region100
      $region99: #{tpu_custom_call.1} parent=5 // pred_region
        %s3003 = ssub.s32 %s25, 2
        // Predicated region
        $region101: #{tpu_custom_call.1} parent=99 // pred_check
          %p3004 = pneg %p472
        $region102: #{tpu_custom_call.1} parent=99 // pred_check_branch
          %3006 = sbr.rel (%p3004) target = $region104
        $region103: #{tpu_custom_call.1} parent=99 // pred_region
          %s3007 = sand.u32 %s457, 1
          %s3008 = scalar_lea.sflag [#allocation4], %s3007
          %s3009 = sand.u32 %s457, 1
          %s3010 = smul.addr %s3009, 8
          %s3011 = scalar_lea.vmem [#allocation3], %s3010
          %3012 = dma.done %s3008, 128
        $region104: #{tpu_custom_call.1} parent=99 // pred_fallthru
          _
      $region100: #{tpu_custom_call.1} parent=5 // pred_fallthru
        _
    $region6: #{tpu_custom_call.1} parent=1 // loop_footer
      %s29 = sadd.s32 1, %s25
    $region7: #{tpu_custom_call.1} parent=1 // loop_footer_branch
      %24 = sbr.rel target = $region3
    $region8: #{tpu_custom_call.1} parent=1 // loop_exit
      _
    %3013 = vsyncpa [#allocation4], 1
    %s3014 = scalar_lea.sflag [#allocation4], 1
    %3015 = vsyncpa %s3014, 1

</llo_original>
